<compile_context>
chip_gen: v6e
topology: v6e:2x2x1
jax: 0.10.0
libtpu: 0.0.40
codegen_flags: <defaults>
</compile_context>

<pallas_src>
import math
import functools

import jax
import jax.numpy as jnp
import numpy as np
from jax.experimental import pallas as pl
from jax.experimental.pallas import tpu as pltpu


# ---------------------------------------------------------------------------
# Model hyper-parameters (small, consistent with the module defaults)
# ---------------------------------------------------------------------------
VOCAB = 64
EMBED = 32
SEQ = 8
N_LAYERS = 2
EXPANSION = 4
N_HEADS = 4                     # embed_dim must be divisible by n_heads
HEAD_DIM = EMBED // N_HEADS
FFN_DIM = EXPANSION * EMBED
BATCH = 2
LN_EPS = 1e-5
V_PAD = 128                     # lane-dense output width for the vocab proj
NEG_INF = -1e30                 # finite additive mask value (NaN-safe)


# ---------------------------------------------------------------------------
# Pallas kernel: the whole forward pass, single invocation
# ---------------------------------------------------------------------------
def _layernorm(x, gamma, beta):
    mu = jnp.mean(x, axis=-1, keepdims=True)
    var = jnp.mean((x - mu) ** 2, axis=-1, keepdims=True)
    return (x - mu) * jax.lax.rsqrt(var + LN_EPS) * gamma + beta


def gpt_decoder_kernel(tok_ref, pos_ref, mask_ref, emb_ref,
                       wq_ref, bq_ref, wk_ref, bk_ref, wv_ref, bv_ref,
                       wo_ref, bo_ref,
                       g0_ref, be0_ref, g1_ref, be1_ref,
                       w1_ref, b1_ref, w2_ref, b2_ref,
                       fcw_ref, fcb_ref,
                       o_ref, *, n_layers, n_heads, head_dim):
    BS = tok_ref.shape[0]                      # B*S rows (batch folded in)
    V = emb_ref.shape[0]
    E = emb_ref.shape[1]

    # ---- embedding lookup (one-hot matmul on the MXU) + positional enc ----
    tok = tok_ref[...]                                            # [BS, 1] i32
    vocab_ids = jax.lax.broadcasted_iota(jnp.int32, (BS, V), 1)
    onehot = (tok == vocab_ids).astype(jnp.float32)               # [BS, V]
    x = jnp.dot(onehot, emb_ref[...],
                preferred_element_type=jnp.float32) + pos_ref[...]  # [BS, E]
    # dropout = identity (eval mode)

    add_mask = mask_ref[...]                                      # [BS, BS]
    scale = 1.0 / math.sqrt(head_dim)

    # Per-head column masks (hoisted out of the layer loop; constant-folded).
    # q_masks carry the 1/sqrt(head_dim) softmax scale folded in, so one VPU
    # multiply does head selection + scaling in one go.
    col_ids = jax.lax.broadcasted_iota(jnp.int32, (1, E), 1)
    head_masks = [
        ((col_ids >= h * head_dim) & (col_ids < (h + 1) * head_dim)
         ).astype(jnp.float32)
        for h in range(n_heads)
    ]
    q_masks = [m * scale for m in head_masks]

    for l in range(n_layers):                  # static unrolled layer loop
        # ---- multi-head self-attention ----
        q = jnp.dot(x, wq_ref[l], preferred_element_type=jnp.float32) + bq_ref[l]
        k = jnp.dot(x, wk_ref[l], preferred_element_type=jnp.float32) + bk_ref[l]
        v = jnp.dot(x, wv_ref[l], preferred_element_type=jnp.float32) + bv_ref[l]

        att = jnp.zeros((BS, E), jnp.float32)
        for h in range(n_heads):               # static unrolled head loop
            # scores: contract the full E dim of (masked+scaled q) with k.
            # q columns outside head h are zero, so only head-h columns of k
            # contribute — no lane slicing, no k mask needed.
            s = jax.lax.dot_general(
                q * q_masks[h], k, (((1,), (1,)), ((), ())),
                preferred_element_type=jnp.float32) + add_mask    # [BS, BS]
            s = s - jnp.max(s, axis=-1, keepdims=True)
            p = jnp.exp(s)
            p = p * pl.reciprocal(jnp.sum(p, axis=-1, keepdims=True),
                                  approx=True)
            # column-masked V: accumulation writes this head's output columns
            att = att + jnp.dot(p, v * head_masks[h],
                                preferred_element_type=jnp.float32)
        att = jnp.dot(att, wo_ref[l],
                      preferred_element_type=jnp.float32) + bo_ref[l]

        # ---- add & norm 0 (dropout = identity) ----
        h0 = _layernorm(att + x, g0_ref[l], be0_ref[l])

        # ---- FFN: Linear -> ReLU -> Linear ----
        f = jnp.maximum(
            jnp.dot(h0, w1_ref[l], preferred_element_type=jnp.float32)
            + b1_ref[l], 0.0)
        f = jnp.dot(f, w2_ref[l], preferred_element_type=jnp.float32) + b2_ref[l]

        # ---- add & norm 1 (dropout = identity) ----
        x = _layernorm(f + h0, g1_ref[l], be1_ref[l])

    # ---- final vocab projection (padded to 128 lanes -> unmasked stores) ----
    o_ref[...] = (jnp.dot(x, fcw_ref[...], preferred_element_type=jnp.float32)
                  + fcb_ref[...]).astype(o_ref.dtype)


# ---------------------------------------------------------------------------
# Wrapper
# ---------------------------------------------------------------------------
def gpt_decoder_forward(tokens, mask, params, pos_enc):
    """tokens: [B, S] int32; mask: [S, S] float32, 1.0 == masked position."""
    B, S = tokens.shape
    BS = B * S

    # Combined additive mask [BS, BS]: block-diagonal over batch, user mask
    # within each block.  0.0 = allowed, NEG_INF = masked.
    allowed = jnp.kron(jnp.eye(B, dtype=jnp.float32), 1.0 - mask)   # 1 = allowed
    add_mask = (1.0 - allowed) * NEG_INF

    pos = jnp.tile(pos_enc[0, :S, :], (B, 1))                       # [BS, E]
    tok2d = tokens.reshape(BS, 1).astype(jnp.int32)                 # [BS, 1]

    kernel = functools.partial(gpt_decoder_kernel, n_layers=N_LAYERS,
                               n_heads=N_HEADS, head_dim=HEAD_DIM)

    logits_pad = pl.pallas_call(
        kernel,
        out_shape=jax.ShapeDtypeStruct((BS, V_PAD), jnp.float32),
        compiler_params=pltpu.CompilerParams(
            vmem_limit_bytes=32 * 1024 * 1024),
    )(tok2d, pos, add_mask, params["embed_table"],
      params["wq"], params["bq"], params["wk"], params["bk"],
      params["wv"], params["bv"], params["wo"], params["bo"],
      params["g0"], params["be0"], params["g1"], params["be1"],
      params["w1"], params["b1"], params["w2"], params["b2"],
      params["fc_w_pad"], params["fc_b_pad"])

    return logits_pad[:, :VOCAB].reshape(B, S, VOCAB)


# ---------------------------------------------------------------------------
# Parameter init (deterministic)
# ---------------------------------------------------------------------------
def make_positional_encoding(seq_len, embed_dim):
    pe = np.zeros((seq_len, embed_dim), dtype=np.float32)
    for pos in range(seq_len):
        for i in range(0, embed_dim, 2):
            pe[pos, i] = math.sin(pos / 10000 ** (2 * i / embed_dim))
            pe[pos, i + 1] = math.cos(pos / 10000 ** (2 * (i + 1) / embed_dim))
    return jnp.asarray(pe)[None, :, :]          # [1, S, E]


def init_params(key):
    def dense(k, fan_in, fan_out):
        # weight stored as [in, out] (pre-transposed vs PyTorch's [out, in])
        return 0.02 * jax.random.normal(k, (fan_in, fan_out), jnp.float32)

    keys = jax.random.split(key, 2 + N_LAYERS)
    p = {}
    p["embed_table"] = 0.02 * jax.random.normal(
        keys[0], (VOCAB, EMBED), jnp.float32)

    wq, wk, wv, wo, w1, w2 = [], [], [], [], [], []
    for l in range(N_LAYERS):
        k = jax.random.split(keys[1 + l], 6)
        wq.append(dense(k[0], EMBED, EMBED))
        wk.append(dense(k[1], EMBED, EMBED))
        wv.append(dense(k[2], EMBED, EMBED))
        wo.append(dense(k[3], EMBED, EMBED))
        w1.append(dense(k[4], EMBED, FFN_DIM))
        w2.append(dense(k[5], FFN_DIM, EMBED))

    # Stacked over layers so the fused kernel indexes ref[l] in a static loop.
    p["wq"], p["wk"], p["wv"], p["wo"] = map(jnp.stack, (wq, wk, wv, wo))
    p["w1"], p["w2"] = jnp.stack(w1), jnp.stack(w2)
    p["bq"] = jnp.zeros((N_LAYERS, 1, EMBED), jnp.float32)
    p["bk"] = jnp.zeros((N_LAYERS, 1, EMBED), jnp.float32)
    p["bv"] = jnp.zeros((N_LAYERS, 1, EMBED), jnp.float32)
    p["bo"] = jnp.zeros((N_LAYERS, 1, EMBED), jnp.float32)
    p["b1"] = jnp.zeros((N_LAYERS, 1, FFN_DIM), jnp.float32)
    p["b2"] = jnp.zeros((N_LAYERS, 1, EMBED), jnp.float32)
    p["g0"] = jnp.ones((N_LAYERS, 1, EMBED), jnp.float32)
    p["be0"] = jnp.zeros((N_LAYERS, 1, EMBED), jnp.float32)
    p["g1"] = jnp.ones((N_LAYERS, 1, EMBED), jnp.float32)
    p["be1"] = jnp.zeros((N_LAYERS, 1, EMBED), jnp.float32)

    fc_w = dense(keys[-1], EMBED, VOCAB)
    p["fc_w_pad"] = jnp.pad(fc_w, ((0, 0), (0, V_PAD - VOCAB)))     # [E, 128]
    p["fc_b_pad"] = jnp.zeros((1, V_PAD), jnp.float32)
    return p


# ---------------------------------------------------------------------------
# Main
# ---------------------------------------------------------------------------
if __name__ == "__main__":
    key = jax.random.PRNGKey(0)
    k_tok, k_params = jax.random.split(key)

    tokens = jax.random.randint(k_tok, (BATCH, SEQ), 0, VOCAB, dtype=jnp.int32)
    # causal mask: 1.0 where attention is disallowed (upper triangle)
    causal = jnp.triu(jnp.ones((SEQ, SEQ), jnp.float32), k=1)

    params = init_params(k_params)
    pos_enc = make_positional_encoding(SEQ, EMBED)

    out = gpt_decoder_forward(tokens, causal, params, pos_enc)
    out = jax.block_until_ready(out)

    assert out.shape == (BATCH, SEQ, VOCAB), out.shape
    assert bool(jnp.all(jnp.isfinite(out)))
    print("KERNEL_OK")
</pallas_src>

<mosaic_0001>
module attributes {stable_mosaic.version = 11 : i64} {
  func.func @gpt_decoder_kernel(%arg0: memref<16x1xi32, #tpu.memory_space<vmem>>, %arg1: memref<16x32xf32, #tpu.memory_space<vmem>>, %arg2: memref<16x16xf32, #tpu.memory_space<vmem>>, %arg3: memref<64x32xf32, #tpu.memory_space<vmem>>, %arg4: memref<2x32x32xf32, #tpu.memory_space<vmem>>, %arg5: memref<2x1x32xf32, #tpu.memory_space<vmem>>, %arg6: memref<2x32x32xf32, #tpu.memory_space<vmem>>, %arg7: memref<2x1x32xf32, #tpu.memory_space<vmem>>, %arg8: memref<2x32x32xf32, #tpu.memory_space<vmem>>, %arg9: memref<2x1x32xf32, #tpu.memory_space<vmem>>, %arg10: memref<2x32x32xf32, #tpu.memory_space<vmem>>, %arg11: memref<2x1x32xf32, #tpu.memory_space<vmem>>, %arg12: memref<2x1x32xf32, #tpu.memory_space<vmem>>, %arg13: memref<2x1x32xf32, #tpu.memory_space<vmem>>, %arg14: memref<2x1x32xf32, #tpu.memory_space<vmem>>, %arg15: memref<2x1x32xf32, #tpu.memory_space<vmem>>, %arg16: memref<2x32x128xf32, #tpu.memory_space<vmem>>, %arg17: memref<2x1x128xf32, #tpu.memory_space<vmem>>, %arg18: memref<2x128x32xf32, #tpu.memory_space<vmem>>, %arg19: memref<2x1x32xf32, #tpu.memory_space<vmem>>, %arg20: memref<32x128xf32, #tpu.memory_space<vmem>>, %arg21: memref<1x128xf32, #tpu.memory_space<vmem>>, %arg22: memref<16x128xf32, #tpu.memory_space<vmem>>) attributes {dimension_semantics = [], scalar_prefetch = 0 : i64, scratch_operands = 0 : i64, tpu.core_type = #tpu.core_type<tc>} {
    %c0 = arith.constant 0 : index
    %c0_0 = arith.constant 0 : index
    %0 = vector.load %arg0[%c0, %c0_0] : memref<16x1xi32, #tpu.memory_space<vmem>>, vector<16x1xi32>
    %1 = tpu.iota {dimensions = array<i32: 1>} : vector<16x64xi32>
    %2 = vector.broadcast %0 : vector<16x1xi32> to vector<16x64xi32>
    %3 = arith.cmpi eq, %2, %1 : vector<16x64xi32>
    %4 = arith.extui %3 : vector<16x64xi1> to vector<16x64xi32>
    %5 = arith.sitofp %4 : vector<16x64xi32> to vector<16x64xf32>
    %c0_1 = arith.constant 0 : index
    %c0_2 = arith.constant 0 : index
    %6 = vector.load %arg3[%c0_1, %c0_2] : memref<64x32xf32, #tpu.memory_space<vmem>>, vector<64x32xf32>
    %cst = arith.constant dense<0.000000e+00> : vector<16x32xf32>
    %7 = tpu.matmul %5, %6, %cst {dimension_numbers = #tpu.dot_dimension_numbers<[1], [0], [0], [1], [0, 0, 1, 1], [], []>} : vector<16x64xf32>, vector<64x32xf32>, vector<16x32xf32> -> vector<16x32xf32>
    %c0_3 = arith.constant 0 : index
    %c0_4 = arith.constant 0 : index
    %8 = vector.load %arg1[%c0_3, %c0_4] : memref<16x32xf32, #tpu.memory_space<vmem>>, vector<16x32xf32>
    %9 = arith.addf %7, %8 : vector<16x32xf32>
    %c0_5 = arith.constant 0 : index
    %c0_6 = arith.constant 0 : index
    %10 = vector.load %arg2[%c0_5, %c0_6] : memref<16x16xf32, #tpu.memory_space<vmem>>, vector<16x16xf32>
    %11 = tpu.iota {dimensions = array<i32: 1>} : vector<1x32xi32>
    %c0_i32 = arith.constant 0 : i32
    %12 = vector.broadcast %c0_i32 : i32 to vector<1x32xi32>
    %13 = arith.cmpi sge, %11, %12 : vector<1x32xi32>
    %c8_i32 = arith.constant 8 : i32
    %14 = vector.broadcast %c8_i32 : i32 to vector<1x32xi32>
    %15 = arith.cmpi slt, %11, %14 : vector<1x32xi32>
    %16 = arith.andi %13, %15 : vector<1x32xi1>
    %17 = arith.extui %16 : vector<1x32xi1> to vector<1x32xi32>
    %18 = arith.sitofp %17 : vector<1x32xi32> to vector<1x32xf32>
    %c8_i32_7 = arith.constant 8 : i32
    %19 = vector.broadcast %c8_i32_7 : i32 to vector<1x32xi32>
    %20 = arith.cmpi sge, %11, %19 : vector<1x32xi32>
    %c16_i32 = arith.constant 16 : i32
    %21 = vector.broadcast %c16_i32 : i32 to vector<1x32xi32>
    %22 = arith.cmpi slt, %11, %21 : vector<1x32xi32>
    %23 = arith.andi %20, %22 : vector<1x32xi1>
    %24 = arith.extui %23 : vector<1x32xi1> to vector<1x32xi32>
    %25 = arith.sitofp %24 : vector<1x32xi32> to vector<1x32xf32>
    %c16_i32_8 = arith.constant 16 : i32
    %26 = vector.broadcast %c16_i32_8 : i32 to vector<1x32xi32>
    %27 = arith.cmpi sge, %11, %26 : vector<1x32xi32>
    %c24_i32 = arith.constant 24 : i32
    %28 = vector.broadcast %c24_i32 : i32 to vector<1x32xi32>
    %29 = arith.cmpi slt, %11, %28 : vector<1x32xi32>
    %30 = arith.andi %27, %29 : vector<1x32xi1>
    %31 = arith.extui %30 : vector<1x32xi1> to vector<1x32xi32>
    %32 = arith.sitofp %31 : vector<1x32xi32> to vector<1x32xf32>
    %c24_i32_9 = arith.constant 24 : i32
    %33 = vector.broadcast %c24_i32_9 : i32 to vector<1x32xi32>
    %34 = arith.cmpi sge, %11, %33 : vector<1x32xi32>
    %c32_i32 = arith.constant 32 : i32
    %35 = vector.broadcast %c32_i32 : i32 to vector<1x32xi32>
    %36 = arith.cmpi slt, %11, %35 : vector<1x32xi32>
    %37 = arith.andi %34, %36 : vector<1x32xi1>
    %38 = arith.extui %37 : vector<1x32xi1> to vector<1x32xi32>
    %39 = arith.sitofp %38 : vector<1x32xi32> to vector<1x32xf32>
    %cst_10 = arith.constant 0.353553385 : f32
    %40 = vector.broadcast %cst_10 : f32 to vector<1x32xf32>
    %41 = arith.mulf %18, %40 : vector<1x32xf32>
    %cst_11 = arith.constant 0.353553385 : f32
    %42 = vector.broadcast %cst_11 : f32 to vector<1x32xf32>
    %43 = arith.mulf %25, %42 : vector<1x32xf32>
    %cst_12 = arith.constant 0.353553385 : f32
    %44 = vector.broadcast %cst_12 : f32 to vector<1x32xf32>
    %45 = arith.mulf %32, %44 : vector<1x32xf32>
    %cst_13 = arith.constant 0.353553385 : f32
    %46 = vector.broadcast %cst_13 : f32 to vector<1x32xf32>
    %47 = arith.mulf %39, %46 : vector<1x32xf32>
    %c0_14 = arith.constant 0 : index
    %c0_15 = arith.constant 0 : index
    %c0_16 = arith.constant 0 : index
    %48 = vector.load %arg4[%c0_14, %c0_15, %c0_16] : memref<2x32x32xf32, #tpu.memory_space<vmem>>, vector<1x32x32xf32>
    %49 = vector.shape_cast %48 : vector<1x32x32xf32> to vector<32x32xf32>
    %cst_17 = arith.constant dense<0.000000e+00> : vector<16x32xf32>
    %50 = tpu.matmul %9, %49, %cst_17 {dimension_numbers = #tpu.dot_dimension_numbers<[1], [0], [0], [1], [0, 0, 1, 1], [], []>} : vector<16x32xf32>, vector<32x32xf32>, vector<16x32xf32> -> vector<16x32xf32>
    %c0_18 = arith.constant 0 : index
    %c0_19 = arith.constant 0 : index
    %c0_20 = arith.constant 0 : index
    %51 = vector.load %arg5[%c0_18, %c0_19, %c0_20] : memref<2x1x32xf32, #tpu.memory_space<vmem>>, vector<1x1x32xf32>
    %52 = vector.shape_cast %51 : vector<1x1x32xf32> to vector<1x32xf32>
    %53 = vector.broadcast %52 : vector<1x32xf32> to vector<16x32xf32>
    %54 = arith.addf %50, %53 : vector<16x32xf32>
    %c0_21 = arith.constant 0 : index
    %c0_22 = arith.constant 0 : index
    %c0_23 = arith.constant 0 : index
    %55 = vector.load %arg6[%c0_21, %c0_22, %c0_23] : memref<2x32x32xf32, #tpu.memory_space<vmem>>, vector<1x32x32xf32>
    %56 = vector.shape_cast %55 : vector<1x32x32xf32> to vector<32x32xf32>
    %cst_24 = arith.constant dense<0.000000e+00> : vector<16x32xf32>
    %57 = tpu.matmul %9, %56, %cst_24 {dimension_numbers = #tpu.dot_dimension_numbers<[1], [0], [0], [1], [0, 0, 1, 1], [], []>} : vector<16x32xf32>, vector<32x32xf32>, vector<16x32xf32> -> vector<16x32xf32>
    %c0_25 = arith.constant 0 : index
    %c0_26 = arith.constant 0 : index
    %c0_27 = arith.constant 0 : index
    %58 = vector.load %arg7[%c0_25, %c0_26, %c0_27] : memref<2x1x32xf32, #tpu.memory_space<vmem>>, vector<1x1x32xf32>
    %59 = vector.shape_cast %58 : vector<1x1x32xf32> to vector<1x32xf32>
    %60 = vector.broadcast %59 : vector<1x32xf32> to vector<16x32xf32>
    %61 = arith.addf %57, %60 : vector<16x32xf32>
    %c0_28 = arith.constant 0 : index
    %c0_29 = arith.constant 0 : index
    %c0_30 = arith.constant 0 : index
    %62 = vector.load %arg8[%c0_28, %c0_29, %c0_30] : memref<2x32x32xf32, #tpu.memory_space<vmem>>, vector<1x32x32xf32>
    %63 = vector.shape_cast %62 : vector<1x32x32xf32> to vector<32x32xf32>
    %cst_31 = arith.constant dense<0.000000e+00> : vector<16x32xf32>
    %64 = tpu.matmul %9, %63, %cst_31 {dimension_numbers = #tpu.dot_dimension_numbers<[1], [0], [0], [1], [0, 0, 1, 1], [], []>} : vector<16x32xf32>, vector<32x32xf32>, vector<16x32xf32> -> vector<16x32xf32>
    %c0_32 = arith.constant 0 : index
    %c0_33 = arith.constant 0 : index
    %c0_34 = arith.constant 0 : index
    %65 = vector.load %arg9[%c0_32, %c0_33, %c0_34] : memref<2x1x32xf32, #tpu.memory_space<vmem>>, vector<1x1x32xf32>
    %66 = vector.shape_cast %65 : vector<1x1x32xf32> to vector<1x32xf32>
    %67 = vector.broadcast %66 : vector<1x32xf32> to vector<16x32xf32>
    %68 = arith.addf %64, %67 : vector<16x32xf32>
    %cst_35 = arith.constant 0.000000e+00 : f32
    %69 = vector.broadcast %cst_35 : f32 to vector<16x32xf32>
    %70 = vector.broadcast %41 : vector<1x32xf32> to vector<16x32xf32>
    %71 = arith.mulf %54, %70 : vector<16x32xf32>
    %cst_36 = arith.constant dense<0.000000e+00> : vector<16x16xf32>
    %72 = tpu.matmul %71, %61, %cst_36 {dimension_numbers = #tpu.dot_dimension_numbers<[1], [1], [0], [0], [0, 0, 1, 0], [], []>} : vector<16x32xf32>, vector<16x32xf32>, vector<16x16xf32> -> vector<16x16xf32>
    %73 = arith.addf %72, %10 : vector<16x16xf32>
    %cst_37 = arith.constant dense<0xFF800000> : vector<16xf32>
    %74 = vector.multi_reduction <maximumf>, %73, %cst_37 [1] : vector<16x16xf32> to vector<16xf32>
    %75 = vector.shape_cast %74 : vector<16xf32> to vector<16x1xf32>
    %76 = vector.broadcast %75 : vector<16x1xf32> to vector<16x16xf32>
    %77 = arith.subf %73, %76 : vector<16x16xf32>
    %78 = math.exp %77 : vector<16x16xf32>
    %cst_38 = arith.constant dense<0.000000e+00> : vector<16xf32>
    %79 = vector.multi_reduction <add>, %78, %cst_38 [1] : vector<16x16xf32> to vector<16xf32>
    %80 = vector.shape_cast %79 : vector<16xf32> to vector<16x1xf32>
    %81 = tpu.reciprocal %80 {approx = true} : vector<16x1xf32> -> vector<16x1xf32>
    %82 = vector.broadcast %81 : vector<16x1xf32> to vector<16x16xf32>
    %83 = arith.mulf %78, %82 : vector<16x16xf32>
    %84 = vector.broadcast %18 : vector<1x32xf32> to vector<16x32xf32>
    %85 = arith.mulf %68, %84 : vector<16x32xf32>
    %cst_39 = arith.constant dense<0.000000e+00> : vector<16x32xf32>
    %86 = tpu.matmul %83, %85, %cst_39 {dimension_numbers = #tpu.dot_dimension_numbers<[1], [0], [0], [1], [0, 0, 1, 1], [], []>} : vector<16x16xf32>, vector<16x32xf32>, vector<16x32xf32> -> vector<16x32xf32>
    %87 = arith.addf %69, %86 : vector<16x32xf32>
    %88 = vector.broadcast %43 : vector<1x32xf32> to vector<16x32xf32>
    %89 = arith.mulf %54, %88 : vector<16x32xf32>
    %cst_40 = arith.constant dense<0.000000e+00> : vector<16x16xf32>
    %90 = tpu.matmul %89, %61, %cst_40 {dimension_numbers = #tpu.dot_dimension_numbers<[1], [1], [0], [0], [0, 0, 1, 0], [], []>} : vector<16x32xf32>, vector<16x32xf32>, vector<16x16xf32> -> vector<16x16xf32>
    %91 = arith.addf %90, %10 : vector<16x16xf32>
    %cst_41 = arith.constant dense<0xFF800000> : vector<16xf32>
    %92 = vector.multi_reduction <maximumf>, %91, %cst_41 [1] : vector<16x16xf32> to vector<16xf32>
    %93 = vector.shape_cast %92 : vector<16xf32> to vector<16x1xf32>
    %94 = vector.broadcast %93 : vector<16x1xf32> to vector<16x16xf32>
    %95 = arith.subf %91, %94 : vector<16x16xf32>
    %96 = math.exp %95 : vector<16x16xf32>
    %cst_42 = arith.constant dense<0.000000e+00> : vector<16xf32>
    %97 = vector.multi_reduction <add>, %96, %cst_42 [1] : vector<16x16xf32> to vector<16xf32>
    %98 = vector.shape_cast %97 : vector<16xf32> to vector<16x1xf32>
    %99 = tpu.reciprocal %98 {approx = true} : vector<16x1xf32> -> vector<16x1xf32>
    %100 = vector.broadcast %99 : vector<16x1xf32> to vector<16x16xf32>
    %101 = arith.mulf %96, %100 : vector<16x16xf32>
    %102 = vector.broadcast %25 : vector<1x32xf32> to vector<16x32xf32>
    %103 = arith.mulf %68, %102 : vector<16x32xf32>
    %cst_43 = arith.constant dense<0.000000e+00> : vector<16x32xf32>
    %104 = tpu.matmul %101, %103, %cst_43 {dimension_numbers = #tpu.dot_dimension_numbers<[1], [0], [0], [1], [0, 0, 1, 1], [], []>} : vector<16x16xf32>, vector<16x32xf32>, vector<16x32xf32> -> vector<16x32xf32>
    %105 = arith.addf %87, %104 : vector<16x32xf32>
    %106 = vector.broadcast %45 : vector<1x32xf32> to vector<16x32xf32>
    %107 = arith.mulf %54, %106 : vector<16x32xf32>
    %cst_44 = arith.constant dense<0.000000e+00> : vector<16x16xf32>
    %108 = tpu.matmul %107, %61, %cst_44 {dimension_numbers = #tpu.dot_dimension_numbers<[1], [1], [0], [0], [0, 0, 1, 0], [], []>} : vector<16x32xf32>, vector<16x32xf32>, vector<16x16xf32> -> vector<16x16xf32>
    %109 = arith.addf %108, %10 : vector<16x16xf32>
    %cst_45 = arith.constant dense<0xFF800000> : vector<16xf32>
    %110 = vector.multi_reduction <maximumf>, %109, %cst_45 [1] : vector<16x16xf32> to vector<16xf32>
    %111 = vector.shape_cast %110 : vector<16xf32> to vector<16x1xf32>
    %112 = vector.broadcast %111 : vector<16x1xf32> to vector<16x16xf32>
    %113 = arith.subf %109, %112 : vector<16x16xf32>
    %114 = math.exp %113 : vector<16x16xf32>
    %cst_46 = arith.constant dense<0.000000e+00> : vector<16xf32>
    %115 = vector.multi_reduction <add>, %114, %cst_46 [1] : vector<16x16xf32> to vector<16xf32>
    %116 = vector.shape_cast %115 : vector<16xf32> to vector<16x1xf32>
    %117 = tpu.reciprocal %116 {approx = true} : vector<16x1xf32> -> vector<16x1xf32>
    %118 = vector.broadcast %117 : vector<16x1xf32> to vector<16x16xf32>
    %119 = arith.mulf %114, %118 : vector<16x16xf32>
    %120 = vector.broadcast %32 : vector<1x32xf32> to vector<16x32xf32>
    %121 = arith.mulf %68, %120 : vector<16x32xf32>
    %cst_47 = arith.constant dense<0.000000e+00> : vector<16x32xf32>
    %122 = tpu.matmul %119, %121, %cst_47 {dimension_numbers = #tpu.dot_dimension_numbers<[1], [0], [0], [1], [0, 0, 1, 1], [], []>} : vector<16x16xf32>, vector<16x32xf32>, vector<16x32xf32> -> vector<16x32xf32>
    %123 = arith.addf %105, %122 : vector<16x32xf32>
    %124 = vector.broadcast %47 : vector<1x32xf32> to vector<16x32xf32>
    %125 = arith.mulf %54, %124 : vector<16x32xf32>
    %cst_48 = arith.constant dense<0.000000e+00> : vector<16x16xf32>
    %126 = tpu.matmul %125, %61, %cst_48 {dimension_numbers = #tpu.dot_dimension_numbers<[1], [1], [0], [0], [0, 0, 1, 0], [], []>} : vector<16x32xf32>, vector<16x32xf32>, vector<16x16xf32> -> vector<16x16xf32>
    %127 = arith.addf %126, %10 : vector<16x16xf32>
    %cst_49 = arith.constant dense<0xFF800000> : vector<16xf32>
    %128 = vector.multi_reduction <maximumf>, %127, %cst_49 [1] : vector<16x16xf32> to vector<16xf32>
    %129 = vector.shape_cast %128 : vector<16xf32> to vector<16x1xf32>
    %130 = vector.broadcast %129 : vector<16x1xf32> to vector<16x16xf32>
    %131 = arith.subf %127, %130 : vector<16x16xf32>
    %132 = math.exp %131 : vector<16x16xf32>
    %cst_50 = arith.constant dense<0.000000e+00> : vector<16xf32>
    %133 = vector.multi_reduction <add>, %132, %cst_50 [1] : vector<16x16xf32> to vector<16xf32>
    %134 = vector.shape_cast %133 : vector<16xf32> to vector<16x1xf32>
    %135 = tpu.reciprocal %134 {approx = true} : vector<16x1xf32> -> vector<16x1xf32>
    %136 = vector.broadcast %135 : vector<16x1xf32> to vector<16x16xf32>
    %137 = arith.mulf %132, %136 : vector<16x16xf32>
    %138 = vector.broadcast %39 : vector<1x32xf32> to vector<16x32xf32>
    %139 = arith.mulf %68, %138 : vector<16x32xf32>
    %cst_51 = arith.constant dense<0.000000e+00> : vector<16x32xf32>
    %140 = tpu.matmul %137, %139, %cst_51 {dimension_numbers = #tpu.dot_dimension_numbers<[1], [0], [0], [1], [0, 0, 1, 1], [], []>} : vector<16x16xf32>, vector<16x32xf32>, vector<16x32xf32> -> vector<16x32xf32>
    %141 = arith.addf %123, %140 : vector<16x32xf32>
    %c0_52 = arith.constant 0 : index
    %c0_53 = arith.constant 0 : index
    %c0_54 = arith.constant 0 : index
    %142 = vector.load %arg10[%c0_52, %c0_53, %c0_54] : memref<2x32x32xf32, #tpu.memory_space<vmem>>, vector<1x32x32xf32>
    %143 = vector.shape_cast %142 : vector<1x32x32xf32> to vector<32x32xf32>
    %cst_55 = arith.constant dense<0.000000e+00> : vector<16x32xf32>
    %144 = tpu.matmul %141, %143, %cst_55 {dimension_numbers = #tpu.dot_dimension_numbers<[1], [0], [0], [1], [0, 0, 1, 1], [], []>} : vector<16x32xf32>, vector<32x32xf32>, vector<16x32xf32> -> vector<16x32xf32>
    %c0_56 = arith.constant 0 : index
    %c0_57 = arith.constant 0 : index
    %c0_58 = arith.constant 0 : index
    %145 = vector.load %arg11[%c0_56, %c0_57, %c0_58] : memref<2x1x32xf32, #tpu.memory_space<vmem>>, vector<1x1x32xf32>
    %146 = vector.shape_cast %145 : vector<1x1x32xf32> to vector<1x32xf32>
    %147 = vector.broadcast %146 : vector<1x32xf32> to vector<16x32xf32>
    %148 = arith.addf %144, %147 : vector<16x32xf32>
    %149 = arith.addf %148, %9 : vector<16x32xf32>
    %c0_59 = arith.constant 0 : index
    %c0_60 = arith.constant 0 : index
    %c0_61 = arith.constant 0 : index
    %150 = vector.load %arg12[%c0_59, %c0_60, %c0_61] : memref<2x1x32xf32, #tpu.memory_space<vmem>>, vector<1x1x32xf32>
    %151 = vector.shape_cast %150 : vector<1x1x32xf32> to vector<1x32xf32>
    %c0_62 = arith.constant 0 : index
    %c0_63 = arith.constant 0 : index
    %c0_64 = arith.constant 0 : index
    %152 = vector.load %arg13[%c0_62, %c0_63, %c0_64] : memref<2x1x32xf32, #tpu.memory_space<vmem>>, vector<1x1x32xf32>
    %153 = vector.shape_cast %152 : vector<1x1x32xf32> to vector<1x32xf32>
    %cst_65 = arith.constant dense<0.000000e+00> : vector<16xf32>
    %154 = vector.multi_reduction <add>, %149, %cst_65 [1] : vector<16x32xf32> to vector<16xf32>
    %155 = vector.shape_cast %154 : vector<16xf32> to vector<16x1xf32>
    %cst_66 = arith.constant 3.200000e+01 : f32
    %156 = vector.broadcast %cst_66 : f32 to vector<16x1xf32>
    %157 = arith.divf %155, %156 : vector<16x1xf32>
    %158 = vector.broadcast %157 : vector<16x1xf32> to vector<16x32xf32>
    %159 = arith.subf %149, %158 : vector<16x32xf32>
    %160 = arith.mulf %159, %159 : vector<16x32xf32>
    %cst_67 = arith.constant dense<0.000000e+00> : vector<16xf32>
    %161 = vector.multi_reduction <add>, %160, %cst_67 [1] : vector<16x32xf32> to vector<16xf32>
    %162 = vector.shape_cast %161 : vector<16xf32> to vector<16x1xf32>
    %cst_68 = arith.constant 3.200000e+01 : f32
    %163 = vector.broadcast %cst_68 : f32 to vector<16x1xf32>
    %164 = arith.divf %162, %163 : vector<16x1xf32>
    %165 = vector.broadcast %157 : vector<16x1xf32> to vector<16x32xf32>
    %166 = arith.subf %149, %165 : vector<16x32xf32>
    %cst_69 = arith.constant 9.99999974E-6 : f32
    %167 = vector.broadcast %cst_69 : f32 to vector<16x1xf32>
    %168 = arith.addf %164, %167 : vector<16x1xf32>
    %169 = math.rsqrt %168 : vector<16x1xf32>
    %170 = vector.broadcast %169 : vector<16x1xf32> to vector<16x32xf32>
    %171 = arith.mulf %166, %170 : vector<16x32xf32>
    %172 = vector.broadcast %151 : vector<1x32xf32> to vector<16x32xf32>
    %173 = arith.mulf %171, %172 : vector<16x32xf32>
    %174 = vector.broadcast %153 : vector<1x32xf32> to vector<16x32xf32>
    %175 = arith.addf %173, %174 : vector<16x32xf32>
    %c0_70 = arith.constant 0 : index
    %c0_71 = arith.constant 0 : index
    %c0_72 = arith.constant 0 : index
    %176 = vector.load %arg16[%c0_70, %c0_71, %c0_72] : memref<2x32x128xf32, #tpu.memory_space<vmem>>, vector<1x32x128xf32>
    %177 = vector.shape_cast %176 : vector<1x32x128xf32> to vector<32x128xf32>
    %cst_73 = arith.constant dense<0.000000e+00> : vector<16x128xf32>
    %178 = tpu.matmul %175, %177, %cst_73 {dimension_numbers = #tpu.dot_dimension_numbers<[1], [0], [0], [1], [0, 0, 1, 1], [], []>} : vector<16x32xf32>, vector<32x128xf32>, vector<16x128xf32> -> vector<16x128xf32>
    %c0_74 = arith.constant 0 : index
    %c0_75 = arith.constant 0 : index
    %c0_76 = arith.constant 0 : index
    %179 = vector.load %arg17[%c0_74, %c0_75, %c0_76] : memref<2x1x128xf32, #tpu.memory_space<vmem>>, vector<1x1x128xf32>
    %180 = vector.shape_cast %179 : vector<1x1x128xf32> to vector<1x128xf32>
    %181 = vector.broadcast %180 : vector<1x128xf32> to vector<16x128xf32>
    %182 = arith.addf %178, %181 : vector<16x128xf32>
    %cst_77 = arith.constant 0.000000e+00 : f32
    %183 = vector.broadcast %cst_77 : f32 to vector<16x128xf32>
    %184 = arith.maximumf %182, %183 : vector<16x128xf32>
    %c0_78 = arith.constant 0 : index
    %c0_79 = arith.constant 0 : index
    %c0_80 = arith.constant 0 : index
    %185 = vector.load %arg18[%c0_78, %c0_79, %c0_80] : memref<2x128x32xf32, #tpu.memory_space<vmem>>, vector<1x128x32xf32>
    %186 = vector.shape_cast %185 : vector<1x128x32xf32> to vector<128x32xf32>
    %cst_81 = arith.constant dense<0.000000e+00> : vector<16x32xf32>
    %187 = tpu.matmul %184, %186, %cst_81 {dimension_numbers = #tpu.dot_dimension_numbers<[1], [0], [0], [1], [0, 0, 1, 1], [], []>} : vector<16x128xf32>, vector<128x32xf32>, vector<16x32xf32> -> vector<16x32xf32>
    %c0_82 = arith.constant 0 : index
    %c0_83 = arith.constant 0 : index
    %c0_84 = arith.constant 0 : index
    %188 = vector.load %arg19[%c0_82, %c0_83, %c0_84] : memref<2x1x32xf32, #tpu.memory_space<vmem>>, vector<1x1x32xf32>
    %189 = vector.shape_cast %188 : vector<1x1x32xf32> to vector<1x32xf32>
    %190 = vector.broadcast %189 : vector<1x32xf32> to vector<16x32xf32>
    %191 = arith.addf %187, %190 : vector<16x32xf32>
    %192 = arith.addf %191, %175 : vector<16x32xf32>
    %c0_85 = arith.constant 0 : index
    %c0_86 = arith.constant 0 : index
    %c0_87 = arith.constant 0 : index
    %193 = vector.load %arg14[%c0_85, %c0_86, %c0_87] : memref<2x1x32xf32, #tpu.memory_space<vmem>>, vector<1x1x32xf32>
    %194 = vector.shape_cast %193 : vector<1x1x32xf32> to vector<1x32xf32>
    %c0_88 = arith.constant 0 : index
    %c0_89 = arith.constant 0 : index
    %c0_90 = arith.constant 0 : index
    %195 = vector.load %arg15[%c0_88, %c0_89, %c0_90] : memref<2x1x32xf32, #tpu.memory_space<vmem>>, vector<1x1x32xf32>
    %196 = vector.shape_cast %195 : vector<1x1x32xf32> to vector<1x32xf32>
    %cst_91 = arith.constant dense<0.000000e+00> : vector<16xf32>
    %197 = vector.multi_reduction <add>, %192, %cst_91 [1] : vector<16x32xf32> to vector<16xf32>
    %198 = vector.shape_cast %197 : vector<16xf32> to vector<16x1xf32>
    %cst_92 = arith.constant 3.200000e+01 : f32
    %199 = vector.broadcast %cst_92 : f32 to vector<16x1xf32>
    %200 = arith.divf %198, %199 : vector<16x1xf32>
    %201 = vector.broadcast %200 : vector<16x1xf32> to vector<16x32xf32>
    %202 = arith.subf %192, %201 : vector<16x32xf32>
    %203 = arith.mulf %202, %202 : vector<16x32xf32>
    %cst_93 = arith.constant dense<0.000000e+00> : vector<16xf32>
    %204 = vector.multi_reduction <add>, %203, %cst_93 [1] : vector<16x32xf32> to vector<16xf32>
    %205 = vector.shape_cast %204 : vector<16xf32> to vector<16x1xf32>
    %cst_94 = arith.constant 3.200000e+01 : f32
    %206 = vector.broadcast %cst_94 : f32 to vector<16x1xf32>
    %207 = arith.divf %205, %206 : vector<16x1xf32>
    %208 = vector.broadcast %200 : vector<16x1xf32> to vector<16x32xf32>
    %209 = arith.subf %192, %208 : vector<16x32xf32>
    %cst_95 = arith.constant 9.99999974E-6 : f32
    %210 = vector.broadcast %cst_95 : f32 to vector<16x1xf32>
    %211 = arith.addf %207, %210 : vector<16x1xf32>
    %212 = math.rsqrt %211 : vector<16x1xf32>
    %213 = vector.broadcast %212 : vector<16x1xf32> to vector<16x32xf32>
    %214 = arith.mulf %209, %213 : vector<16x32xf32>
    %215 = vector.broadcast %194 : vector<1x32xf32> to vector<16x32xf32>
    %216 = arith.mulf %214, %215 : vector<16x32xf32>
    %217 = vector.broadcast %196 : vector<1x32xf32> to vector<16x32xf32>
    %218 = arith.addf %216, %217 : vector<16x32xf32>
    %c1 = arith.constant 1 : index
    %c0_96 = arith.constant 0 : index
    %c0_97 = arith.constant 0 : index
    %219 = vector.load %arg4[%c1, %c0_96, %c0_97] : memref<2x32x32xf32, #tpu.memory_space<vmem>>, vector<1x32x32xf32>
    %220 = vector.shape_cast %219 : vector<1x32x32xf32> to vector<32x32xf32>
    %cst_98 = arith.constant dense<0.000000e+00> : vector<16x32xf32>
    %221 = tpu.matmul %218, %220, %cst_98 {dimension_numbers = #tpu.dot_dimension_numbers<[1], [0], [0], [1], [0, 0, 1, 1], [], []>} : vector<16x32xf32>, vector<32x32xf32>, vector<16x32xf32> -> vector<16x32xf32>
    %c1_99 = arith.constant 1 : index
    %c0_100 = arith.constant 0 : index
    %c0_101 = arith.constant 0 : index
    %222 = vector.load %arg5[%c1_99, %c0_100, %c0_101] : memref<2x1x32xf32, #tpu.memory_space<vmem>>, vector<1x1x32xf32>
    %223 = vector.shape_cast %222 : vector<1x1x32xf32> to vector<1x32xf32>
    %224 = vector.broadcast %223 : vector<1x32xf32> to vector<16x32xf32>
    %225 = arith.addf %221, %224 : vector<16x32xf32>
    %c1_102 = arith.constant 1 : index
    %c0_103 = arith.constant 0 : index
    %c0_104 = arith.constant 0 : index
    %226 = vector.load %arg6[%c1_102, %c0_103, %c0_104] : memref<2x32x32xf32, #tpu.memory_space<vmem>>, vector<1x32x32xf32>
    %227 = vector.shape_cast %226 : vector<1x32x32xf32> to vector<32x32xf32>
    %cst_105 = arith.constant dense<0.000000e+00> : vector<16x32xf32>
    %228 = tpu.matmul %218, %227, %cst_105 {dimension_numbers = #tpu.dot_dimension_numbers<[1], [0], [0], [1], [0, 0, 1, 1], [], []>} : vector<16x32xf32>, vector<32x32xf32>, vector<16x32xf32> -> vector<16x32xf32>
    %c1_106 = arith.constant 1 : index
    %c0_107 = arith.constant 0 : index
    %c0_108 = arith.constant 0 : index
    %229 = vector.load %arg7[%c1_106, %c0_107, %c0_108] : memref<2x1x32xf32, #tpu.memory_space<vmem>>, vector<1x1x32xf32>
    %230 = vector.shape_cast %229 : vector<1x1x32xf32> to vector<1x32xf32>
    %231 = vector.broadcast %230 : vector<1x32xf32> to vector<16x32xf32>
    %232 = arith.addf %228, %231 : vector<16x32xf32>
    %c1_109 = arith.constant 1 : index
    %c0_110 = arith.constant 0 : index
    %c0_111 = arith.constant 0 : index
    %233 = vector.load %arg8[%c1_109, %c0_110, %c0_111] : memref<2x32x32xf32, #tpu.memory_space<vmem>>, vector<1x32x32xf32>
    %234 = vector.shape_cast %233 : vector<1x32x32xf32> to vector<32x32xf32>
    %cst_112 = arith.constant dense<0.000000e+00> : vector<16x32xf32>
    %235 = tpu.matmul %218, %234, %cst_112 {dimension_numbers = #tpu.dot_dimension_numbers<[1], [0], [0], [1], [0, 0, 1, 1], [], []>} : vector<16x32xf32>, vector<32x32xf32>, vector<16x32xf32> -> vector<16x32xf32>
    %c1_113 = arith.constant 1 : index
    %c0_114 = arith.constant 0 : index
    %c0_115 = arith.constant 0 : index
    %236 = vector.load %arg9[%c1_113, %c0_114, %c0_115] : memref<2x1x32xf32, #tpu.memory_space<vmem>>, vector<1x1x32xf32>
    %237 = vector.shape_cast %236 : vector<1x1x32xf32> to vector<1x32xf32>
    %238 = vector.broadcast %237 : vector<1x32xf32> to vector<16x32xf32>
    %239 = arith.addf %235, %238 : vector<16x32xf32>
    %cst_116 = arith.constant 0.000000e+00 : f32
    %240 = vector.broadcast %cst_116 : f32 to vector<16x32xf32>
    %241 = vector.broadcast %41 : vector<1x32xf32> to vector<16x32xf32>
    %242 = arith.mulf %225, %241 : vector<16x32xf32>
    %cst_117 = arith.constant dense<0.000000e+00> : vector<16x16xf32>
    %243 = tpu.matmul %242, %232, %cst_117 {dimension_numbers = #tpu.dot_dimension_numbers<[1], [1], [0], [0], [0, 0, 1, 0], [], []>} : vector<16x32xf32>, vector<16x32xf32>, vector<16x16xf32> -> vector<16x16xf32>
    %244 = arith.addf %243, %10 : vector<16x16xf32>
    %cst_118 = arith.constant dense<0xFF800000> : vector<16xf32>
    %245 = vector.multi_reduction <maximumf>, %244, %cst_118 [1] : vector<16x16xf32> to vector<16xf32>
    %246 = vector.shape_cast %245 : vector<16xf32> to vector<16x1xf32>
    %247 = vector.broadcast %246 : vector<16x1xf32> to vector<16x16xf32>
    %248 = arith.subf %244, %247 : vector<16x16xf32>
    %249 = math.exp %248 : vector<16x16xf32>
    %cst_119 = arith.constant dense<0.000000e+00> : vector<16xf32>
    %250 = vector.multi_reduction <add>, %249, %cst_119 [1] : vector<16x16xf32> to vector<16xf32>
    %251 = vector.shape_cast %250 : vector<16xf32> to vector<16x1xf32>
    %252 = tpu.reciprocal %251 {approx = true} : vector<16x1xf32> -> vector<16x1xf32>
    %253 = vector.broadcast %252 : vector<16x1xf32> to vector<16x16xf32>
    %254 = arith.mulf %249, %253 : vector<16x16xf32>
    %255 = vector.broadcast %18 : vector<1x32xf32> to vector<16x32xf32>
    %256 = arith.mulf %239, %255 : vector<16x32xf32>
    %cst_120 = arith.constant dense<0.000000e+00> : vector<16x32xf32>
    %257 = tpu.matmul %254, %256, %cst_120 {dimension_numbers = #tpu.dot_dimension_numbers<[1], [0], [0], [1], [0, 0, 1, 1], [], []>} : vector<16x16xf32>, vector<16x32xf32>, vector<16x32xf32> -> vector<16x32xf32>
    %258 = arith.addf %240, %257 : vector<16x32xf32>
    %259 = vector.broadcast %43 : vector<1x32xf32> to vector<16x32xf32>
    %260 = arith.mulf %225, %259 : vector<16x32xf32>
    %cst_121 = arith.constant dense<0.000000e+00> : vector<16x16xf32>
    %261 = tpu.matmul %260, %232, %cst_121 {dimension_numbers = #tpu.dot_dimension_numbers<[1], [1], [0], [0], [0, 0, 1, 0], [], []>} : vector<16x32xf32>, vector<16x32xf32>, vector<16x16xf32> -> vector<16x16xf32>
    %262 = arith.addf %261, %10 : vector<16x16xf32>
    %cst_122 = arith.constant dense<0xFF800000> : vector<16xf32>
    %263 = vector.multi_reduction <maximumf>, %262, %cst_122 [1] : vector<16x16xf32> to vector<16xf32>
    %264 = vector.shape_cast %263 : vector<16xf32> to vector<16x1xf32>
    %265 = vector.broadcast %264 : vector<16x1xf32> to vector<16x16xf32>
    %266 = arith.subf %262, %265 : vector<16x16xf32>
    %267 = math.exp %266 : vector<16x16xf32>
    %cst_123 = arith.constant dense<0.000000e+00> : vector<16xf32>
    %268 = vector.multi_reduction <add>, %267, %cst_123 [1] : vector<16x16xf32> to vector<16xf32>
    %269 = vector.shape_cast %268 : vector<16xf32> to vector<16x1xf32>
    %270 = tpu.reciprocal %269 {approx = true} : vector<16x1xf32> -> vector<16x1xf32>
    %271 = vector.broadcast %270 : vector<16x1xf32> to vector<16x16xf32>
    %272 = arith.mulf %267, %271 : vector<16x16xf32>
    %273 = vector.broadcast %25 : vector<1x32xf32> to vector<16x32xf32>
    %274 = arith.mulf %239, %273 : vector<16x32xf32>
    %cst_124 = arith.constant dense<0.000000e+00> : vector<16x32xf32>
    %275 = tpu.matmul %272, %274, %cst_124 {dimension_numbers = #tpu.dot_dimension_numbers<[1], [0], [0], [1], [0, 0, 1, 1], [], []>} : vector<16x16xf32>, vector<16x32xf32>, vector<16x32xf32> -> vector<16x32xf32>
    %276 = arith.addf %258, %275 : vector<16x32xf32>
    %277 = vector.broadcast %45 : vector<1x32xf32> to vector<16x32xf32>
    %278 = arith.mulf %225, %277 : vector<16x32xf32>
    %cst_125 = arith.constant dense<0.000000e+00> : vector<16x16xf32>
    %279 = tpu.matmul %278, %232, %cst_125 {dimension_numbers = #tpu.dot_dimension_numbers<[1], [1], [0], [0], [0, 0, 1, 0], [], []>} : vector<16x32xf32>, vector<16x32xf32>, vector<16x16xf32> -> vector<16x16xf32>
    %280 = arith.addf %279, %10 : vector<16x16xf32>
    %cst_126 = arith.constant dense<0xFF800000> : vector<16xf32>
    %281 = vector.multi_reduction <maximumf>, %280, %cst_126 [1] : vector<16x16xf32> to vector<16xf32>
    %282 = vector.shape_cast %281 : vector<16xf32> to vector<16x1xf32>
    %283 = vector.broadcast %282 : vector<16x1xf32> to vector<16x16xf32>
    %284 = arith.subf %280, %283 : vector<16x16xf32>
    %285 = math.exp %284 : vector<16x16xf32>
    %cst_127 = arith.constant dense<0.000000e+00> : vector<16xf32>
    %286 = vector.multi_reduction <add>, %285, %cst_127 [1] : vector<16x16xf32> to vector<16xf32>
    %287 = vector.shape_cast %286 : vector<16xf32> to vector<16x1xf32>
    %288 = tpu.reciprocal %287 {approx = true} : vector<16x1xf32> -> vector<16x1xf32>
    %289 = vector.broadcast %288 : vector<16x1xf32> to vector<16x16xf32>
    %290 = arith.mulf %285, %289 : vector<16x16xf32>
    %291 = vector.broadcast %32 : vector<1x32xf32> to vector<16x32xf32>
    %292 = arith.mulf %239, %291 : vector<16x32xf32>
    %cst_128 = arith.constant dense<0.000000e+00> : vector<16x32xf32>
    %293 = tpu.matmul %290, %292, %cst_128 {dimension_numbers = #tpu.dot_dimension_numbers<[1], [0], [0], [1], [0, 0, 1, 1], [], []>} : vector<16x16xf32>, vector<16x32xf32>, vector<16x32xf32> -> vector<16x32xf32>
    %294 = arith.addf %276, %293 : vector<16x32xf32>
    %295 = vector.broadcast %47 : vector<1x32xf32> to vector<16x32xf32>
    %296 = arith.mulf %225, %295 : vector<16x32xf32>
    %cst_129 = arith.constant dense<0.000000e+00> : vector<16x16xf32>
    %297 = tpu.matmul %296, %232, %cst_129 {dimension_numbers = #tpu.dot_dimension_numbers<[1], [1], [0], [0], [0, 0, 1, 0], [], []>} : vector<16x32xf32>, vector<16x32xf32>, vector<16x16xf32> -> vector<16x16xf32>
    %298 = arith.addf %297, %10 : vector<16x16xf32>
    %cst_130 = arith.constant dense<0xFF800000> : vector<16xf32>
    %299 = vector.multi_reduction <maximumf>, %298, %cst_130 [1] : vector<16x16xf32> to vector<16xf32>
    %300 = vector.shape_cast %299 : vector<16xf32> to vector<16x1xf32>
    %301 = vector.broadcast %300 : vector<16x1xf32> to vector<16x16xf32>
    %302 = arith.subf %298, %301 : vector<16x16xf32>
    %303 = math.exp %302 : vector<16x16xf32>
    %cst_131 = arith.constant dense<0.000000e+00> : vector<16xf32>
    %304 = vector.multi_reduction <add>, %303, %cst_131 [1] : vector<16x16xf32> to vector<16xf32>
    %305 = vector.shape_cast %304 : vector<16xf32> to vector<16x1xf32>
    %306 = tpu.reciprocal %305 {approx = true} : vector<16x1xf32> -> vector<16x1xf32>
    %307 = vector.broadcast %306 : vector<16x1xf32> to vector<16x16xf32>
    %308 = arith.mulf %303, %307 : vector<16x16xf32>
    %309 = vector.broadcast %39 : vector<1x32xf32> to vector<16x32xf32>
    %310 = arith.mulf %239, %309 : vector<16x32xf32>
    %cst_132 = arith.constant dense<0.000000e+00> : vector<16x32xf32>
    %311 = tpu.matmul %308, %310, %cst_132 {dimension_numbers = #tpu.dot_dimension_numbers<[1], [0], [0], [1], [0, 0, 1, 1], [], []>} : vector<16x16xf32>, vector<16x32xf32>, vector<16x32xf32> -> vector<16x32xf32>
    %312 = arith.addf %294, %311 : vector<16x32xf32>
    %c1_133 = arith.constant 1 : index
    %c0_134 = arith.constant 0 : index
    %c0_135 = arith.constant 0 : index
    %313 = vector.load %arg10[%c1_133, %c0_134, %c0_135] : memref<2x32x32xf32, #tpu.memory_space<vmem>>, vector<1x32x32xf32>
    %314 = vector.shape_cast %313 : vector<1x32x32xf32> to vector<32x32xf32>
    %cst_136 = arith.constant dense<0.000000e+00> : vector<16x32xf32>
    %315 = tpu.matmul %312, %314, %cst_136 {dimension_numbers = #tpu.dot_dimension_numbers<[1], [0], [0], [1], [0, 0, 1, 1], [], []>} : vector<16x32xf32>, vector<32x32xf32>, vector<16x32xf32> -> vector<16x32xf32>
    %c1_137 = arith.constant 1 : index
    %c0_138 = arith.constant 0 : index
    %c0_139 = arith.constant 0 : index
    %316 = vector.load %arg11[%c1_137, %c0_138, %c0_139] : memref<2x1x32xf32, #tpu.memory_space<vmem>>, vector<1x1x32xf32>
    %317 = vector.shape_cast %316 : vector<1x1x32xf32> to vector<1x32xf32>
    %318 = vector.broadcast %317 : vector<1x32xf32> to vector<16x32xf32>
    %319 = arith.addf %315, %318 : vector<16x32xf32>
    %320 = arith.addf %319, %218 : vector<16x32xf32>
    %c1_140 = arith.constant 1 : index
    %c0_141 = arith.constant 0 : index
    %c0_142 = arith.constant 0 : index
    %321 = vector.load %arg12[%c1_140, %c0_141, %c0_142] : memref<2x1x32xf32, #tpu.memory_space<vmem>>, vector<1x1x32xf32>
    %322 = vector.shape_cast %321 : vector<1x1x32xf32> to vector<1x32xf32>
    %c1_143 = arith.constant 1 : index
    %c0_144 = arith.constant 0 : index
    %c0_145 = arith.constant 0 : index
    %323 = vector.load %arg13[%c1_143, %c0_144, %c0_145] : memref<2x1x32xf32, #tpu.memory_space<vmem>>, vector<1x1x32xf32>
    %324 = vector.shape_cast %323 : vector<1x1x32xf32> to vector<1x32xf32>
    %cst_146 = arith.constant dense<0.000000e+00> : vector<16xf32>
    %325 = vector.multi_reduction <add>, %320, %cst_146 [1] : vector<16x32xf32> to vector<16xf32>
    %326 = vector.shape_cast %325 : vector<16xf32> to vector<16x1xf32>
    %cst_147 = arith.constant 3.200000e+01 : f32
    %327 = vector.broadcast %cst_147 : f32 to vector<16x1xf32>
    %328 = arith.divf %326, %327 : vector<16x1xf32>
    %329 = vector.broadcast %328 : vector<16x1xf32> to vector<16x32xf32>
    %330 = arith.subf %320, %329 : vector<16x32xf32>
    %331 = arith.mulf %330, %330 : vector<16x32xf32>
    %cst_148 = arith.constant dense<0.000000e+00> : vector<16xf32>
    %332 = vector.multi_reduction <add>, %331, %cst_148 [1] : vector<16x32xf32> to vector<16xf32>
    %333 = vector.shape_cast %332 : vector<16xf32> to vector<16x1xf32>
    %cst_149 = arith.constant 3.200000e+01 : f32
    %334 = vector.broadcast %cst_149 : f32 to vector<16x1xf32>
    %335 = arith.divf %333, %334 : vector<16x1xf32>
    %336 = vector.broadcast %328 : vector<16x1xf32> to vector<16x32xf32>
    %337 = arith.subf %320, %336 : vector<16x32xf32>
    %cst_150 = arith.constant 9.99999974E-6 : f32
    %338 = vector.broadcast %cst_150 : f32 to vector<16x1xf32>
    %339 = arith.addf %335, %338 : vector<16x1xf32>
    %340 = math.rsqrt %339 : vector<16x1xf32>
    %341 = vector.broadcast %340 : vector<16x1xf32> to vector<16x32xf32>
    %342 = arith.mulf %337, %341 : vector<16x32xf32>
    %343 = vector.broadcast %322 : vector<1x32xf32> to vector<16x32xf32>
    %344 = arith.mulf %342, %343 : vector<16x32xf32>
    %345 = vector.broadcast %324 : vector<1x32xf32> to vector<16x32xf32>
    %346 = arith.addf %344, %345 : vector<16x32xf32>
    %c1_151 = arith.constant 1 : index
    %c0_152 = arith.constant 0 : index
    %c0_153 = arith.constant 0 : index
    %347 = vector.load %arg16[%c1_151, %c0_152, %c0_153] : memref<2x32x128xf32, #tpu.memory_space<vmem>>, vector<1x32x128xf32>
    %348 = vector.shape_cast %347 : vector<1x32x128xf32> to vector<32x128xf32>
    %cst_154 = arith.constant dense<0.000000e+00> : vector<16x128xf32>
    %349 = tpu.matmul %346, %348, %cst_154 {dimension_numbers = #tpu.dot_dimension_numbers<[1], [0], [0], [1], [0, 0, 1, 1], [], []>} : vector<16x32xf32>, vector<32x128xf32>, vector<16x128xf32> -> vector<16x128xf32>
    %c1_155 = arith.constant 1 : index
    %c0_156 = arith.constant 0 : index
    %c0_157 = arith.constant 0 : index
    %350 = vector.load %arg17[%c1_155, %c0_156, %c0_157] : memref<2x1x128xf32, #tpu.memory_space<vmem>>, vector<1x1x128xf32>
    %351 = vector.shape_cast %350 : vector<1x1x128xf32> to vector<1x128xf32>
    %352 = vector.broadcast %351 : vector<1x128xf32> to vector<16x128xf32>
    %353 = arith.addf %349, %352 : vector<16x128xf32>
    %cst_158 = arith.constant 0.000000e+00 : f32
    %354 = vector.broadcast %cst_158 : f32 to vector<16x128xf32>
    %355 = arith.maximumf %353, %354 : vector<16x128xf32>
    %c1_159 = arith.constant 1 : index
    %c0_160 = arith.constant 0 : index
    %c0_161 = arith.constant 0 : index
    %356 = vector.load %arg18[%c1_159, %c0_160, %c0_161] : memref<2x128x32xf32, #tpu.memory_space<vmem>>, vector<1x128x32xf32>
    %357 = vector.shape_cast %356 : vector<1x128x32xf32> to vector<128x32xf32>
    %cst_162 = arith.constant dense<0.000000e+00> : vector<16x32xf32>
    %358 = tpu.matmul %355, %357, %cst_162 {dimension_numbers = #tpu.dot_dimension_numbers<[1], [0], [0], [1], [0, 0, 1, 1], [], []>} : vector<16x128xf32>, vector<128x32xf32>, vector<16x32xf32> -> vector<16x32xf32>
    %c1_163 = arith.constant 1 : index
    %c0_164 = arith.constant 0 : index
    %c0_165 = arith.constant 0 : index
    %359 = vector.load %arg19[%c1_163, %c0_164, %c0_165] : memref<2x1x32xf32, #tpu.memory_space<vmem>>, vector<1x1x32xf32>
    %360 = vector.shape_cast %359 : vector<1x1x32xf32> to vector<1x32xf32>
    %361 = vector.broadcast %360 : vector<1x32xf32> to vector<16x32xf32>
    %362 = arith.addf %358, %361 : vector<16x32xf32>
    %363 = arith.addf %362, %346 : vector<16x32xf32>
    %c1_166 = arith.constant 1 : index
    %c0_167 = arith.constant 0 : index
    %c0_168 = arith.constant 0 : index
    %364 = vector.load %arg14[%c1_166, %c0_167, %c0_168] : memref<2x1x32xf32, #tpu.memory_space<vmem>>, vector<1x1x32xf32>
    %365 = vector.shape_cast %364 : vector<1x1x32xf32> to vector<1x32xf32>
    %c1_169 = arith.constant 1 : index
    %c0_170 = arith.constant 0 : index
    %c0_171 = arith.constant 0 : index
    %366 = vector.load %arg15[%c1_169, %c0_170, %c0_171] : memref<2x1x32xf32, #tpu.memory_space<vmem>>, vector<1x1x32xf32>
    %367 = vector.shape_cast %366 : vector<1x1x32xf32> to vector<1x32xf32>
    %cst_172 = arith.constant dense<0.000000e+00> : vector<16xf32>
    %368 = vector.multi_reduction <add>, %363, %cst_172 [1] : vector<16x32xf32> to vector<16xf32>
    %369 = vector.shape_cast %368 : vector<16xf32> to vector<16x1xf32>
    %cst_173 = arith.constant 3.200000e+01 : f32
    %370 = vector.broadcast %cst_173 : f32 to vector<16x1xf32>
    %371 = arith.divf %369, %370 : vector<16x1xf32>
    %372 = vector.broadcast %371 : vector<16x1xf32> to vector<16x32xf32>
    %373 = arith.subf %363, %372 : vector<16x32xf32>
    %374 = arith.mulf %373, %373 : vector<16x32xf32>
    %cst_174 = arith.constant dense<0.000000e+00> : vector<16xf32>
    %375 = vector.multi_reduction <add>, %374, %cst_174 [1] : vector<16x32xf32> to vector<16xf32>
    %376 = vector.shape_cast %375 : vector<16xf32> to vector<16x1xf32>
    %cst_175 = arith.constant 3.200000e+01 : f32
    %377 = vector.broadcast %cst_175 : f32 to vector<16x1xf32>
    %378 = arith.divf %376, %377 : vector<16x1xf32>
    %379 = vector.broadcast %371 : vector<16x1xf32> to vector<16x32xf32>
    %380 = arith.subf %363, %379 : vector<16x32xf32>
    %cst_176 = arith.constant 9.99999974E-6 : f32
    %381 = vector.broadcast %cst_176 : f32 to vector<16x1xf32>
    %382 = arith.addf %378, %381 : vector<16x1xf32>
    %383 = math.rsqrt %382 : vector<16x1xf32>
    %384 = vector.broadcast %383 : vector<16x1xf32> to vector<16x32xf32>
    %385 = arith.mulf %380, %384 : vector<16x32xf32>
    %386 = vector.broadcast %365 : vector<1x32xf32> to vector<16x32xf32>
    %387 = arith.mulf %385, %386 : vector<16x32xf32>
    %388 = vector.broadcast %367 : vector<1x32xf32> to vector<16x32xf32>
    %389 = arith.addf %387, %388 : vector<16x32xf32>
    %c0_177 = arith.constant 0 : index
    %c0_178 = arith.constant 0 : index
    %390 = vector.load %arg20[%c0_177, %c0_178] : memref<32x128xf32, #tpu.memory_space<vmem>>, vector<32x128xf32>
    %cst_179 = arith.constant dense<0.000000e+00> : vector<16x128xf32>
    %391 = tpu.matmul %389, %390, %cst_179 {dimension_numbers = #tpu.dot_dimension_numbers<[1], [0], [0], [1], [0, 0, 1, 1], [], []>} : vector<16x32xf32>, vector<32x128xf32>, vector<16x128xf32> -> vector<16x128xf32>
    %c0_180 = arith.constant 0 : index
    %c0_181 = arith.constant 0 : index
    %392 = vector.load %arg21[%c0_180, %c0_181] : memref<1x128xf32, #tpu.memory_space<vmem>>, vector<1x128xf32>
    %393 = vector.broadcast %392 : vector<1x128xf32> to vector<16x128xf32>
    %394 = arith.addf %391, %393 : vector<16x128xf32>
    %c0_182 = arith.constant 0 : index
    %c0_183 = arith.constant 0 : index
    %395 = vector.load %arg22[%c0_182, %c0_183] : memref<16x128xf32, #tpu.memory_space<vmem>>, vector<16x128xf32>
    tpu.vector_store %arg22[%c0_182, %c0_183], %394 {strides = array<i32>} : memref<16x128xf32, #tpu.memory_space<vmem>>, vector<16x128xf32>,
    return
  }
}

</mosaic_0001>

<llo_original>
// kernel: tpu_custom_call.1
$region0: #{tpu_custom_call.1}
  #allocation0 [shape = 'u32[]', space=smem, size = 0x4, offset = 0x4, fixed_abs, tag = 'smem constant byte address 0x4 - core index']
  #allocation1 [shape = 'u32[144,128]{1,0:T(1,128)}', space=vmem, size = 0x12000, scoped, tag = 'internal scratch']
  %s0 = inlined_call_operand.vmem [shape: s32[16,1], index: 0, kind: input, shape index: {}]
  %s1 = inlined_call_operand.vmem [shape: f32[16,32], index: 1, kind: input, shape index: {}]
  %s2 = inlined_call_operand.hbm [shape: f32[16,16], index: 2, kind: input, shape index: {}]
  %s3 = inlined_call_operand.vmem [shape: f32[64,32], index: 3, kind: input, shape index: {}]
  %s4 = inlined_call_operand.vmem [shape: f32[2,32,32], index: 4, kind: input, shape index: {}]
  %s5 = inlined_call_operand.vmem [shape: f32[2,1,32], index: 5, kind: input, shape index: {}]
  %s6 = inlined_call_operand.vmem [shape: f32[2,32,32], index: 6, kind: input, shape index: {}]
  %s7 = inlined_call_operand.vmem [shape: f32[2,1,32], index: 7, kind: input, shape index: {}]
  %s8 = inlined_call_operand.vmem [shape: f32[2,32,32], index: 8, kind: input, shape index: {}]
  %s9 = inlined_call_operand.vmem [shape: f32[2,1,32], index: 9, kind: input, shape index: {}]
  %s10 = inlined_call_operand.vmem [shape: f32[2,32,32], index: 10, kind: input, shape index: {}]
  %s11 = inlined_call_operand.vmem [shape: f32[2,1,32], index: 11, kind: input, shape index: {}]
  %s12 = inlined_call_operand.vmem [shape: f32[2,1,32], index: 12, kind: input, shape index: {}]
  %s13 = inlined_call_operand.vmem [shape: f32[2,1,32], index: 13, kind: input, shape index: {}]
  %s14 = inlined_call_operand.vmem [shape: f32[2,1,32], index: 14, kind: input, shape index: {}]
  %s15 = inlined_call_operand.vmem [shape: f32[2,1,32], index: 15, kind: input, shape index: {}]
  %s16 = inlined_call_operand.vmem [shape: f32[2,32,128], index: 16, kind: input, shape index: {}]
  %s17 = inlined_call_operand.vmem [shape: f32[2,1,128], index: 17, kind: input, shape index: {}]
  %s18 = inlined_call_operand.vmem [shape: f32[2,128,32], index: 18, kind: input, shape index: {}]
  %s19 = inlined_call_operand.vmem [shape: f32[2,1,32], index: 19, kind: input, shape index: {}]
  %s20 = inlined_call_operand.vmem [shape: f32[32,128], index: 20, kind: input, shape index: {}]
  %s21 = inlined_call_operand.vmem [shape: f32[1,128], index: 21, kind: input, shape index: {}]
  %s22 = inlined_call_operand.hbm [shape: f32[16,128], index: 22, kind: output, shape index: {}]
  %s23 = sld [smem:[#allocation0]]
  $region102: #{tpu_custom_call.1} parent=0
    _
  %s25 = ssub.s32 1, %s23
  %s26 = scalar_select 0, %s25, %s23
  $region1: #{tpu_custom_call.1} parent=0
    #allocation2 [shape = 'u8[8192]{0}', space=vmem, size = 0x2000, scoped, tag = 'input window, operand 2, single buffered']
    #allocation3 [shape = 's32[1]{0}', space=sflag, size = 0x4, scoped, tag = 'scoped memory for tpu_custom_call.1']
    #allocation4 [shape = 's32[1]{0}', space=sflag, size = 0x4, scoped, tag = 'scoped memory for tpu_custom_call.1']
    #allocation5 [shape = 'u8[8192]{0}', space=vmem, size = 0x2000, scoped, tag = 'output window, operand 0, single buffered']
    %27 = vsyncpa [#allocation3], 0
    %28 = vsyncpa [#allocation4], 0
    // Predicated region
    $region2: #{tpu_custom_call.1} parent=1 // pred_check
      _
    $region3: #{tpu_custom_call.1} parent=1 // pred_check_branch
      %30 = sbr.rel (0) target = $region5
    $region4: #{tpu_custom_call.1} parent=1 // pred_region
      _
    $region5: #{tpu_custom_call.1} parent=1 // pred_fallthru
      _
    // Predicated region
    $region6: #{tpu_custom_call.1} parent=1 // pred_check
      _
    $region7: #{tpu_custom_call.1} parent=1 // pred_check_branch
      %32 = sbr.rel (0) target = $region9
    $region8: #{tpu_custom_call.1} parent=1 // pred_region
      _
    $region9: #{tpu_custom_call.1} parent=1 // pred_fallthru
      _
    // Predicated region
    $region10: #{tpu_custom_call.1} parent=1 // pred_check
      _
    $region11: #{tpu_custom_call.1} parent=1 // pred_check_branch
      %34 = sbr.rel (0) target = $region13
    $region12: #{tpu_custom_call.1} parent=1 // pred_region
      %s36 = ssub.s32 256, 256
      %37 = vsyncadd [#allocation3], %s36
      %s38 = sshll.u32 [#allocation2], 4
      %s39 = int_to_ptr.vmem [resolvable:$true] %s38
      %44 = dma.hbm_to_vmem [thread:$0]  %s2, 256, %s39, [#allocation3], 128, 128, 8
    $region13: #{tpu_custom_call.1} parent=1 // pred_fallthru
      _
    // Predicated region
    $region14: #{tpu_custom_call.1} parent=1 // pred_check
      _
    $region15: #{tpu_custom_call.1} parent=1 // pred_check_branch
      %46 = sbr.rel (0) target = $region17
    $region16: #{tpu_custom_call.1} parent=1 // pred_region
      _
    $region17: #{tpu_custom_call.1} parent=1 // pred_fallthru
      _
    // Predicated region
    $region18: #{tpu_custom_call.1} parent=1 // pred_check
      _
    $region19: #{tpu_custom_call.1} parent=1 // pred_check_branch
      %48 = sbr.rel (0) target = $region21
    $region20: #{tpu_custom_call.1} parent=1 // pred_region
      _
    $region21: #{tpu_custom_call.1} parent=1 // pred_fallthru
      _
    // Predicated region
    $region22: #{tpu_custom_call.1} parent=1 // pred_check
      _
    $region23: #{tpu_custom_call.1} parent=1 // pred_check_branch
      %50 = sbr.rel (0) target = $region25
    $region24: #{tpu_custom_call.1} parent=1 // pred_region
      _
    $region25: #{tpu_custom_call.1} parent=1 // pred_fallthru
      _
    // Predicated region
    $region26: #{tpu_custom_call.1} parent=1 // pred_check
      _
    $region27: #{tpu_custom_call.1} parent=1 // pred_check_branch
      %52 = sbr.rel (0) target = $region29
    $region28: #{tpu_custom_call.1} parent=1 // pred_region
      _
    $region29: #{tpu_custom_call.1} parent=1 // pred_fallthru
      _
    // Predicated region
    $region30: #{tpu_custom_call.1} parent=1 // pred_check
      _
    $region31: #{tpu_custom_call.1} parent=1 // pred_check_branch
      %54 = sbr.rel (0) target = $region33
    $region32: #{tpu_custom_call.1} parent=1 // pred_region
      _
    $region33: #{tpu_custom_call.1} parent=1 // pred_fallthru
      _
    // Predicated region
    $region34: #{tpu_custom_call.1} parent=1 // pred_check
      _
    $region35: #{tpu_custom_call.1} parent=1 // pred_check_branch
      %56 = sbr.rel (0) target = $region37
    $region36: #{tpu_custom_call.1} parent=1 // pred_region
      _
    $region37: #{tpu_custom_call.1} parent=1 // pred_fallthru
      _
    // Predicated region
    $region38: #{tpu_custom_call.1} parent=1 // pred_check
      _
    $region39: #{tpu_custom_call.1} parent=1 // pred_check_branch
      %58 = sbr.rel (0) target = $region41
    $region40: #{tpu_custom_call.1} parent=1 // pred_region
      _
    $region41: #{tpu_custom_call.1} parent=1 // pred_fallthru
      _
    // Predicated region
    $region42: #{tpu_custom_call.1} parent=1 // pred_check
      _
    $region43: #{tpu_custom_call.1} parent=1 // pred_check_branch
      %60 = sbr.rel (0) target = $region45
    $region44: #{tpu_custom_call.1} parent=1 // pred_region
      _
    $region45: #{tpu_custom_call.1} parent=1 // pred_fallthru
      _
    // Predicated region
    $region46: #{tpu_custom_call.1} parent=1 // pred_check
      _
    $region47: #{tpu_custom_call.1} parent=1 // pred_check_branch
      %62 = sbr.rel (0) target = $region49
    $region48: #{tpu_custom_call.1} parent=1 // pred_region
      _
    $region49: #{tpu_custom_call.1} parent=1 // pred_fallthru
      _
    // Predicated region
    $region50: #{tpu_custom_call.1} parent=1 // pred_check
      _
    $region51: #{tpu_custom_call.1} parent=1 // pred_check_branch
      %64 = sbr.rel (0) target = $region53
    $region52: #{tpu_custom_call.1} parent=1 // pred_region
      _
    $region53: #{tpu_custom_call.1} parent=1 // pred_fallthru
      _
    // Predicated region
    $region54: #{tpu_custom_call.1} parent=1 // pred_check
      _
    $region55: #{tpu_custom_call.1} parent=1 // pred_check_branch
      %66 = sbr.rel (0) target = $region57
    $region56: #{tpu_custom_call.1} parent=1 // pred_region
      _
    $region57: #{tpu_custom_call.1} parent=1 // pred_fallthru
      _
    // Predicated region
    $region58: #{tpu_custom_call.1} parent=1 // pred_check
      _
    $region59: #{tpu_custom_call.1} parent=1 // pred_check_branch
      %68 = sbr.rel (0) target = $region61
    $region60: #{tpu_custom_call.1} parent=1 // pred_region
      _
    $region61: #{tpu_custom_call.1} parent=1 // pred_fallthru
      _
    // Predicated region
    $region62: #{tpu_custom_call.1} parent=1 // pred_check
      _
    $region63: #{tpu_custom_call.1} parent=1 // pred_check_branch
      %70 = sbr.rel (0) target = $region65
    $region64: #{tpu_custom_call.1} parent=1 // pred_region
      _
    $region65: #{tpu_custom_call.1} parent=1 // pred_fallthru
      _
    // Predicated region
    $region66: #{tpu_custom_call.1} parent=1 // pred_check
      _
    $region67: #{tpu_custom_call.1} parent=1 // pred_check_branch
      %72 = sbr.rel (0) target = $region69
    $region68: #{tpu_custom_call.1} parent=1 // pred_region
      _
    $region69: #{tpu_custom_call.1} parent=1 // pred_fallthru
      _
    // Predicated region
    $region70: #{tpu_custom_call.1} parent=1 // pred_check
      _
    $region71: #{tpu_custom_call.1} parent=1 // pred_check_branch
      %74 = sbr.rel (0) target = $region73
    $region72: #{tpu_custom_call.1} parent=1 // pred_region
      _
    $region73: #{tpu_custom_call.1} parent=1 // pred_fallthru
      _
    // Predicated region
    $region74: #{tpu_custom_call.1} parent=1 // pred_check
      _
    $region75: #{tpu_custom_call.1} parent=1 // pred_check_branch
      %76 = sbr.rel (0) target = $region77
    $region76: #{tpu_custom_call.1} parent=1 // pred_region
      _
    $region77: #{tpu_custom_call.1} parent=1 // pred_fallthru
      _
    // Predicated region
    $region78: #{tpu_custom_call.1} parent=1 // pred_check
      _
    $region79: #{tpu_custom_call.1} parent=1 // pred_check_branch
      %78 = sbr.rel (0) target = $region81
    $region80: #{tpu_custom_call.1} parent=1 // pred_region
      _
    $region81: #{tpu_custom_call.1} parent=1 // pred_fallthru
      _
    // Predicated region
    $region82: #{tpu_custom_call.1} parent=1 // pred_check
      _
    $region83: #{tpu_custom_call.1} parent=1 // pred_check_branch
      %80 = sbr.rel (0) target = $region85
    $region84: #{tpu_custom_call.1} parent=1 // pred_region
      _
    $region85: #{tpu_custom_call.1} parent=1 // pred_fallthru
      _
    // Predicated region
    $region86: #{tpu_custom_call.1} parent=1 // pred_check
      _
    $region87: #{tpu_custom_call.1} parent=1 // pred_check_branch
      %82 = sbr.rel (0) target = $region89
    $region88: #{tpu_custom_call.1} parent=1 // pred_region
      _
    $region89: #{tpu_custom_call.1} parent=1 // pred_fallthru
      _
    // Predicated region
    $region90: #{tpu_custom_call.1} parent=1 // pred_check
      _
    $region91: #{tpu_custom_call.1} parent=1 // pred_check_branch
      %84 = sbr.rel (0) target = $region93
    $region92: #{tpu_custom_call.1} parent=1 // pred_region
      %85 = dma.done [#allocation3], 256
    $region93: #{tpu_custom_call.1} parent=1 // pred_fallthru
      _
    %v86 = vld [vmem:[%s0] sm:$0xff]
    %v87 = vld [vmem:[%s0 + $0x8] sm:$0xff]
    %v88 = vlaneseq
    %v89 = vand.u32 %v88, 127
    %90 = vset.pattern.permute.xlu0 0
    %91 = vperm.xlu0 %90, %v86
    %v92 = vpop.permute.xlu0 %91
    %93 = vset.pattern.permute.xlu0 0
    %94 = vperm.xlu0 %93, %v87
    %v95 = vpop.permute.xlu0 %94
    %vm96 = vcmp.eq.s32.totalorder %v92, %v89
    %vm97 = vcmp.eq.s32.totalorder %v95, %v89
    %v98 = vsel %vm96, 1, 0
    %v99 = vsel %vm97, 1, 0
    %v100 = vcvt.s32.f32 %v98
    %v101 = vcvt.s32.f32 %v99
    %v102 = vld [vmem:[%s3] sm:$0xff]
    %v103 = vld [vmem:[%s3 + $0x8] sm:$0xff]
    %v104 = vld [vmem:[%s3 + $0x10] sm:$0xff]
    %v105 = vld [vmem:[%s3 + $0x18] sm:$0xff]
    %v106 = vld [vmem:[%s3 + $0x20] sm:$0xff]
    %v107 = vld [vmem:[%s3 + $0x28] sm:$0xff]
    %v108 = vld [vmem:[%s3 + $0x30] sm:$0xff]
    %v109 = vld [vmem:[%s3 + $0x38] sm:$0xff]
    %v110 = vld [vmem:[%s1] sm:$0xff]
    %v111 = vld [vmem:[%s1 + $0x8] sm:$0xff]
    %vm112 = vcmask 523264
    %v114 = vsel %vm112, %v100, 0
    %v117 = vsel %vm112, %v101, 0
    %119 = vmatprep.subr.mxu0 0.0
    %120 = vmatpush1.msra.mxu0 0.0
    %121 = vmatprep.subr.mxu0 0.0
    %122 = vmatpush1.msra.mxu0 0.0
    %123 = vmatprep.subr.mxu0 0.0
    %124 = vmatpush1.msra.mxu0 0.0
    %125 = vmatprep.subr.mxu0 0.0
    %126 = vmatpush1.msra.mxu0 0.0
    %127 = vmatprep.subr.mxu0 0.0
    %128 = vmatpush1.msra.mxu0 0.0
    %129 = vmatprep.subr.mxu0 0.0
    %130 = vmatpush1.msra.mxu0 0.0
    %131 = vmatprep.subr.mxu0 0.0
    %132 = vmatpush1.msra.mxu0 0.0
    %133 = vmatprep.subr.mxu0 0.0
    %134 = vmatpush1.msra.mxu0 0.0
    %135 = vmatprep.subr.mxu0 0.0
    %136 = vmatpush1.msra.mxu0 %v109
    %137 = vmatprep.subr.mxu0 0.0
    %138 = vmatpush1.msra.mxu0 %v108
    %139 = vmatprep.subr.mxu0 0.0
    %140 = vmatpush1.msra.mxu0 %v107
    %141 = vmatprep.subr.mxu0 0.0
    %142 = vmatpush1.msra.mxu0 %v106
    %143 = vmatprep.subr.mxu0 0.0
    %144 = vmatpush1.msra.mxu0 %v105
    %145 = vmatprep.subr.mxu0 0.0
    %146 = vmatpush1.msra.mxu0 %v104
    %147 = vmatprep.subr.mxu0 0.0
    %148 = vmatpush1.msra.mxu0 %v103
    %149 = vmatprep.subr.mxu0 0.0
    %150 = vmatpush1.msra.mxu0 %v102
    %151 = vmatprep.subr.mxu0 0.0
    %152 = vmatpush2.msra.mxu0 0.0
    %153 = vmatprep.subr.mxu0 0.0
    %154 = vmatpush2.msra.mxu0 0.0
    %155 = vmatprep.subr.mxu0 0.0
    %156 = vmatpush2.msra.mxu0 0.0
    %157 = vmatprep.subr.mxu0 0.0
    %158 = vmatpush2.msra.mxu0 0.0
    %159 = vmatprep.subr.mxu0 0.0
    %160 = vmatpush2.msra.mxu0 0.0
    %161 = vmatprep.subr.mxu0 0.0
    %162 = vmatpush2.msra.mxu0 0.0
    %163 = vmatprep.subr.mxu0 0.0
    %164 = vmatpush2.msra.mxu0 0.0
    %165 = vmatprep.subr.mxu0 0.0
    %166 = vmatpush2.msra.mxu0 0.0
    %167 = vmatprep.subr.mxu0 0.0
    %168 = vmatpush2.msra.mxu0 0.0
    %169 = vmatprep.subr.mxu0 0.0
    %170 = vmatpush2.msra.mxu0 0.0
    %171 = vmatprep.subr.mxu0 0.0
    %172 = vmatpush2.msra.mxu0 0.0
    %173 = vmatprep.subr.mxu0 0.0
    %174 = vmatpush2.msra.mxu0 0.0
    %175 = vmatprep.subr.mxu0 0.0
    %176 = vmatpush2.msra.mxu0 0.0
    %177 = vmatprep.subr.mxu0 0.0
    %178 = vmatpush2.msra.mxu0 0.0
    %179 = vmatprep.subr.mxu0 0.0
    %180 = vmatpush2.msra.mxu0 0.0
    %181 = vmatprep.subr.mxu0 0.0
    %182 = vmatpush2.msra.mxu0 0.0
    %183 = vmatprep.mubr.f32.mxu0 0.0
    %184 = vmatmul.mubr.f32.gmra.mxu0 %v114
    %v185 = vpop.f32.mrf.mxu0
    %v186 = vadd.f32 %v110, %v185
    %v187 = vpop.f32.mrf.mxu0
    %188 = vmatprep.mubr.f32.mxu0 0.0
    %189 = vmatmul.mubr.f32.gmra.mxu0 %v117
    %v190 = vpop.f32.mrf.mxu0
    %v191 = vadd.f32 %v111, %v190
    %v192 = vpop.f32.mrf.mxu0
    %193 = vdwg.mxu0
    %v194 = vld [vmem:[#allocation2] sm:$0xff]
    %v195 = vld [vmem:[#allocation2 + $0x8] sm:$0xff]
    %vm196 = vcmp.ge.s32.totalorder %v89, 0
    %vm197 = vcmp.lt.s32.totalorder %v89, 8
    %vm198 = vmand %vm196, %vm197
    %v199 = vsel %vm198, 1, 0
    %v200 = vcvt.s32.f32 %v199
    %vm201 = vcmp.ge.s32.totalorder %v89, 8
    %vm202 = vcmp.lt.s32.totalorder %v89, 16
    %vm203 = vmand %vm201, %vm202
    %v204 = vsel %vm203, 1, 0
    %v205 = vcvt.s32.f32 %v204
    %vm206 = vcmp.ge.s32.totalorder %v89, 16
    %vm207 = vcmp.lt.s32.totalorder %v89, 24
    %vm208 = vmand %vm206, %vm207
    %v209 = vsel %vm208, 1, 0
    %v210 = vcvt.s32.f32 %v209
    %vm211 = vcmp.ge.s32.totalorder %v89, 24
    %vm212 = vcmp.lt.s32.totalorder %v89, 32
    %vm213 = vmand %vm211, %vm212
    %v214 = vsel %vm213, 1, 0
    %v215 = vcvt.s32.f32 %v214
    %v216 = vmul.f32 %v200, 0.35355338
    %v217 = vmul.f32 %v205, 0.35355338
    %v218 = vmul.f32 %v210, 0.35355338
    %v219 = vmul.f32 %v215, 0.35355338
    %v220 = vld [vmem:[%s4] sm:$0xff]
    %v221 = vld [vmem:[%s4 + $0x8] sm:$0xff]
    %v222 = vld [vmem:[%s4 + $0x10] sm:$0xff]
    %v223 = vld [vmem:[%s4 + $0x18] sm:$0xff]
    %v224 = vld [vmem:[%s5] sm:$0x1]
    %v226 = vlaneseq
    %v227 = vshrl.u32 %v226, 7
    %v228 = vsub.s32 0, %v227
    %v229 = vrot.slane %v224, %v228
    %vm231 = vcmask 261120
    %v233 = vsel %vm231, %v186, 0
    %v236 = vsel %vm231, %v191, 0
    %238 = vmatprep.subr.mxu0 0.0
    %239 = vmatpush1.msra.mxu0 0.0
    %240 = vmatprep.subr.mxu0 0.0
    %241 = vmatpush1.msra.mxu0 0.0
    %242 = vmatprep.subr.mxu0 0.0
    %243 = vmatpush1.msra.mxu0 0.0
    %244 = vmatprep.subr.mxu0 0.0
    %245 = vmatpush1.msra.mxu0 0.0
    %246 = vmatprep.subr.mxu0 0.0
    %247 = vmatpush1.msra.mxu0 0.0
    %248 = vmatprep.subr.mxu0 0.0
    %249 = vmatpush1.msra.mxu0 0.0
    %250 = vmatprep.subr.mxu0 0.0
    %251 = vmatpush1.msra.mxu0 0.0
    %252 = vmatprep.subr.mxu0 0.0
    %253 = vmatpush1.msra.mxu0 0.0
    %254 = vmatprep.subr.mxu0 0.0
    %255 = vmatpush1.msra.mxu0 0.0
    %256 = vmatprep.subr.mxu0 0.0
    %257 = vmatpush1.msra.mxu0 0.0
    %258 = vmatprep.subr.mxu0 0.0
    %259 = vmatpush1.msra.mxu0 0.0
    %260 = vmatprep.subr.mxu0 0.0
    %261 = vmatpush1.msra.mxu0 0.0
    %262 = vmatprep.subr.mxu0 0.0
    %263 = vmatpush1.msra.mxu0 %v223
    %264 = vmatprep.subr.mxu0 0.0
    %265 = vmatpush1.msra.mxu0 %v222
    %266 = vmatprep.subr.mxu0 0.0
    %267 = vmatpush1.msra.mxu0 %v221
    %268 = vmatprep.subr.mxu0 0.0
    %269 = vmatpush1.msra.mxu0 %v220
    %270 = vmatprep.subr.mxu0 0.0
    %271 = vmatpush2.msra.mxu0 0.0
    %272 = vmatprep.subr.mxu0 0.0
    %273 = vmatpush2.msra.mxu0 0.0
    %274 = vmatprep.subr.mxu0 0.0
    %275 = vmatpush2.msra.mxu0 0.0
    %276 = vmatprep.subr.mxu0 0.0
    %277 = vmatpush2.msra.mxu0 0.0
    %278 = vmatprep.subr.mxu0 0.0
    %279 = vmatpush2.msra.mxu0 0.0
    %280 = vmatprep.subr.mxu0 0.0
    %281 = vmatpush2.msra.mxu0 0.0
    %282 = vmatprep.subr.mxu0 0.0
    %283 = vmatpush2.msra.mxu0 0.0
    %284 = vmatprep.subr.mxu0 0.0
    %285 = vmatpush2.msra.mxu0 0.0
    %286 = vmatprep.subr.mxu0 0.0
    %287 = vmatpush2.msra.mxu0 0.0
    %288 = vmatprep.subr.mxu0 0.0
    %289 = vmatpush2.msra.mxu0 0.0
    %290 = vmatprep.subr.mxu0 0.0
    %291 = vmatpush2.msra.mxu0 0.0
    %292 = vmatprep.subr.mxu0 0.0
    %293 = vmatpush2.msra.mxu0 0.0
    %294 = vmatprep.subr.mxu0 0.0
    %295 = vmatpush2.msra.mxu0 0.0
    %296 = vmatprep.subr.mxu0 0.0
    %297 = vmatpush2.msra.mxu0 0.0
    %298 = vmatprep.subr.mxu0 0.0
    %299 = vmatpush2.msra.mxu0 0.0
    %300 = vmatprep.subr.mxu0 0.0
    %301 = vmatpush2.msra.mxu0 0.0
    %302 = vmatprep.mubr.f32.mxu0 0.0
    %303 = vmatmul.mubr.f32.gmra.mxu0 %v233
    %v304 = vpop.f32.mrf.mxu0
    %v305 = vadd.f32 %v229, %v304
    %v306 = vpop.f32.mrf.mxu0
    %307 = vmatprep.mubr.f32.mxu0 0.0
    %308 = vmatmul.mubr.f32.gmra.mxu0 %v236
    %v309 = vpop.f32.mrf.mxu0
    %v310 = vadd.f32 %v229, %v309
    %v311 = vpop.f32.mrf.mxu0
    %312 = vdwg.mxu0
    %v313 = vld [vmem:[%s6] sm:$0xff]
    %v314 = vld [vmem:[%s6 + $0x8] sm:$0xff]
    %v315 = vld [vmem:[%s6 + $0x10] sm:$0xff]
    %v316 = vld [vmem:[%s6 + $0x18] sm:$0xff]
    %v317 = vld [vmem:[%s7] sm:$0x1]
    %v319 = vlaneseq
    %v320 = vshrl.u32 %v319, 7
    %v321 = vsub.s32 0, %v320
    %v322 = vrot.slane %v317, %v321
    %324 = vmatprep.subr.mxu0 0.0
    %325 = vmatpush1.msra.mxu0 0.0
    %326 = vmatprep.subr.mxu0 0.0
    %327 = vmatpush1.msra.mxu0 0.0
    %328 = vmatprep.subr.mxu0 0.0
    %329 = vmatpush1.msra.mxu0 0.0
    %330 = vmatprep.subr.mxu0 0.0
    %331 = vmatpush1.msra.mxu0 0.0
    %332 = vmatprep.subr.mxu0 0.0
    %333 = vmatpush1.msra.mxu0 0.0
    %334 = vmatprep.subr.mxu0 0.0
    %335 = vmatpush1.msra.mxu0 0.0
    %336 = vmatprep.subr.mxu0 0.0
    %337 = vmatpush1.msra.mxu0 0.0
    %338 = vmatprep.subr.mxu0 0.0
    %339 = vmatpush1.msra.mxu0 0.0
    %340 = vmatprep.subr.mxu0 0.0
    %341 = vmatpush1.msra.mxu0 0.0
    %342 = vmatprep.subr.mxu0 0.0
    %343 = vmatpush1.msra.mxu0 0.0
    %344 = vmatprep.subr.mxu0 0.0
    %345 = vmatpush1.msra.mxu0 0.0
    %346 = vmatprep.subr.mxu0 0.0
    %347 = vmatpush1.msra.mxu0 0.0
    %348 = vmatprep.subr.mxu0 0.0
    %349 = vmatpush1.msra.mxu0 %v316
    %350 = vmatprep.subr.mxu0 0.0
    %351 = vmatpush1.msra.mxu0 %v315
    %352 = vmatprep.subr.mxu0 0.0
    %353 = vmatpush1.msra.mxu0 %v314
    %354 = vmatprep.subr.mxu0 0.0
    %355 = vmatpush1.msra.mxu0 %v313
    %356 = vmatprep.subr.mxu0 0.0
    %357 = vmatpush2.msra.mxu0 0.0
    %358 = vmatprep.subr.mxu0 0.0
    %359 = vmatpush2.msra.mxu0 0.0
    %360 = vmatprep.subr.mxu0 0.0
    %361 = vmatpush2.msra.mxu0 0.0
    %362 = vmatprep.subr.mxu0 0.0
    %363 = vmatpush2.msra.mxu0 0.0
    %364 = vmatprep.subr.mxu0 0.0
    %365 = vmatpush2.msra.mxu0 0.0
    %366 = vmatprep.subr.mxu0 0.0
    %367 = vmatpush2.msra.mxu0 0.0
    %368 = vmatprep.subr.mxu0 0.0
    %369 = vmatpush2.msra.mxu0 0.0
    %370 = vmatprep.subr.mxu0 0.0
    %371 = vmatpush2.msra.mxu0 0.0
    %372 = vmatprep.subr.mxu0 0.0
    %373 = vmatpush2.msra.mxu0 0.0
    %374 = vmatprep.subr.mxu0 0.0
    %375 = vmatpush2.msra.mxu0 0.0
    %376 = vmatprep.subr.mxu0 0.0
    %377 = vmatpush2.msra.mxu0 0.0
    %378 = vmatprep.subr.mxu0 0.0
    %379 = vmatpush2.msra.mxu0 0.0
    %380 = vmatprep.subr.mxu0 0.0
    %381 = vmatpush2.msra.mxu0 0.0
    %382 = vmatprep.subr.mxu0 0.0
    %383 = vmatpush2.msra.mxu0 0.0
    %384 = vmatprep.subr.mxu0 0.0
    %385 = vmatpush2.msra.mxu0 0.0
    %386 = vmatprep.subr.mxu0 0.0
    %387 = vmatpush2.msra.mxu0 0.0
    %388 = vmatprep.mubr.f32.mxu0 0.0
    %389 = vmatmul.mubr.f32.gmra.mxu0 %v233
    %v390 = vpop.f32.mrf.mxu0
    %v391 = vadd.f32 %v322, %v390
    %v392 = vpop.f32.mrf.mxu0
    %393 = vmatprep.mubr.f32.mxu0 0.0
    %394 = vmatmul.mubr.f32.gmra.mxu0 %v236
    %v395 = vpop.f32.mrf.mxu0
    %v396 = vadd.f32 %v322, %v395
    %v397 = vpop.f32.mrf.mxu0
    %398 = vdwg.mxu0
    %v399 = vld [vmem:[%s8] sm:$0xff]
    %v400 = vld [vmem:[%s8 + $0x8] sm:$0xff]
    %v401 = vld [vmem:[%s8 + $0x10] sm:$0xff]
    %v402 = vld [vmem:[%s8 + $0x18] sm:$0xff]
    %v403 = vld [vmem:[%s9] sm:$0x1]
    %v405 = vlaneseq
    %v406 = vshrl.u32 %v405, 7
    %v407 = vsub.s32 0, %v406
    %v408 = vrot.slane %v403, %v407
    %410 = vmatprep.subr.mxu0 0.0
    %411 = vmatpush1.msra.mxu0 0.0
    %412 = vmatprep.subr.mxu0 0.0
    %413 = vmatpush1.msra.mxu0 0.0
    %414 = vmatprep.subr.mxu0 0.0
    %415 = vmatpush1.msra.mxu0 0.0
    %416 = vmatprep.subr.mxu0 0.0
    %417 = vmatpush1.msra.mxu0 0.0
    %418 = vmatprep.subr.mxu0 0.0
    %419 = vmatpush1.msra.mxu0 0.0
    %420 = vmatprep.subr.mxu0 0.0
    %421 = vmatpush1.msra.mxu0 0.0
    %422 = vmatprep.subr.mxu0 0.0
    %423 = vmatpush1.msra.mxu0 0.0
    %424 = vmatprep.subr.mxu0 0.0
    %425 = vmatpush1.msra.mxu0 0.0
    %426 = vmatprep.subr.mxu0 0.0
    %427 = vmatpush1.msra.mxu0 0.0
    %428 = vmatprep.subr.mxu0 0.0
    %429 = vmatpush1.msra.mxu0 0.0
    %430 = vmatprep.subr.mxu0 0.0
    %431 = vmatpush1.msra.mxu0 0.0
    %432 = vmatprep.subr.mxu0 0.0
    %433 = vmatpush1.msra.mxu0 0.0
    %434 = vmatprep.subr.mxu0 0.0
    %435 = vmatpush1.msra.mxu0 %v402
    %436 = vmatprep.subr.mxu0 0.0
    %437 = vmatpush1.msra.mxu0 %v401
    %438 = vmatprep.subr.mxu0 0.0
    %439 = vmatpush1.msra.mxu0 %v400
    %440 = vmatprep.subr.mxu0 0.0
    %441 = vmatpush1.msra.mxu0 %v399
    %442 = vmatprep.subr.mxu0 0.0
    %443 = vmatpush2.msra.mxu0 0.0
    %444 = vmatprep.subr.mxu0 0.0
    %445 = vmatpush2.msra.mxu0 0.0
    %446 = vmatprep.subr.mxu0 0.0
    %447 = vmatpush2.msra.mxu0 0.0
    %448 = vmatprep.subr.mxu0 0.0
    %449 = vmatpush2.msra.mxu0 0.0
    %450 = vmatprep.subr.mxu0 0.0
    %451 = vmatpush2.msra.mxu0 0.0
    %452 = vmatprep.subr.mxu0 0.0
    %453 = vmatpush2.msra.mxu0 0.0
    %454 = vmatprep.subr.mxu0 0.0
    %455 = vmatpush2.msra.mxu0 0.0
    %456 = vmatprep.subr.mxu0 0.0
    %457 = vmatpush2.msra.mxu0 0.0
    %458 = vmatprep.subr.mxu0 0.0
    %459 = vmatpush2.msra.mxu0 0.0
    %460 = vmatprep.subr.mxu0 0.0
    %461 = vmatpush2.msra.mxu0 0.0
    %462 = vmatprep.subr.mxu0 0.0
    %463 = vmatpush2.msra.mxu0 0.0
    %464 = vmatprep.subr.mxu0 0.0
    %465 = vmatpush2.msra.mxu0 0.0
    %466 = vmatprep.subr.mxu0 0.0
    %467 = vmatpush2.msra.mxu0 0.0
    %468 = vmatprep.subr.mxu0 0.0
    %469 = vmatpush2.msra.mxu0 0.0
    %470 = vmatprep.subr.mxu0 0.0
    %471 = vmatpush2.msra.mxu0 0.0
    %472 = vmatprep.subr.mxu0 0.0
    %473 = vmatpush2.msra.mxu0 0.0
    %474 = vmatprep.mubr.f32.mxu0 0.0
    %475 = vmatmul.mubr.f32.gmra.mxu0 %v233
    %v476 = vpop.f32.mrf.mxu0
    %v477 = vadd.f32 %v408, %v476
    %v478 = vpop.f32.mrf.mxu0
    %479 = vmatprep.mubr.f32.mxu0 0.0
    %480 = vmatmul.mubr.f32.gmra.mxu0 %v236
    %v481 = vpop.f32.mrf.mxu0
    %v482 = vadd.f32 %v408, %v481
    %v483 = vpop.f32.mrf.mxu0
    %484 = vdwg.mxu0
    %v485 = vmul.f32 %v305, %v216
    %v486 = vmul.f32 %v310, %v216
    %v488 = vsel %vm231, %v485, 0
    %v491 = vsel %vm231, %v486, 0
    %v494 = vsel %vm231, %v391, 0
    %v497 = vsel %vm231, %v396, 0
    %499 = vmatprep.subr.mxu0 0.0
    %500 = vmatpush1.xpose.msra.mxu0 0.0
    %501 = vmatprep.subr.mxu0 0.0
    %502 = vmatpush1.xpose.msra.mxu0 0.0
    %503 = vmatprep.subr.mxu0 0.0
    %504 = vmatpush1.xpose.msra.mxu0 0.0
    %505 = vmatprep.subr.mxu0 0.0
    %506 = vmatpush1.xpose.msra.mxu0 0.0
    %507 = vmatprep.subr.mxu0 0.0
    %508 = vmatpush1.xpose.msra.mxu0 0.0
    %509 = vmatprep.subr.mxu0 0.0
    %510 = vmatpush1.xpose.msra.mxu0 0.0
    %511 = vmatprep.subr.mxu0 0.0
    %512 = vmatpush1.xpose.msra.mxu0 0.0
    %513 = vmatprep.subr.mxu0 0.0
    %514 = vmatpush1.xpose.msra.mxu0 0.0
    %515 = vmatprep.subr.mxu0 0.0
    %516 = vmatpush1.xpose.msra.mxu0 0.0
    %517 = vmatprep.subr.mxu0 0.0
    %518 = vmatpush1.xpose.msra.mxu0 0.0
    %519 = vmatprep.subr.mxu0 0.0
    %520 = vmatpush1.xpose.msra.mxu0 0.0
    %521 = vmatprep.subr.mxu0 0.0
    %522 = vmatpush1.xpose.msra.mxu0 0.0
    %523 = vmatprep.subr.mxu0 0.0
    %524 = vmatpush1.xpose.msra.mxu0 0.0
    %525 = vmatprep.subr.mxu0 0.0
    %526 = vmatpush1.xpose.msra.mxu0 0.0
    %527 = vmatprep.subr.mxu0 0.0
    %528 = vmatpush1.xpose.msra.mxu0 %v497
    %529 = vmatprep.subr.mxu0 0.0
    %530 = vmatpush1.xpose.msra.mxu0 %v494
    %531 = vmatprep.subr.mxu0 0.0
    %532 = vmatpush2.xpose.msra.mxu0 0.0
    %533 = vmatprep.subr.mxu0 0.0
    %534 = vmatpush2.xpose.msra.mxu0 0.0
    %535 = vmatprep.subr.mxu0 0.0
    %536 = vmatpush2.xpose.msra.mxu0 0.0
    %537 = vmatprep.subr.mxu0 0.0
    %538 = vmatpush2.xpose.msra.mxu0 0.0
    %539 = vmatprep.subr.mxu0 0.0
    %540 = vmatpush2.xpose.msra.mxu0 0.0
    %541 = vmatprep.subr.mxu0 0.0
    %542 = vmatpush2.xpose.msra.mxu0 0.0
    %543 = vmatprep.subr.mxu0 0.0
    %544 = vmatpush2.xpose.msra.mxu0 0.0
    %545 = vmatprep.subr.mxu0 0.0
    %546 = vmatpush2.xpose.msra.mxu0 0.0
    %547 = vmatprep.subr.mxu0 0.0
    %548 = vmatpush2.xpose.msra.mxu0 0.0
    %549 = vmatprep.subr.mxu0 0.0
    %550 = vmatpush2.xpose.msra.mxu0 0.0
    %551 = vmatprep.subr.mxu0 0.0
    %552 = vmatpush2.xpose.msra.mxu0 0.0
    %553 = vmatprep.subr.mxu0 0.0
    %554 = vmatpush2.xpose.msra.mxu0 0.0
    %555 = vmatprep.subr.mxu0 0.0
    %556 = vmatpush2.xpose.msra.mxu0 0.0
    %557 = vmatprep.subr.mxu0 0.0
    %558 = vmatpush2.xpose.msra.mxu0 0.0
    %559 = vmatprep.subr.mxu0 0.0
    %560 = vmatpush2.xpose.msra.mxu0 0.0
    %561 = vmatprep.subr.mxu0 0.0
    %562 = vmatpush2.xpose.msra.mxu0 0.0
    %563 = vmatprep.mubr.f32.mxu0 0.0
    %564 = vmatmul.mubr.f32.gmra.mxu0 %v488
    %v565 = vpop.f32.mrf.mxu0
    %v566 = vadd.f32 %v194, %v565
    %v567 = vpop.f32.mrf.mxu0
    %568 = vmatprep.mubr.f32.mxu0 0.0
    %569 = vmatmul.mubr.f32.gmra.mxu0 %v491
    %v570 = vpop.f32.mrf.mxu0
    %v571 = vadd.f32 %v195, %v570
    %v572 = vpop.f32.mrf.mxu0
    %573 = vdwg.mxu0
    %vm574 = vcmask 130048
    %v575 = vsel %vm574, %v566, -inf
    %576 = vmax.xlane.f32.xlu0 %v575
    %v577 = vpop.xlane.xlu0 %576
    %v578 = vsel %vm574, %v571, -inf
    %579 = vmax.xlane.f32.xlu0 %v578
    %v580 = vpop.xlane.xlu0 %579
    %v581 = vsub.f32 %v566, %v577
    %v582 = vsub.f32 %v571, %v580
    %v583 = vmul.f32 %v581, 1.442695
    %v584 = vpow.pop %v583
    %v585 = vmul.f32 %v582, 1.442695
    %v586 = vpow.pop %v585
    %v587 = vsel %vm574, %v584, 0.0
    %588 = vadd.xlane.f32.xlu0 %v587
    %v589 = vpop.xlane.xlu0 %588
    %v590 = vsel %vm574, %v586, 0.0
    %591 = vadd.xlane.f32.xlu0 %v590
    %v592 = vpop.xlane.xlu0 %591
    %v593 = vrcp.pop %v589
    %v594 = vrcp.pop %v592
    %v595 = vmul.f32 %v584, %v593
    %v596 = vmul.f32 %v586, %v594
    %v597 = vmul.f32 %v477, %v200
    %v598 = vmul.f32 %v482, %v200
    %v599 = vmul.f32 %v305, %v217
    %v600 = vmul.f32 %v310, %v217
    %v602 = vsel %vm231, %v599, 0
    %v605 = vsel %vm231, %v600, 0
    %607 = vmatprep.subr.mxu0 0.0
    %608 = vmatpush1.xpose.msra.mxu0 0.0
    %609 = vmatprep.subr.mxu0 0.0
    %610 = vmatpush1.xpose.msra.mxu0 0.0
    %611 = vmatprep.subr.mxu0 0.0
    %612 = vmatpush1.xpose.msra.mxu0 0.0
    %613 = vmatprep.subr.mxu0 0.0
    %614 = vmatpush1.xpose.msra.mxu0 0.0
    %615 = vmatprep.subr.mxu0 0.0
    %616 = vmatpush1.xpose.msra.mxu0 0.0
    %617 = vmatprep.subr.mxu0 0.0
    %618 = vmatpush1.xpose.msra.mxu0 0.0
    %619 = vmatprep.subr.mxu0 0.0
    %620 = vmatpush1.xpose.msra.mxu0 0.0
    %621 = vmatprep.subr.mxu0 0.0
    %622 = vmatpush1.xpose.msra.mxu0 0.0
    %623 = vmatprep.subr.mxu0 0.0
    %624 = vmatpush1.xpose.msra.mxu0 0.0
    %625 = vmatprep.subr.mxu0 0.0
    %626 = vmatpush1.xpose.msra.mxu0 0.0
    %627 = vmatprep.subr.mxu0 0.0
    %628 = vmatpush1.xpose.msra.mxu0 0.0
    %629 = vmatprep.subr.mxu0 0.0
    %630 = vmatpush1.xpose.msra.mxu0 0.0
    %631 = vmatprep.subr.mxu0 0.0
    %632 = vmatpush1.xpose.msra.mxu0 0.0
    %633 = vmatprep.subr.mxu0 0.0
    %634 = vmatpush1.xpose.msra.mxu0 0.0
    %635 = vmatprep.subr.mxu0 0.0
    %636 = vmatpush1.xpose.msra.mxu0 %v497
    %637 = vmatprep.subr.mxu0 0.0
    %638 = vmatpush1.xpose.msra.mxu0 %v494
    %639 = vmatprep.subr.mxu0 0.0
    %640 = vmatpush2.xpose.msra.mxu0 0.0
    %641 = vmatprep.subr.mxu0 0.0
    %642 = vmatpush2.xpose.msra.mxu0 0.0
    %643 = vmatprep.subr.mxu0 0.0
    %644 = vmatpush2.xpose.msra.mxu0 0.0
    %645 = vmatprep.subr.mxu0 0.0
    %646 = vmatpush2.xpose.msra.mxu0 0.0
    %647 = vmatprep.subr.mxu0 0.0
    %648 = vmatpush2.xpose.msra.mxu0 0.0
    %649 = vmatprep.subr.mxu0 0.0
    %650 = vmatpush2.xpose.msra.mxu0 0.0
    %651 = vmatprep.subr.mxu0 0.0
    %652 = vmatpush2.xpose.msra.mxu0 0.0
    %653 = vmatprep.subr.mxu0 0.0
    %654 = vmatpush2.xpose.msra.mxu0 0.0
    %655 = vmatprep.subr.mxu0 0.0
    %656 = vmatpush2.xpose.msra.mxu0 0.0
    %657 = vmatprep.subr.mxu0 0.0
    %658 = vmatpush2.xpose.msra.mxu0 0.0
    %659 = vmatprep.subr.mxu0 0.0
    %660 = vmatpush2.xpose.msra.mxu0 0.0
    %661 = vmatprep.subr.mxu0 0.0
    %662 = vmatpush2.xpose.msra.mxu0 0.0
    %663 = vmatprep.subr.mxu0 0.0
    %664 = vmatpush2.xpose.msra.mxu0 0.0
    %665 = vmatprep.subr.mxu0 0.0
    %666 = vmatpush2.xpose.msra.mxu0 0.0
    %667 = vmatprep.subr.mxu0 0.0
    %668 = vmatpush2.xpose.msra.mxu0 0.0
    %669 = vmatprep.subr.mxu0 0.0
    %670 = vmatpush2.xpose.msra.mxu0 0.0
    %671 = vmatprep.mubr.f32.mxu0 0.0
    %672 = vmatmul.mubr.f32.gmra.mxu0 %v602
    %v673 = vpop.f32.mrf.mxu0
    %v674 = vadd.f32 %v194, %v673
    %v675 = vpop.f32.mrf.mxu0
    %676 = vmatprep.mubr.f32.mxu0 0.0
    %677 = vmatmul.mubr.f32.gmra.mxu0 %v605
    %v678 = vpop.f32.mrf.mxu0
    %v679 = vadd.f32 %v195, %v678
    %v680 = vpop.f32.mrf.mxu0
    %681 = vdwg.mxu0
    %v682 = vsel %vm574, %v674, -inf
    %683 = vmax.xlane.f32.xlu0 %v682
    %v684 = vpop.xlane.xlu0 %683
    %v685 = vsel %vm574, %v679, -inf
    %686 = vmax.xlane.f32.xlu0 %v685
    %v687 = vpop.xlane.xlu0 %686
    %v688 = vsub.f32 %v674, %v684
    %v689 = vsub.f32 %v679, %v687
    %v690 = vmul.f32 %v688, 1.442695
    %v691 = vpow.pop %v690
    %v692 = vmul.f32 %v689, 1.442695
    %v693 = vpow.pop %v692
    %v694 = vsel %vm574, %v691, 0.0
    %695 = vadd.xlane.f32.xlu0 %v694
    %v696 = vpop.xlane.xlu0 %695
    %v697 = vsel %vm574, %v693, 0.0
    %698 = vadd.xlane.f32.xlu0 %v697
    %v699 = vpop.xlane.xlu0 %698
    %v700 = vrcp.pop %v696
    %v701 = vrcp.pop %v699
    %v702 = vmul.f32 %v691, %v700
    %v703 = vmul.f32 %v693, %v701
    %v704 = vmul.f32 %v477, %v205
    %v705 = vmul.f32 %v482, %v205
    %v707 = vsel %vm574, %v702, 0
    %v710 = vsel %vm574, %v703, 0
    %712 = vmatprep.subr.mxu0 0.0
    %713 = vmatpush1.msra.mxu0 0.0
    %714 = vmatprep.subr.mxu0 0.0
    %715 = vmatpush1.msra.mxu0 0.0
    %716 = vmatprep.subr.mxu0 0.0
    %717 = vmatpush1.msra.mxu0 0.0
    %718 = vmatprep.subr.mxu0 0.0
    %719 = vmatpush1.msra.mxu0 0.0
    %720 = vmatprep.subr.mxu0 0.0
    %721 = vmatpush1.msra.mxu0 0.0
    %722 = vmatprep.subr.mxu0 0.0
    %723 = vmatpush1.msra.mxu0 0.0
    %724 = vmatprep.subr.mxu0 0.0
    %725 = vmatpush1.msra.mxu0 0.0
    %726 = vmatprep.subr.mxu0 0.0
    %727 = vmatpush1.msra.mxu0 0.0
    %728 = vmatprep.subr.mxu0 0.0
    %729 = vmatpush1.msra.mxu0 0.0
    %730 = vmatprep.subr.mxu0 0.0
    %731 = vmatpush1.msra.mxu0 0.0
    %732 = vmatprep.subr.mxu0 0.0
    %733 = vmatpush1.msra.mxu0 0.0
    %734 = vmatprep.subr.mxu0 0.0
    %735 = vmatpush1.msra.mxu0 0.0
    %736 = vmatprep.subr.mxu0 0.0
    %737 = vmatpush1.msra.mxu0 0.0
    %738 = vmatprep.subr.mxu0 0.0
    %739 = vmatpush1.msra.mxu0 0.0
    %740 = vmatprep.subr.mxu0 0.0
    %741 = vmatpush1.msra.mxu0 %v705
    %742 = vmatprep.subr.mxu0 0.0
    %743 = vmatpush1.msra.mxu0 %v704
    %744 = vmatprep.subr.mxu0 0.0
    %745 = vmatpush2.msra.mxu0 0.0
    %746 = vmatprep.subr.mxu0 0.0
    %747 = vmatpush2.msra.mxu0 0.0
    %748 = vmatprep.subr.mxu0 0.0
    %749 = vmatpush2.msra.mxu0 0.0
    %750 = vmatprep.subr.mxu0 0.0
    %751 = vmatpush2.msra.mxu0 0.0
    %752 = vmatprep.subr.mxu0 0.0
    %753 = vmatpush2.msra.mxu0 0.0
    %754 = vmatprep.subr.mxu0 0.0
    %755 = vmatpush2.msra.mxu0 0.0
    %756 = vmatprep.subr.mxu0 0.0
    %757 = vmatpush2.msra.mxu0 0.0
    %758 = vmatprep.subr.mxu0 0.0
    %759 = vmatpush2.msra.mxu0 0.0
    %760 = vmatprep.subr.mxu0 0.0
    %761 = vmatpush2.msra.mxu0 0.0
    %762 = vmatprep.subr.mxu0 0.0
    %763 = vmatpush2.msra.mxu0 0.0
    %764 = vmatprep.subr.mxu0 0.0
    %765 = vmatpush2.msra.mxu0 0.0
    %766 = vmatprep.subr.mxu0 0.0
    %767 = vmatpush2.msra.mxu0 0.0
    %768 = vmatprep.subr.mxu0 0.0
    %769 = vmatpush2.msra.mxu0 0.0
    %770 = vmatprep.subr.mxu0 0.0
    %771 = vmatpush2.msra.mxu0 0.0
    %772 = vmatprep.subr.mxu0 0.0
    %773 = vmatpush2.msra.mxu0 0.0
    %774 = vmatprep.subr.mxu0 0.0
    %775 = vmatpush2.msra.mxu0 0.0
    %776 = vmatprep.mubr.f32.mxu0 0.0
    %777 = vmatmul.mubr.f32.gmra.mxu0 %v707
    %v778 = vpop.f32.mrf.mxu0
    %v779 = vadd.f32 0.0, %v778
    %v780 = vpop.f32.mrf.mxu0
    %781 = vmatprep.mubr.f32.mxu0 0.0
    %782 = vmatmul.mubr.f32.gmra.mxu0 %v710
    %v783 = vpop.f32.mrf.mxu0
    %v784 = vadd.f32 0.0, %v783
    %v785 = vpop.f32.mrf.mxu0
    %786 = vdwg.mxu0
    %v788 = vsel %vm574, %v595, 0
    %v791 = vsel %vm574, %v596, 0
    %793 = vmatprep.subr.mxu0 0.0
    %794 = vmatpush1.msra.mxu0 0.0
    %795 = vmatprep.subr.mxu0 0.0
    %796 = vmatpush1.msra.mxu0 0.0
    %797 = vmatprep.subr.mxu0 0.0
    %798 = vmatpush1.msra.mxu0 0.0
    %799 = vmatprep.subr.mxu0 0.0
    %800 = vmatpush1.msra.mxu0 0.0
    %801 = vmatprep.subr.mxu0 0.0
    %802 = vmatpush1.msra.mxu0 0.0
    %803 = vmatprep.subr.mxu0 0.0
    %804 = vmatpush1.msra.mxu0 0.0
    %805 = vmatprep.subr.mxu0 0.0
    %806 = vmatpush1.msra.mxu0 0.0
    %807 = vmatprep.subr.mxu0 0.0
    %808 = vmatpush1.msra.mxu0 0.0
    %809 = vmatprep.subr.mxu0 0.0
    %810 = vmatpush1.msra.mxu0 0.0
    %811 = vmatprep.subr.mxu0 0.0
    %812 = vmatpush1.msra.mxu0 0.0
    %813 = vmatprep.subr.mxu0 0.0
    %814 = vmatpush1.msra.mxu0 0.0
    %815 = vmatprep.subr.mxu0 0.0
    %816 = vmatpush1.msra.mxu0 0.0
    %817 = vmatprep.subr.mxu0 0.0
    %818 = vmatpush1.msra.mxu0 0.0
    %819 = vmatprep.subr.mxu0 0.0
    %820 = vmatpush1.msra.mxu0 0.0
    %821 = vmatprep.subr.mxu0 0.0
    %822 = vmatpush1.msra.mxu0 %v598
    %823 = vmatprep.subr.mxu0 0.0
    %824 = vmatpush1.msra.mxu0 %v597
    %825 = vmatprep.subr.mxu0 0.0
    %826 = vmatpush2.msra.mxu0 0.0
    %827 = vmatprep.subr.mxu0 0.0
    %828 = vmatpush2.msra.mxu0 0.0
    %829 = vmatprep.subr.mxu0 0.0
    %830 = vmatpush2.msra.mxu0 0.0
    %831 = vmatprep.subr.mxu0 0.0
    %832 = vmatpush2.msra.mxu0 0.0
    %833 = vmatprep.subr.mxu0 0.0
    %834 = vmatpush2.msra.mxu0 0.0
    %835 = vmatprep.subr.mxu0 0.0
    %836 = vmatpush2.msra.mxu0 0.0
    %837 = vmatprep.subr.mxu0 0.0
    %838 = vmatpush2.msra.mxu0 0.0
    %839 = vmatprep.subr.mxu0 0.0
    %840 = vmatpush2.msra.mxu0 0.0
    %841 = vmatprep.subr.mxu0 0.0
    %842 = vmatpush2.msra.mxu0 0.0
    %843 = vmatprep.subr.mxu0 0.0
    %844 = vmatpush2.msra.mxu0 0.0
    %845 = vmatprep.subr.mxu0 0.0
    %846 = vmatpush2.msra.mxu0 0.0
    %847 = vmatprep.subr.mxu0 0.0
    %848 = vmatpush2.msra.mxu0 0.0
    %849 = vmatprep.subr.mxu0 0.0
    %850 = vmatpush2.msra.mxu0 0.0
    %851 = vmatprep.subr.mxu0 0.0
    %852 = vmatpush2.msra.mxu0 0.0
    %853 = vmatprep.subr.mxu0 0.0
    %854 = vmatpush2.msra.mxu0 0.0
    %855 = vmatprep.subr.mxu0 0.0
    %856 = vmatpush2.msra.mxu0 0.0
    %857 = vmatprep.mubr.f32.mxu0 0.0
    %858 = vmatmul.mubr.f32.gmra.mxu0 %v788
    %v859 = vpop.f32.mrf.mxu0
    %v860 = vadd.f32 %v779, %v859
    %v861 = vpop.f32.mrf.mxu0
    %862 = vmatprep.mubr.f32.mxu0 0.0
    %863 = vmatmul.mubr.f32.gmra.mxu0 %v791
    %v864 = vpop.f32.mrf.mxu0
    %v865 = vadd.f32 %v784, %v864
    %v866 = vpop.f32.mrf.mxu0
    %867 = vdwg.mxu0
    %v868 = vmul.f32 %v305, %v218
    %v869 = vmul.f32 %v310, %v218
    %v871 = vsel %vm231, %v868, 0
    %v874 = vsel %vm231, %v869, 0
    %876 = vmatprep.subr.mxu0 0.0
    %877 = vmatpush1.xpose.msra.mxu0 0.0
    %878 = vmatprep.subr.mxu0 0.0
    %879 = vmatpush1.xpose.msra.mxu0 0.0
    %880 = vmatprep.subr.mxu0 0.0
    %881 = vmatpush1.xpose.msra.mxu0 0.0
    %882 = vmatprep.subr.mxu0 0.0
    %883 = vmatpush1.xpose.msra.mxu0 0.0
    %884 = vmatprep.subr.mxu0 0.0
    %885 = vmatpush1.xpose.msra.mxu0 0.0
    %886 = vmatprep.subr.mxu0 0.0
    %887 = vmatpush1.xpose.msra.mxu0 0.0
    %888 = vmatprep.subr.mxu0 0.0
    %889 = vmatpush1.xpose.msra.mxu0 0.0
    %890 = vmatprep.subr.mxu0 0.0
    %891 = vmatpush1.xpose.msra.mxu0 0.0
    %892 = vmatprep.subr.mxu0 0.0
    %893 = vmatpush1.xpose.msra.mxu0 0.0
    %894 = vmatprep.subr.mxu0 0.0
    %895 = vmatpush1.xpose.msra.mxu0 0.0
    %896 = vmatprep.subr.mxu0 0.0
    %897 = vmatpush1.xpose.msra.mxu0 0.0
    %898 = vmatprep.subr.mxu0 0.0
    %899 = vmatpush1.xpose.msra.mxu0 0.0
    %900 = vmatprep.subr.mxu0 0.0
    %901 = vmatpush1.xpose.msra.mxu0 0.0
    %902 = vmatprep.subr.mxu0 0.0
    %903 = vmatpush1.xpose.msra.mxu0 0.0
    %904 = vmatprep.subr.mxu0 0.0
    %905 = vmatpush1.xpose.msra.mxu0 %v497
    %906 = vmatprep.subr.mxu0 0.0
    %907 = vmatpush1.xpose.msra.mxu0 %v494
    %908 = vmatprep.subr.mxu0 0.0
    %909 = vmatpush2.xpose.msra.mxu0 0.0
    %910 = vmatprep.subr.mxu0 0.0
    %911 = vmatpush2.xpose.msra.mxu0 0.0
    %912 = vmatprep.subr.mxu0 0.0
    %913 = vmatpush2.xpose.msra.mxu0 0.0
    %914 = vmatprep.subr.mxu0 0.0
    %915 = vmatpush2.xpose.msra.mxu0 0.0
    %916 = vmatprep.subr.mxu0 0.0
    %917 = vmatpush2.xpose.msra.mxu0 0.0
    %918 = vmatprep.subr.mxu0 0.0
    %919 = vmatpush2.xpose.msra.mxu0 0.0
    %920 = vmatprep.subr.mxu0 0.0
    %921 = vmatpush2.xpose.msra.mxu0 0.0
    %922 = vmatprep.subr.mxu0 0.0
    %923 = vmatpush2.xpose.msra.mxu0 0.0
    %924 = vmatprep.subr.mxu0 0.0
    %925 = vmatpush2.xpose.msra.mxu0 0.0
    %926 = vmatprep.subr.mxu0 0.0
    %927 = vmatpush2.xpose.msra.mxu0 0.0
    %928 = vmatprep.subr.mxu0 0.0
    %929 = vmatpush2.xpose.msra.mxu0 0.0
    %930 = vmatprep.subr.mxu0 0.0
    %931 = vmatpush2.xpose.msra.mxu0 0.0
    %932 = vmatprep.subr.mxu0 0.0
    %933 = vmatpush2.xpose.msra.mxu0 0.0
    %934 = vmatprep.subr.mxu0 0.0
    %935 = vmatpush2.xpose.msra.mxu0 0.0
    %936 = vmatprep.subr.mxu0 0.0
    %937 = vmatpush2.xpose.msra.mxu0 0.0
    %938 = vmatprep.subr.mxu0 0.0
    %939 = vmatpush2.xpose.msra.mxu0 0.0
    %940 = vmatprep.mubr.f32.mxu0 0.0
    %941 = vmatmul.mubr.f32.gmra.mxu0 %v871
    %v942 = vpop.f32.mrf.mxu0
    %v943 = vadd.f32 %v194, %v942
    %v944 = vpop.f32.mrf.mxu0
    %945 = vmatprep.mubr.f32.mxu0 0.0
    %946 = vmatmul.mubr.f32.gmra.mxu0 %v874
    %v947 = vpop.f32.mrf.mxu0
    %v948 = vadd.f32 %v195, %v947
    %v949 = vpop.f32.mrf.mxu0
    %950 = vdwg.mxu0
    %v951 = vsel %vm574, %v943, -inf
    %952 = vmax.xlane.f32.xlu0 %v951
    %v953 = vpop.xlane.xlu0 %952
    %v954 = vsel %vm574, %v948, -inf
    %955 = vmax.xlane.f32.xlu0 %v954
    %v956 = vpop.xlane.xlu0 %955
    %v957 = vsub.f32 %v943, %v953
    %v958 = vsub.f32 %v948, %v956
    %v959 = vmul.f32 %v957, 1.442695
    %v960 = vpow.pop %v959
    %v961 = vmul.f32 %v958, 1.442695
    %v962 = vpow.pop %v961
    %v963 = vsel %vm574, %v960, 0.0
    %964 = vadd.xlane.f32.xlu0 %v963
    %v965 = vpop.xlane.xlu0 %964
    %v966 = vsel %vm574, %v962, 0.0
    %967 = vadd.xlane.f32.xlu0 %v966
    %v968 = vpop.xlane.xlu0 %967
    %v969 = vrcp.pop %v965
    %v970 = vrcp.pop %v968
    %v971 = vmul.f32 %v960, %v969
    %v972 = vmul.f32 %v962, %v970
    %v973 = vmul.f32 %v477, %v210
    %v974 = vmul.f32 %v482, %v210
    %v976 = vsel %vm574, %v971, 0
    %v979 = vsel %vm574, %v972, 0
    %981 = vmatprep.subr.mxu0 0.0
    %982 = vmatpush1.msra.mxu0 0.0
    %983 = vmatprep.subr.mxu0 0.0
    %984 = vmatpush1.msra.mxu0 0.0
    %985 = vmatprep.subr.mxu0 0.0
    %986 = vmatpush1.msra.mxu0 0.0
    %987 = vmatprep.subr.mxu0 0.0
    %988 = vmatpush1.msra.mxu0 0.0
    %989 = vmatprep.subr.mxu0 0.0
    %990 = vmatpush1.msra.mxu0 0.0
    %991 = vmatprep.subr.mxu0 0.0
    %992 = vmatpush1.msra.mxu0 0.0
    %993 = vmatprep.subr.mxu0 0.0
    %994 = vmatpush1.msra.mxu0 0.0
    %995 = vmatprep.subr.mxu0 0.0
    %996 = vmatpush1.msra.mxu0 0.0
    %997 = vmatprep.subr.mxu0 0.0
    %998 = vmatpush1.msra.mxu0 0.0
    %999 = vmatprep.subr.mxu0 0.0
    %1000 = vmatpush1.msra.mxu0 0.0
    %1001 = vmatprep.subr.mxu0 0.0
    %1002 = vmatpush1.msra.mxu0 0.0
    %1003 = vmatprep.subr.mxu0 0.0
    %1004 = vmatpush1.msra.mxu0 0.0
    %1005 = vmatprep.subr.mxu0 0.0
    %1006 = vmatpush1.msra.mxu0 0.0
    %1007 = vmatprep.subr.mxu0 0.0
    %1008 = vmatpush1.msra.mxu0 0.0
    %1009 = vmatprep.subr.mxu0 0.0
    %1010 = vmatpush1.msra.mxu0 %v974
    %1011 = vmatprep.subr.mxu0 0.0
    %1012 = vmatpush1.msra.mxu0 %v973
    %1013 = vmatprep.subr.mxu0 0.0
    %1014 = vmatpush2.msra.mxu0 0.0
    %1015 = vmatprep.subr.mxu0 0.0
    %1016 = vmatpush2.msra.mxu0 0.0
    %1017 = vmatprep.subr.mxu0 0.0
    %1018 = vmatpush2.msra.mxu0 0.0
    %1019 = vmatprep.subr.mxu0 0.0
    %1020 = vmatpush2.msra.mxu0 0.0
    %1021 = vmatprep.subr.mxu0 0.0
    %1022 = vmatpush2.msra.mxu0 0.0
    %1023 = vmatprep.subr.mxu0 0.0
    %1024 = vmatpush2.msra.mxu0 0.0
    %1025 = vmatprep.subr.mxu0 0.0
    %1026 = vmatpush2.msra.mxu0 0.0
    %1027 = vmatprep.subr.mxu0 0.0
    %1028 = vmatpush2.msra.mxu0 0.0
    %1029 = vmatprep.subr.mxu0 0.0
    %1030 = vmatpush2.msra.mxu0 0.0
    %1031 = vmatprep.subr.mxu0 0.0
    %1032 = vmatpush2.msra.mxu0 0.0
    %1033 = vmatprep.subr.mxu0 0.0
    %1034 = vmatpush2.msra.mxu0 0.0
    %1035 = vmatprep.subr.mxu0 0.0
    %1036 = vmatpush2.msra.mxu0 0.0
    %1037 = vmatprep.subr.mxu0 0.0
    %1038 = vmatpush2.msra.mxu0 0.0
    %1039 = vmatprep.subr.mxu0 0.0
    %1040 = vmatpush2.msra.mxu0 0.0
    %1041 = vmatprep.subr.mxu0 0.0
    %1042 = vmatpush2.msra.mxu0 0.0
    %1043 = vmatprep.subr.mxu0 0.0
    %1044 = vmatpush2.msra.mxu0 0.0
    %1045 = vmatprep.mubr.f32.mxu0 0.0
    %1046 = vmatmul.mubr.f32.gmra.mxu0 %v976
    %v1047 = vpop.f32.mrf.mxu0
    %v1048 = vadd.f32 0.0, %v1047
    %v1049 = vpop.f32.mrf.mxu0
    %1050 = vmatprep.mubr.f32.mxu0 0.0
    %1051 = vmatmul.mubr.f32.gmra.mxu0 %v979
    %v1052 = vpop.f32.mrf.mxu0
    %v1053 = vadd.f32 0.0, %v1052
    %v1054 = vpop.f32.mrf.mxu0
    %1055 = vdwg.mxu0
    %v1056 = vadd.f32 %v860, %v1048
    %v1057 = vadd.f32 %v865, %v1053
    %v1058 = vmul.f32 %v305, %v219
    %v1059 = vmul.f32 %v310, %v219
    %v1061 = vsel %vm231, %v1058, 0
    %v1064 = vsel %vm231, %v1059, 0
    %1066 = vmatprep.subr.mxu0 0.0
    %1067 = vmatpush1.xpose.msra.mxu0 0.0
    %1068 = vmatprep.subr.mxu0 0.0
    %1069 = vmatpush1.xpose.msra.mxu0 0.0
    %1070 = vmatprep.subr.mxu0 0.0
    %1071 = vmatpush1.xpose.msra.mxu0 0.0
    %1072 = vmatprep.subr.mxu0 0.0
    %1073 = vmatpush1.xpose.msra.mxu0 0.0
    %1074 = vmatprep.subr.mxu0 0.0
    %1075 = vmatpush1.xpose.msra.mxu0 0.0
    %1076 = vmatprep.subr.mxu0 0.0
    %1077 = vmatpush1.xpose.msra.mxu0 0.0
    %1078 = vmatprep.subr.mxu0 0.0
    %1079 = vmatpush1.xpose.msra.mxu0 0.0
    %1080 = vmatprep.subr.mxu0 0.0
    %1081 = vmatpush1.xpose.msra.mxu0 0.0
    %1082 = vmatprep.subr.mxu0 0.0
    %1083 = vmatpush1.xpose.msra.mxu0 0.0
    %1084 = vmatprep.subr.mxu0 0.0
    %1085 = vmatpush1.xpose.msra.mxu0 0.0
    %1086 = vmatprep.subr.mxu0 0.0
    %1087 = vmatpush1.xpose.msra.mxu0 0.0
    %1088 = vmatprep.subr.mxu0 0.0
    %1089 = vmatpush1.xpose.msra.mxu0 0.0
    %1090 = vmatprep.subr.mxu0 0.0
    %1091 = vmatpush1.xpose.msra.mxu0 0.0
    %1092 = vmatprep.subr.mxu0 0.0
    %1093 = vmatpush1.xpose.msra.mxu0 0.0
    %1094 = vmatprep.subr.mxu0 0.0
    %1095 = vmatpush1.xpose.msra.mxu0 %v497
    %1096 = vmatprep.subr.mxu0 0.0
    %1097 = vmatpush1.xpose.msra.mxu0 %v494
    %1098 = vmatprep.subr.mxu0 0.0
    %1099 = vmatpush2.xpose.msra.mxu0 0.0
    %1100 = vmatprep.subr.mxu0 0.0
    %1101 = vmatpush2.xpose.msra.mxu0 0.0
    %1102 = vmatprep.subr.mxu0 0.0
    %1103 = vmatpush2.xpose.msra.mxu0 0.0
    %1104 = vmatprep.subr.mxu0 0.0
    %1105 = vmatpush2.xpose.msra.mxu0 0.0
    %1106 = vmatprep.subr.mxu0 0.0
    %1107 = vmatpush2.xpose.msra.mxu0 0.0
    %1108 = vmatprep.subr.mxu0 0.0
    %1109 = vmatpush2.xpose.msra.mxu0 0.0
    %1110 = vmatprep.subr.mxu0 0.0
    %1111 = vmatpush2.xpose.msra.mxu0 0.0
    %1112 = vmatprep.subr.mxu0 0.0
    %1113 = vmatpush2.xpose.msra.mxu0 0.0
    %1114 = vmatprep.subr.mxu0 0.0
    %1115 = vmatpush2.xpose.msra.mxu0 0.0
    %1116 = vmatprep.subr.mxu0 0.0
    %1117 = vmatpush2.xpose.msra.mxu0 0.0
    %1118 = vmatprep.subr.mxu0 0.0
    %1119 = vmatpush2.xpose.msra.mxu0 0.0
    %1120 = vmatprep.subr.mxu0 0.0
    %1121 = vmatpush2.xpose.msra.mxu0 0.0
    %1122 = vmatprep.subr.mxu0 0.0
    %1123 = vmatpush2.xpose.msra.mxu0 0.0
    %1124 = vmatprep.subr.mxu0 0.0
    %1125 = vmatpush2.xpose.msra.mxu0 0.0
    %1126 = vmatprep.subr.mxu0 0.0
    %1127 = vmatpush2.xpose.msra.mxu0 0.0
    %1128 = vmatprep.subr.mxu0 0.0
    %1129 = vmatpush2.xpose.msra.mxu0 0.0
    %1130 = vmatprep.mubr.f32.mxu0 0.0
    %1131 = vmatmul.mubr.f32.gmra.mxu0 %v1061
    %v1132 = vpop.f32.mrf.mxu0
    %v1133 = vadd.f32 %v194, %v1132
    %v1134 = vpop.f32.mrf.mxu0
    %1135 = vmatprep.mubr.f32.mxu0 0.0
    %1136 = vmatmul.mubr.f32.gmra.mxu0 %v1064
    %v1137 = vpop.f32.mrf.mxu0
    %v1138 = vadd.f32 %v195, %v1137
    %v1139 = vpop.f32.mrf.mxu0
    %1140 = vdwg.mxu0
    %v1141 = vsel %vm574, %v1133, -inf
    %1142 = vmax.xlane.f32.xlu0 %v1141
    %v1143 = vpop.xlane.xlu0 %1142
    %v1144 = vsel %vm574, %v1138, -inf
    %1145 = vmax.xlane.f32.xlu0 %v1144
    %v1146 = vpop.xlane.xlu0 %1145
    %v1147 = vsub.f32 %v1133, %v1143
    %v1148 = vsub.f32 %v1138, %v1146
    %v1149 = vmul.f32 %v1147, 1.442695
    %v1150 = vpow.pop %v1149
    %v1151 = vmul.f32 %v1148, 1.442695
    %v1152 = vpow.pop %v1151
    %v1153 = vsel %vm574, %v1150, 0.0
    %1154 = vadd.xlane.f32.xlu0 %v1153
    %v1155 = vpop.xlane.xlu0 %1154
    %v1156 = vsel %vm574, %v1152, 0.0
    %1157 = vadd.xlane.f32.xlu0 %v1156
    %v1158 = vpop.xlane.xlu0 %1157
    %v1159 = vrcp.pop %v1155
    %v1160 = vrcp.pop %v1158
    %v1161 = vmul.f32 %v1150, %v1159
    %v1162 = vmul.f32 %v1152, %v1160
    %v1163 = vmul.f32 %v477, %v215
    %v1164 = vmul.f32 %v482, %v215
    %v1166 = vsel %vm574, %v1161, 0
    %v1169 = vsel %vm574, %v1162, 0
    %1171 = vmatprep.subr.mxu0 0.0
    %1172 = vmatpush1.msra.mxu0 0.0
    %1173 = vmatprep.subr.mxu0 0.0
    %1174 = vmatpush1.msra.mxu0 0.0
    %1175 = vmatprep.subr.mxu0 0.0
    %1176 = vmatpush1.msra.mxu0 0.0
    %1177 = vmatprep.subr.mxu0 0.0
    %1178 = vmatpush1.msra.mxu0 0.0
    %1179 = vmatprep.subr.mxu0 0.0
    %1180 = vmatpush1.msra.mxu0 0.0
    %1181 = vmatprep.subr.mxu0 0.0
    %1182 = vmatpush1.msra.mxu0 0.0
    %1183 = vmatprep.subr.mxu0 0.0
    %1184 = vmatpush1.msra.mxu0 0.0
    %1185 = vmatprep.subr.mxu0 0.0
    %1186 = vmatpush1.msra.mxu0 0.0
    %1187 = vmatprep.subr.mxu0 0.0
    %1188 = vmatpush1.msra.mxu0 0.0
    %1189 = vmatprep.subr.mxu0 0.0
    %1190 = vmatpush1.msra.mxu0 0.0
    %1191 = vmatprep.subr.mxu0 0.0
    %1192 = vmatpush1.msra.mxu0 0.0
    %1193 = vmatprep.subr.mxu0 0.0
    %1194 = vmatpush1.msra.mxu0 0.0
    %1195 = vmatprep.subr.mxu0 0.0
    %1196 = vmatpush1.msra.mxu0 0.0
    %1197 = vmatprep.subr.mxu0 0.0
    %1198 = vmatpush1.msra.mxu0 0.0
    %1199 = vmatprep.subr.mxu0 0.0
    %1200 = vmatpush1.msra.mxu0 %v1164
    %1201 = vmatprep.subr.mxu0 0.0
    %1202 = vmatpush1.msra.mxu0 %v1163
    %1203 = vmatprep.subr.mxu0 0.0
    %1204 = vmatpush2.msra.mxu0 0.0
    %1205 = vmatprep.subr.mxu0 0.0
    %1206 = vmatpush2.msra.mxu0 0.0
    %1207 = vmatprep.subr.mxu0 0.0
    %1208 = vmatpush2.msra.mxu0 0.0
    %1209 = vmatprep.subr.mxu0 0.0
    %1210 = vmatpush2.msra.mxu0 0.0
    %1211 = vmatprep.subr.mxu0 0.0
    %1212 = vmatpush2.msra.mxu0 0.0
    %1213 = vmatprep.subr.mxu0 0.0
    %1214 = vmatpush2.msra.mxu0 0.0
    %1215 = vmatprep.subr.mxu0 0.0
    %1216 = vmatpush2.msra.mxu0 0.0
    %1217 = vmatprep.subr.mxu0 0.0
    %1218 = vmatpush2.msra.mxu0 0.0
    %1219 = vmatprep.subr.mxu0 0.0
    %1220 = vmatpush2.msra.mxu0 0.0
    %1221 = vmatprep.subr.mxu0 0.0
    %1222 = vmatpush2.msra.mxu0 0.0
    %1223 = vmatprep.subr.mxu0 0.0
    %1224 = vmatpush2.msra.mxu0 0.0
    %1225 = vmatprep.subr.mxu0 0.0
    %1226 = vmatpush2.msra.mxu0 0.0
    %1227 = vmatprep.subr.mxu0 0.0
    %1228 = vmatpush2.msra.mxu0 0.0
    %1229 = vmatprep.subr.mxu0 0.0
    %1230 = vmatpush2.msra.mxu0 0.0
    %1231 = vmatprep.subr.mxu0 0.0
    %1232 = vmatpush2.msra.mxu0 0.0
    %1233 = vmatprep.subr.mxu0 0.0
    %1234 = vmatpush2.msra.mxu0 0.0
    %1235 = vmatprep.mubr.f32.mxu0 0.0
    %1236 = vmatmul.mubr.f32.gmra.mxu0 %v1166
    %v1237 = vpop.f32.mrf.mxu0
    %v1238 = vadd.f32 0.0, %v1237
    %v1239 = vpop.f32.mrf.mxu0
    %1240 = vmatprep.mubr.f32.mxu0 0.0
    %1241 = vmatmul.mubr.f32.gmra.mxu0 %v1169
    %v1242 = vpop.f32.mrf.mxu0
    %v1243 = vadd.f32 0.0, %v1242
    %v1244 = vpop.f32.mrf.mxu0
    %1245 = vdwg.mxu0
    %v1246 = vadd.f32 %v1056, %v1238
    %v1247 = vadd.f32 %v1057, %v1243
    %v1248 = vld [vmem:[%s10] sm:$0xff]
    %v1249 = vld [vmem:[%s10 + $0x8] sm:$0xff]
    %v1250 = vld [vmem:[%s10 + $0x10] sm:$0xff]
    %v1251 = vld [vmem:[%s10 + $0x18] sm:$0xff]
    %v1252 = vld [vmem:[%s11] sm:$0x1]
    %v1254 = vlaneseq
    %v1255 = vshrl.u32 %v1254, 7
    %v1256 = vsub.s32 0, %v1255
    %v1257 = vrot.slane %v1252, %v1256
    %v1260 = vsel %vm231, %v1246, 0
    %v1263 = vsel %vm231, %v1247, 0
    %1265 = vmatprep.subr.mxu0 0.0
    %1266 = vmatpush1.msra.mxu0 0.0
    %1267 = vmatprep.subr.mxu0 0.0
    %1268 = vmatpush1.msra.mxu0 0.0
    %1269 = vmatprep.subr.mxu0 0.0
    %1270 = vmatpush1.msra.mxu0 0.0
    %1271 = vmatprep.subr.mxu0 0.0
    %1272 = vmatpush1.msra.mxu0 0.0
    %1273 = vmatprep.subr.mxu0 0.0
    %1274 = vmatpush1.msra.mxu0 0.0
    %1275 = vmatprep.subr.mxu0 0.0
    %1276 = vmatpush1.msra.mxu0 0.0
    %1277 = vmatprep.subr.mxu0 0.0
    %1278 = vmatpush1.msra.mxu0 0.0
    %1279 = vmatprep.subr.mxu0 0.0
    %1280 = vmatpush1.msra.mxu0 0.0
    %1281 = vmatprep.subr.mxu0 0.0
    %1282 = vmatpush1.msra.mxu0 0.0
    %1283 = vmatprep.subr.mxu0 0.0
    %1284 = vmatpush1.msra.mxu0 0.0
    %1285 = vmatprep.subr.mxu0 0.0
    %1286 = vmatpush1.msra.mxu0 0.0
    %1287 = vmatprep.subr.mxu0 0.0
    %1288 = vmatpush1.msra.mxu0 0.0
    %1289 = vmatprep.subr.mxu0 0.0
    %1290 = vmatpush1.msra.mxu0 %v1251
    %1291 = vmatprep.subr.mxu0 0.0
    %1292 = vmatpush1.msra.mxu0 %v1250
    %1293 = vmatprep.subr.mxu0 0.0
    %1294 = vmatpush1.msra.mxu0 %v1249
    %1295 = vmatprep.subr.mxu0 0.0
    %1296 = vmatpush1.msra.mxu0 %v1248
    %1297 = vmatprep.subr.mxu0 0.0
    %1298 = vmatpush2.msra.mxu0 0.0
    %1299 = vmatprep.subr.mxu0 0.0
    %1300 = vmatpush2.msra.mxu0 0.0
    %1301 = vmatprep.subr.mxu0 0.0
    %1302 = vmatpush2.msra.mxu0 0.0
    %1303 = vmatprep.subr.mxu0 0.0
    %1304 = vmatpush2.msra.mxu0 0.0
    %1305 = vmatprep.subr.mxu0 0.0
    %1306 = vmatpush2.msra.mxu0 0.0
    %1307 = vmatprep.subr.mxu0 0.0
    %1308 = vmatpush2.msra.mxu0 0.0
    %1309 = vmatprep.subr.mxu0 0.0
    %1310 = vmatpush2.msra.mxu0 0.0
    %1311 = vmatprep.subr.mxu0 0.0
    %1312 = vmatpush2.msra.mxu0 0.0
    %1313 = vmatprep.subr.mxu0 0.0
    %1314 = vmatpush2.msra.mxu0 0.0
    %1315 = vmatprep.subr.mxu0 0.0
    %1316 = vmatpush2.msra.mxu0 0.0
    %1317 = vmatprep.subr.mxu0 0.0
    %1318 = vmatpush2.msra.mxu0 0.0
    %1319 = vmatprep.subr.mxu0 0.0
    %1320 = vmatpush2.msra.mxu0 0.0
    %1321 = vmatprep.subr.mxu0 0.0
    %1322 = vmatpush2.msra.mxu0 0.0
    %1323 = vmatprep.subr.mxu0 0.0
    %1324 = vmatpush2.msra.mxu0 0.0
    %1325 = vmatprep.subr.mxu0 0.0
    %1326 = vmatpush2.msra.mxu0 0.0
    %1327 = vmatprep.subr.mxu0 0.0
    %1328 = vmatpush2.msra.mxu0 0.0
    %1329 = vmatprep.mubr.f32.mxu0 0.0
    %1330 = vmatmul.mubr.f32.gmra.mxu0 %v1260
    %v1331 = vpop.f32.mrf.mxu0
    %v1332 = vadd.f32 %v1257, %v1331
    %v1333 = vpop.f32.mrf.mxu0
    %1334 = vmatprep.mubr.f32.mxu0 0.0
    %1335 = vmatmul.mubr.f32.gmra.mxu0 %v1263
    %v1336 = vpop.f32.mrf.mxu0
    %v1337 = vadd.f32 %v1257, %v1336
    %v1338 = vpop.f32.mrf.mxu0
    %1339 = vdwg.mxu0
    %v1340 = vadd.f32 %v1332, %v186
    %v1341 = vadd.f32 %v1337, %v191
    %v1342 = vld [vmem:[%s12] sm:$0x1]
    %v1343 = vld [vmem:[%s13] sm:$0x1]
    %v1344 = vsel %vm231, %v1340, 0.0
    %1345 = vadd.xlane.f32.xlu0 %v1344
    %v1346 = vpop.xlane.xlu0 %1345
    %v1347 = vsel %vm231, %v1341, 0.0
    %1348 = vadd.xlane.f32.xlu0 %v1347
    %v1349 = vpop.xlane.xlu0 %1348
    %v1350 = vrcp.pop 32.0
    %v1351 = vmul.f32 %v1346, %v1350
    %v1352 = vmul.f32 %v1349, %v1350
    %v1353 = vsub.f32 %v1340, %v1351
    %v1354 = vsub.f32 %v1341, %v1352
    %v1355 = vmul.f32 %v1353, %v1353
    %v1356 = vmul.f32 %v1354, %v1354
    %v1357 = vsel %vm231, %v1355, 0.0
    %1358 = vadd.xlane.f32.xlu0 %v1357
    %v1359 = vpop.xlane.xlu0 %1358
    %v1360 = vsel %vm231, %v1356, 0.0
    %1361 = vadd.xlane.f32.xlu0 %v1360
    %v1362 = vpop.xlane.xlu0 %1361
    %v1363 = vmul.f32 %v1359, %v1350
    %v1364 = vmul.f32 %v1362, %v1350
    %v1365 = vadd.f32 %v1363, 1e-05
    %v1366 = vadd.f32 %v1364, 1e-05
    %v1367 = vrsqrt.pop %v1365
    %v1368 = vrsqrt.pop %v1366
    %v1369 = vmul.f32 %v1353, %v1367
    %v1370 = vmul.f32 %v1354, %v1368
    %v1372 = vlaneseq
    %v1373 = vshrl.u32 %v1372, 7
    %v1374 = vsub.s32 0, %v1373
    %v1375 = vrot.slane %v1342, %v1374
    %v1377 = vmul.f32 %v1369, %v1375
    %v1378 = vmul.f32 %v1370, %v1375
    %v1380 = vlaneseq
    %v1381 = vshrl.u32 %v1380, 7
    %v1382 = vsub.s32 0, %v1381
    %v1383 = vrot.slane %v1343, %v1382
    %v1385 = vadd.f32 %v1377, %v1383
    %v1386 = vadd.f32 %v1378, %v1383
    %v1387 = vld [vmem:[%s16] sm:$0xff]
    %v1388 = vld [vmem:[%s16 + $0x8] sm:$0xff]
    %v1389 = vld [vmem:[%s16 + $0x10] sm:$0xff]
    %v1390 = vld [vmem:[%s16 + $0x18] sm:$0xff]
    %v1391 = vld [vmem:[%s17] sm:$0x1]
    %v1393 = vlaneseq
    %v1394 = vshrl.u32 %v1393, 7
    %v1395 = vsub.s32 0, %v1394
    %v1396 = vrot.slane %v1391, %v1395
    %v1399 = vsel %vm231, %v1385, 0
    %v1402 = vsel %vm231, %v1386, 0
    %1404 = vmatprep.subr.mxu0 0.0
    %1405 = vmatpush1.msra.mxu0 0.0
    %1406 = vmatprep.subr.mxu0 0.0
    %1407 = vmatpush1.msra.mxu0 0.0
    %1408 = vmatprep.subr.mxu0 0.0
    %1409 = vmatpush1.msra.mxu0 0.0
    %1410 = vmatprep.subr.mxu0 0.0
    %1411 = vmatpush1.msra.mxu0 0.0
    %1412 = vmatprep.subr.mxu0 0.0
    %1413 = vmatpush1.msra.mxu0 0.0
    %1414 = vmatprep.subr.mxu0 0.0
    %1415 = vmatpush1.msra.mxu0 0.0
    %1416 = vmatprep.subr.mxu0 0.0
    %1417 = vmatpush1.msra.mxu0 0.0
    %1418 = vmatprep.subr.mxu0 0.0
    %1419 = vmatpush1.msra.mxu0 0.0
    %1420 = vmatprep.subr.mxu0 0.0
    %1421 = vmatpush1.msra.mxu0 0.0
    %1422 = vmatprep.subr.mxu0 0.0
    %1423 = vmatpush1.msra.mxu0 0.0
    %1424 = vmatprep.subr.mxu0 0.0
    %1425 = vmatpush1.msra.mxu0 0.0
    %1426 = vmatprep.subr.mxu0 0.0
    %1427 = vmatpush1.msra.mxu0 0.0
    %1428 = vmatprep.subr.mxu0 0.0
    %1429 = vmatpush1.msra.mxu0 %v1390
    %1430 = vmatprep.subr.mxu0 0.0
    %1431 = vmatpush1.msra.mxu0 %v1389
    %1432 = vmatprep.subr.mxu0 0.0
    %1433 = vmatpush1.msra.mxu0 %v1388
    %1434 = vmatprep.subr.mxu0 0.0
    %1435 = vmatpush1.msra.mxu0 %v1387
    %1436 = vmatprep.subr.mxu0 0.0
    %1437 = vmatpush2.msra.mxu0 0.0
    %1438 = vmatprep.subr.mxu0 0.0
    %1439 = vmatpush2.msra.mxu0 0.0
    %1440 = vmatprep.subr.mxu0 0.0
    %1441 = vmatpush2.msra.mxu0 0.0
    %1442 = vmatprep.subr.mxu0 0.0
    %1443 = vmatpush2.msra.mxu0 0.0
    %1444 = vmatprep.subr.mxu0 0.0
    %1445 = vmatpush2.msra.mxu0 0.0
    %1446 = vmatprep.subr.mxu0 0.0
    %1447 = vmatpush2.msra.mxu0 0.0
    %1448 = vmatprep.subr.mxu0 0.0
    %1449 = vmatpush2.msra.mxu0 0.0
    %1450 = vmatprep.subr.mxu0 0.0
    %1451 = vmatpush2.msra.mxu0 0.0
    %1452 = vmatprep.subr.mxu0 0.0
    %1453 = vmatpush2.msra.mxu0 0.0
    %1454 = vmatprep.subr.mxu0 0.0
    %1455 = vmatpush2.msra.mxu0 0.0
    %1456 = vmatprep.subr.mxu0 0.0
    %1457 = vmatpush2.msra.mxu0 0.0
    %1458 = vmatprep.subr.mxu0 0.0
    %1459 = vmatpush2.msra.mxu0 0.0
    %1460 = vmatprep.subr.mxu0 0.0
    %1461 = vmatpush2.msra.mxu0 0.0
    %1462 = vmatprep.subr.mxu0 0.0
    %1463 = vmatpush2.msra.mxu0 0.0
    %1464 = vmatprep.subr.mxu0 0.0
    %1465 = vmatpush2.msra.mxu0 0.0
    %1466 = vmatprep.subr.mxu0 0.0
    %1467 = vmatpush2.msra.mxu0 0.0
    %1468 = vmatprep.mubr.f32.mxu0 0.0
    %1469 = vmatmul.mubr.f32.gmra.mxu0 %v1399
    %v1470 = vpop.f32.mrf.mxu0
    %v1471 = vadd.f32 %v1396, %v1470
    %v1472 = vpop.f32.mrf.mxu0
    %1473 = vmatprep.mubr.f32.mxu0 0.0
    %1474 = vmatmul.mubr.f32.gmra.mxu0 %v1402
    %v1475 = vpop.f32.mrf.mxu0
    %v1476 = vadd.f32 %v1396, %v1475
    %v1477 = vpop.f32.mrf.mxu0
    %1478 = vdwg.mxu0
    %v1479 = vmax.f32 %v1471, 0.0
    %v1480 = vmax.f32 %v1476, 0.0
    %v1481 = vld [vmem:[%s18] sm:$0xff]
    %v1482 = vld [vmem:[%s18 + $0x8] sm:$0xff]
    %v1483 = vld [vmem:[%s18 + $0x10] sm:$0xff]
    %v1484 = vld [vmem:[%s18 + $0x18] sm:$0xff]
    %v1485 = vld [vmem:[%s18 + $0x20] sm:$0xff]
    %v1486 = vld [vmem:[%s18 + $0x28] sm:$0xff]
    %v1487 = vld [vmem:[%s18 + $0x30] sm:$0xff]
    %v1488 = vld [vmem:[%s18 + $0x38] sm:$0xff]
    %v1489 = vld [vmem:[%s18 + $0x40] sm:$0xff]
    %v1490 = vld [vmem:[%s18 + $0x48] sm:$0xff]
    %v1491 = vld [vmem:[%s18 + $0x50] sm:$0xff]
    %v1492 = vld [vmem:[%s18 + $0x58] sm:$0xff]
    %v1493 = vld [vmem:[%s18 + $0x60] sm:$0xff]
    %v1494 = vld [vmem:[%s18 + $0x68] sm:$0xff]
    %v1495 = vld [vmem:[%s18 + $0x70] sm:$0xff]
    %v1496 = vld [vmem:[%s18 + $0x78] sm:$0xff]
    %v1497 = vld [vmem:[%s19] sm:$0x1]
    %v1499 = vlaneseq
    %v1500 = vshrl.u32 %v1499, 7
    %v1501 = vsub.s32 0, %v1500
    %v1502 = vrot.slane %v1497, %v1501
    %1504 = vmatprep.subr.mxu0 0.0
    %1505 = vmatpush1.msra.mxu0 %v1496
    %1506 = vmatprep.subr.mxu0 0.0
    %1507 = vmatpush1.msra.mxu0 %v1495
    %1508 = vmatprep.subr.mxu0 0.0
    %1509 = vmatpush1.msra.mxu0 %v1494
    %1510 = vmatprep.subr.mxu0 0.0
    %1511 = vmatpush1.msra.mxu0 %v1493
    %1512 = vmatprep.subr.mxu0 0.0
    %1513 = vmatpush1.msra.mxu0 %v1492
    %1514 = vmatprep.subr.mxu0 0.0
    %1515 = vmatpush1.msra.mxu0 %v1491
    %1516 = vmatprep.subr.mxu0 0.0
    %1517 = vmatpush1.msra.mxu0 %v1490
    %1518 = vmatprep.subr.mxu0 0.0
    %1519 = vmatpush1.msra.mxu0 %v1489
    %1520 = vmatprep.subr.mxu0 0.0
    %1521 = vmatpush1.msra.mxu0 %v1488
    %1522 = vmatprep.subr.mxu0 0.0
    %1523 = vmatpush1.msra.mxu0 %v1487
    %1524 = vmatprep.subr.mxu0 0.0
    %1525 = vmatpush1.msra.mxu0 %v1486
    %1526 = vmatprep.subr.mxu0 0.0
    %1527 = vmatpush1.msra.mxu0 %v1485
    %1528 = vmatprep.subr.mxu0 0.0
    %1529 = vmatpush1.msra.mxu0 %v1484
    %1530 = vmatprep.subr.mxu0 0.0
    %1531 = vmatpush1.msra.mxu0 %v1483
    %1532 = vmatprep.subr.mxu0 0.0
    %1533 = vmatpush1.msra.mxu0 %v1482
    %1534 = vmatprep.subr.mxu0 0.0
    %1535 = vmatpush1.msra.mxu0 %v1481
    %1536 = vmatprep.subr.mxu0 0.0
    %1537 = vmatpush2.msra.mxu0 0.0
    %1538 = vmatprep.subr.mxu0 0.0
    %1539 = vmatpush2.msra.mxu0 0.0
    %1540 = vmatprep.subr.mxu0 0.0
    %1541 = vmatpush2.msra.mxu0 0.0
    %1542 = vmatprep.subr.mxu0 0.0
    %1543 = vmatpush2.msra.mxu0 0.0
    %1544 = vmatprep.subr.mxu0 0.0
    %1545 = vmatpush2.msra.mxu0 0.0
    %1546 = vmatprep.subr.mxu0 0.0
    %1547 = vmatpush2.msra.mxu0 0.0
    %1548 = vmatprep.subr.mxu0 0.0
    %1549 = vmatpush2.msra.mxu0 0.0
    %1550 = vmatprep.subr.mxu0 0.0
    %1551 = vmatpush2.msra.mxu0 0.0
    %1552 = vmatprep.subr.mxu0 0.0
    %1553 = vmatpush2.msra.mxu0 0.0
    %1554 = vmatprep.subr.mxu0 0.0
    %1555 = vmatpush2.msra.mxu0 0.0
    %1556 = vmatprep.subr.mxu0 0.0
    %1557 = vmatpush2.msra.mxu0 0.0
    %1558 = vmatprep.subr.mxu0 0.0
    %1559 = vmatpush2.msra.mxu0 0.0
    %1560 = vmatprep.subr.mxu0 0.0
    %1561 = vmatpush2.msra.mxu0 0.0
    %1562 = vmatprep.subr.mxu0 0.0
    %1563 = vmatpush2.msra.mxu0 0.0
    %1564 = vmatprep.subr.mxu0 0.0
    %1565 = vmatpush2.msra.mxu0 0.0
    %1566 = vmatprep.subr.mxu0 0.0
    %1567 = vmatpush2.msra.mxu0 0.0
    %1568 = vmatprep.mubr.f32.mxu0 0.0
    %1569 = vmatmul.mubr.f32.gmra.mxu0 %v1479
    %v1570 = vpop.f32.mrf.mxu0
    %v1571 = vadd.f32 %v1502, %v1570
    %v1572 = vpop.f32.mrf.mxu0
    %1573 = vmatprep.mubr.f32.mxu0 0.0
    %1574 = vmatmul.mubr.f32.gmra.mxu0 %v1480
    %v1575 = vpop.f32.mrf.mxu0
    %v1576 = vadd.f32 %v1502, %v1575
    %v1577 = vpop.f32.mrf.mxu0
    %1578 = vdwg.mxu0
    %v1579 = vadd.f32 %v1571, %v1385
    %v1580 = vadd.f32 %v1576, %v1386
    %v1581 = vld [vmem:[%s14] sm:$0x1]
    %v1582 = vld [vmem:[%s15] sm:$0x1]
    %v1583 = vsel %vm231, %v1579, 0.0
    %1584 = vadd.xlane.f32.xlu0 %v1583
    %v1585 = vpop.xlane.xlu0 %1584
    %v1586 = vsel %vm231, %v1580, 0.0
    %1587 = vadd.xlane.f32.xlu0 %v1586
    %v1588 = vpop.xlane.xlu0 %1587
    %v1589 = vmul.f32 %v1585, %v1350
    %v1590 = vmul.f32 %v1588, %v1350
    %v1591 = vsub.f32 %v1579, %v1589
    %v1592 = vsub.f32 %v1580, %v1590
    %v1593 = vmul.f32 %v1591, %v1591
    %v1594 = vmul.f32 %v1592, %v1592
    %v1595 = vsel %vm231, %v1593, 0.0
    %1596 = vadd.xlane.f32.xlu0 %v1595
    %v1597 = vpop.xlane.xlu0 %1596
    %v1598 = vsel %vm231, %v1594, 0.0
    %1599 = vadd.xlane.f32.xlu0 %v1598
    %v1600 = vpop.xlane.xlu0 %1599
    %v1601 = vmul.f32 %v1597, %v1350
    %v1602 = vmul.f32 %v1600, %v1350
    %v1603 = vadd.f32 %v1601, 1e-05
    %v1604 = vadd.f32 %v1602, 1e-05
    %v1605 = vrsqrt.pop %v1603
    %v1606 = vrsqrt.pop %v1604
    %v1607 = vmul.f32 %v1591, %v1605
    %v1608 = vmul.f32 %v1592, %v1606
    %v1610 = vlaneseq
    %v1611 = vshrl.u32 %v1610, 7
    %v1612 = vsub.s32 0, %v1611
    %v1613 = vrot.slane %v1581, %v1612
    %v1615 = vmul.f32 %v1607, %v1613
    %v1616 = vmul.f32 %v1608, %v1613
    %v1618 = vlaneseq
    %v1619 = vshrl.u32 %v1618, 7
    %v1620 = vsub.s32 0, %v1619
    %v1621 = vrot.slane %v1582, %v1620
    %v1623 = vadd.f32 %v1615, %v1621
    %v1624 = vadd.f32 %v1616, %v1621
    %s1625 = scalar_lea.vmem %s4, 32
    %v1626 = vld [vmem:[%s1625] sm:$0xff]
    %v1627 = vld [vmem:[%s1625 + $0x8] sm:$0xff]
    %v1628 = vld [vmem:[%s1625 + $0x10] sm:$0xff]
    %v1629 = vld [vmem:[%s1625 + $0x18] sm:$0xff]
    %s1630 = scalar_lea.vmem %s5, 1
    %v1631 = vld [vmem:[%s1630] sm:$0x1]
    %v1633 = vlaneseq
    %v1634 = vshrl.u32 %v1633, 7
    %v1635 = vsub.s32 0, %v1634
    %v1636 = vrot.slane %v1631, %v1635
    %v1639 = vsel %vm231, %v1623, 0
    %v1642 = vsel %vm231, %v1624, 0
    %1644 = vmatprep.subr.mxu0 0.0
    %1645 = vmatpush1.msra.mxu0 0.0
    %1646 = vmatprep.subr.mxu0 0.0
    %1647 = vmatpush1.msra.mxu0 0.0
    %1648 = vmatprep.subr.mxu0 0.0
    %1649 = vmatpush1.msra.mxu0 0.0
    %1650 = vmatprep.subr.mxu0 0.0
    %1651 = vmatpush1.msra.mxu0 0.0
    %1652 = vmatprep.subr.mxu0 0.0
    %1653 = vmatpush1.msra.mxu0 0.0
    %1654 = vmatprep.subr.mxu0 0.0
    %1655 = vmatpush1.msra.mxu0 0.0
    %1656 = vmatprep.subr.mxu0 0.0
    %1657 = vmatpush1.msra.mxu0 0.0
    %1658 = vmatprep.subr.mxu0 0.0
    %1659 = vmatpush1.msra.mxu0 0.0
    %1660 = vmatprep.subr.mxu0 0.0
    %1661 = vmatpush1.msra.mxu0 0.0
    %1662 = vmatprep.subr.mxu0 0.0
    %1663 = vmatpush1.msra.mxu0 0.0
    %1664 = vmatprep.subr.mxu0 0.0
    %1665 = vmatpush1.msra.mxu0 0.0
    %1666 = vmatprep.subr.mxu0 0.0
    %1667 = vmatpush1.msra.mxu0 0.0
    %1668 = vmatprep.subr.mxu0 0.0
    %1669 = vmatpush1.msra.mxu0 %v1629
    %1670 = vmatprep.subr.mxu0 0.0
    %1671 = vmatpush1.msra.mxu0 %v1628
    %1672 = vmatprep.subr.mxu0 0.0
    %1673 = vmatpush1.msra.mxu0 %v1627
    %1674 = vmatprep.subr.mxu0 0.0
    %1675 = vmatpush1.msra.mxu0 %v1626
    %1676 = vmatprep.subr.mxu0 0.0
    %1677 = vmatpush2.msra.mxu0 0.0
    %1678 = vmatprep.subr.mxu0 0.0
    %1679 = vmatpush2.msra.mxu0 0.0
    %1680 = vmatprep.subr.mxu0 0.0
    %1681 = vmatpush2.msra.mxu0 0.0
    %1682 = vmatprep.subr.mxu0 0.0
    %1683 = vmatpush2.msra.mxu0 0.0
    %1684 = vmatprep.subr.mxu0 0.0
    %1685 = vmatpush2.msra.mxu0 0.0
    %1686 = vmatprep.subr.mxu0 0.0
    %1687 = vmatpush2.msra.mxu0 0.0
    %1688 = vmatprep.subr.mxu0 0.0
    %1689 = vmatpush2.msra.mxu0 0.0
    %1690 = vmatprep.subr.mxu0 0.0
    %1691 = vmatpush2.msra.mxu0 0.0
    %1692 = vmatprep.subr.mxu0 0.0
    %1693 = vmatpush2.msra.mxu0 0.0
    %1694 = vmatprep.subr.mxu0 0.0
    %1695 = vmatpush2.msra.mxu0 0.0
    %1696 = vmatprep.subr.mxu0 0.0
    %1697 = vmatpush2.msra.mxu0 0.0
    %1698 = vmatprep.subr.mxu0 0.0
    %1699 = vmatpush2.msra.mxu0 0.0
    %1700 = vmatprep.subr.mxu0 0.0
    %1701 = vmatpush2.msra.mxu0 0.0
    %1702 = vmatprep.subr.mxu0 0.0
    %1703 = vmatpush2.msra.mxu0 0.0
    %1704 = vmatprep.subr.mxu0 0.0
    %1705 = vmatpush2.msra.mxu0 0.0
    %1706 = vmatprep.subr.mxu0 0.0
    %1707 = vmatpush2.msra.mxu0 0.0
    %1708 = vmatprep.mubr.f32.mxu0 0.0
    %1709 = vmatmul.mubr.f32.gmra.mxu0 %v1639
    %v1710 = vpop.f32.mrf.mxu0
    %v1711 = vadd.f32 %v1636, %v1710
    %v1712 = vpop.f32.mrf.mxu0
    %1713 = vmatprep.mubr.f32.mxu0 0.0
    %1714 = vmatmul.mubr.f32.gmra.mxu0 %v1642
    %v1715 = vpop.f32.mrf.mxu0
    %v1716 = vadd.f32 %v1636, %v1715
    %v1717 = vpop.f32.mrf.mxu0
    %1718 = vdwg.mxu0
    %s1719 = scalar_lea.vmem %s6, 32
    %v1720 = vld [vmem:[%s1719] sm:$0xff]
    %v1721 = vld [vmem:[%s1719 + $0x8] sm:$0xff]
    %v1722 = vld [vmem:[%s1719 + $0x10] sm:$0xff]
    %v1723 = vld [vmem:[%s1719 + $0x18] sm:$0xff]
    %s1724 = scalar_lea.vmem %s7, 1
    %v1725 = vld [vmem:[%s1724] sm:$0x1]
    %v1727 = vlaneseq
    %v1728 = vshrl.u32 %v1727, 7
    %v1729 = vsub.s32 0, %v1728
    %v1730 = vrot.slane %v1725, %v1729
    %1732 = vmatprep.subr.mxu0 0.0
    %1733 = vmatpush1.msra.mxu0 0.0
    %1734 = vmatprep.subr.mxu0 0.0
    %1735 = vmatpush1.msra.mxu0 0.0
    %1736 = vmatprep.subr.mxu0 0.0
    %1737 = vmatpush1.msra.mxu0 0.0
    %1738 = vmatprep.subr.mxu0 0.0
    %1739 = vmatpush1.msra.mxu0 0.0
    %1740 = vmatprep.subr.mxu0 0.0
    %1741 = vmatpush1.msra.mxu0 0.0
    %1742 = vmatprep.subr.mxu0 0.0
    %1743 = vmatpush1.msra.mxu0 0.0
    %1744 = vmatprep.subr.mxu0 0.0
    %1745 = vmatpush1.msra.mxu0 0.0
    %1746 = vmatprep.subr.mxu0 0.0
    %1747 = vmatpush1.msra.mxu0 0.0
    %1748 = vmatprep.subr.mxu0 0.0
    %1749 = vmatpush1.msra.mxu0 0.0
    %1750 = vmatprep.subr.mxu0 0.0
    %1751 = vmatpush1.msra.mxu0 0.0
    %1752 = vmatprep.subr.mxu0 0.0
    %1753 = vmatpush1.msra.mxu0 0.0
    %1754 = vmatprep.subr.mxu0 0.0
    %1755 = vmatpush1.msra.mxu0 0.0
    %1756 = vmatprep.subr.mxu0 0.0
    %1757 = vmatpush1.msra.mxu0 %v1723
    %1758 = vmatprep.subr.mxu0 0.0
    %1759 = vmatpush1.msra.mxu0 %v1722
    %1760 = vmatprep.subr.mxu0 0.0
    %1761 = vmatpush1.msra.mxu0 %v1721
    %1762 = vmatprep.subr.mxu0 0.0
    %1763 = vmatpush1.msra.mxu0 %v1720
    %1764 = vmatprep.subr.mxu0 0.0
    %1765 = vmatpush2.msra.mxu0 0.0
    %1766 = vmatprep.subr.mxu0 0.0
    %1767 = vmatpush2.msra.mxu0 0.0
    %1768 = vmatprep.subr.mxu0 0.0
    %1769 = vmatpush2.msra.mxu0 0.0
    %1770 = vmatprep.subr.mxu0 0.0
    %1771 = vmatpush2.msra.mxu0 0.0
    %1772 = vmatprep.subr.mxu0 0.0
    %1773 = vmatpush2.msra.mxu0 0.0
    %1774 = vmatprep.subr.mxu0 0.0
    %1775 = vmatpush2.msra.mxu0 0.0
    %1776 = vmatprep.subr.mxu0 0.0
    %1777 = vmatpush2.msra.mxu0 0.0
    %1778 = vmatprep.subr.mxu0 0.0
    %1779 = vmatpush2.msra.mxu0 0.0
    %1780 = vmatprep.subr.mxu0 0.0
    %1781 = vmatpush2.msra.mxu0 0.0
    %1782 = vmatprep.subr.mxu0 0.0
    %1783 = vmatpush2.msra.mxu0 0.0
    %1784 = vmatprep.subr.mxu0 0.0
    %1785 = vmatpush2.msra.mxu0 0.0
    %1786 = vmatprep.subr.mxu0 0.0
    %1787 = vmatpush2.msra.mxu0 0.0
    %1788 = vmatprep.subr.mxu0 0.0
    %1789 = vmatpush2.msra.mxu0 0.0
    %1790 = vmatprep.subr.mxu0 0.0
    %1791 = vmatpush2.msra.mxu0 0.0
    %1792 = vmatprep.subr.mxu0 0.0
    %1793 = vmatpush2.msra.mxu0 0.0
    %1794 = vmatprep.subr.mxu0 0.0
    %1795 = vmatpush2.msra.mxu0 0.0
    %1796 = vmatprep.mubr.f32.mxu0 0.0
    %1797 = vmatmul.mubr.f32.gmra.mxu0 %v1639
    %v1798 = vpop.f32.mrf.mxu0
    %v1799 = vadd.f32 %v1730, %v1798
    %v1800 = vpop.f32.mrf.mxu0
    %1801 = vmatprep.mubr.f32.mxu0 0.0
    %1802 = vmatmul.mubr.f32.gmra.mxu0 %v1642
    %v1803 = vpop.f32.mrf.mxu0
    %v1804 = vadd.f32 %v1730, %v1803
    %v1805 = vpop.f32.mrf.mxu0
    %1806 = vdwg.mxu0
    %s1807 = scalar_lea.vmem %s8, 32
    %v1808 = vld [vmem:[%s1807] sm:$0xff]
    %v1809 = vld [vmem:[%s1807 + $0x8] sm:$0xff]
    %v1810 = vld [vmem:[%s1807 + $0x10] sm:$0xff]
    %v1811 = vld [vmem:[%s1807 + $0x18] sm:$0xff]
    %s1812 = scalar_lea.vmem %s9, 1
    %v1813 = vld [vmem:[%s1812] sm:$0x1]
    %v1815 = vlaneseq
    %v1816 = vshrl.u32 %v1815, 7
    %v1817 = vsub.s32 0, %v1816
    %v1818 = vrot.slane %v1813, %v1817
    %1820 = vmatprep.subr.mxu0 0.0
    %1821 = vmatpush1.msra.mxu0 0.0
    %1822 = vmatprep.subr.mxu0 0.0
    %1823 = vmatpush1.msra.mxu0 0.0
    %1824 = vmatprep.subr.mxu0 0.0
    %1825 = vmatpush1.msra.mxu0 0.0
    %1826 = vmatprep.subr.mxu0 0.0
    %1827 = vmatpush1.msra.mxu0 0.0
    %1828 = vmatprep.subr.mxu0 0.0
    %1829 = vmatpush1.msra.mxu0 0.0
    %1830 = vmatprep.subr.mxu0 0.0
    %1831 = vmatpush1.msra.mxu0 0.0
    %1832 = vmatprep.subr.mxu0 0.0
    %1833 = vmatpush1.msra.mxu0 0.0
    %1834 = vmatprep.subr.mxu0 0.0
    %1835 = vmatpush1.msra.mxu0 0.0
    %1836 = vmatprep.subr.mxu0 0.0
    %1837 = vmatpush1.msra.mxu0 0.0
    %1838 = vmatprep.subr.mxu0 0.0
    %1839 = vmatpush1.msra.mxu0 0.0
    %1840 = vmatprep.subr.mxu0 0.0
    %1841 = vmatpush1.msra.mxu0 0.0
    %1842 = vmatprep.subr.mxu0 0.0
    %1843 = vmatpush1.msra.mxu0 0.0
    %1844 = vmatprep.subr.mxu0 0.0
    %1845 = vmatpush1.msra.mxu0 %v1811
    %1846 = vmatprep.subr.mxu0 0.0
    %1847 = vmatpush1.msra.mxu0 %v1810
    %1848 = vmatprep.subr.mxu0 0.0
    %1849 = vmatpush1.msra.mxu0 %v1809
    %1850 = vmatprep.subr.mxu0 0.0
    %1851 = vmatpush1.msra.mxu0 %v1808
    %1852 = vmatprep.subr.mxu0 0.0
    %1853 = vmatpush2.msra.mxu0 0.0
    %1854 = vmatprep.subr.mxu0 0.0
    %1855 = vmatpush2.msra.mxu0 0.0
    %1856 = vmatprep.subr.mxu0 0.0
    %1857 = vmatpush2.msra.mxu0 0.0
    %1858 = vmatprep.subr.mxu0 0.0
    %1859 = vmatpush2.msra.mxu0 0.0
    %1860 = vmatprep.subr.mxu0 0.0
    %1861 = vmatpush2.msra.mxu0 0.0
    %1862 = vmatprep.subr.mxu0 0.0
    %1863 = vmatpush2.msra.mxu0 0.0
    %1864 = vmatprep.subr.mxu0 0.0
    %1865 = vmatpush2.msra.mxu0 0.0
    %1866 = vmatprep.subr.mxu0 0.0
    %1867 = vmatpush2.msra.mxu0 0.0
    %1868 = vmatprep.subr.mxu0 0.0
    %1869 = vmatpush2.msra.mxu0 0.0
    %1870 = vmatprep.subr.mxu0 0.0
    %1871 = vmatpush2.msra.mxu0 0.0
    %1872 = vmatprep.subr.mxu0 0.0
    %1873 = vmatpush2.msra.mxu0 0.0
    %1874 = vmatprep.subr.mxu0 0.0
    %1875 = vmatpush2.msra.mxu0 0.0
    %1876 = vmatprep.subr.mxu0 0.0
    %1877 = vmatpush2.msra.mxu0 0.0
    %1878 = vmatprep.subr.mxu0 0.0
    %1879 = vmatpush2.msra.mxu0 0.0
    %1880 = vmatprep.subr.mxu0 0.0
    %1881 = vmatpush2.msra.mxu0 0.0
    %1882 = vmatprep.subr.mxu0 0.0
    %1883 = vmatpush2.msra.mxu0 0.0
    %1884 = vmatprep.mubr.f32.mxu0 0.0
    %1885 = vmatmul.mubr.f32.gmra.mxu0 %v1639
    %v1886 = vpop.f32.mrf.mxu0
    %v1887 = vadd.f32 %v1818, %v1886
    %v1888 = vpop.f32.mrf.mxu0
    %1889 = vmatprep.mubr.f32.mxu0 0.0
    %1890 = vmatmul.mubr.f32.gmra.mxu0 %v1642
    %v1891 = vpop.f32.mrf.mxu0
    %v1892 = vadd.f32 %v1818, %v1891
    %v1893 = vpop.f32.mrf.mxu0
    %1894 = vdwg.mxu0
    %v1895 = vmul.f32 %v1711, %v216
    %v1896 = vmul.f32 %v1716, %v216
    %v1898 = vsel %vm231, %v1895, 0
    %v1901 = vsel %vm231, %v1896, 0
    %v1904 = vsel %vm231, %v1799, 0
    %v1907 = vsel %vm231, %v1804, 0
    %1909 = vmatprep.subr.mxu0 0.0
    %1910 = vmatpush1.xpose.msra.mxu0 0.0
    %1911 = vmatprep.subr.mxu0 0.0
    %1912 = vmatpush1.xpose.msra.mxu0 0.0
    %1913 = vmatprep.subr.mxu0 0.0
    %1914 = vmatpush1.xpose.msra.mxu0 0.0
    %1915 = vmatprep.subr.mxu0 0.0
    %1916 = vmatpush1.xpose.msra.mxu0 0.0
    %1917 = vmatprep.subr.mxu0 0.0
    %1918 = vmatpush1.xpose.msra.mxu0 0.0
    %1919 = vmatprep.subr.mxu0 0.0
    %1920 = vmatpush1.xpose.msra.mxu0 0.0
    %1921 = vmatprep.subr.mxu0 0.0
    %1922 = vmatpush1.xpose.msra.mxu0 0.0
    %1923 = vmatprep.subr.mxu0 0.0
    %1924 = vmatpush1.xpose.msra.mxu0 0.0
    %1925 = vmatprep.subr.mxu0 0.0
    %1926 = vmatpush1.xpose.msra.mxu0 0.0
    %1927 = vmatprep.subr.mxu0 0.0
    %1928 = vmatpush1.xpose.msra.mxu0 0.0
    %1929 = vmatprep.subr.mxu0 0.0
    %1930 = vmatpush1.xpose.msra.mxu0 0.0
    %1931 = vmatprep.subr.mxu0 0.0
    %1932 = vmatpush1.xpose.msra.mxu0 0.0
    %1933 = vmatprep.subr.mxu0 0.0
    %1934 = vmatpush1.xpose.msra.mxu0 0.0
    %1935 = vmatprep.subr.mxu0 0.0
    %1936 = vmatpush1.xpose.msra.mxu0 0.0
    %1937 = vmatprep.subr.mxu0 0.0
    %1938 = vmatpush1.xpose.msra.mxu0 %v1907
    %1939 = vmatprep.subr.mxu0 0.0
    %1940 = vmatpush1.xpose.msra.mxu0 %v1904
    %1941 = vmatprep.subr.mxu0 0.0
    %1942 = vmatpush2.xpose.msra.mxu0 0.0
    %1943 = vmatprep.subr.mxu0 0.0
    %1944 = vmatpush2.xpose.msra.mxu0 0.0
    %1945 = vmatprep.subr.mxu0 0.0
    %1946 = vmatpush2.xpose.msra.mxu0 0.0
    %1947 = vmatprep.subr.mxu0 0.0
    %1948 = vmatpush2.xpose.msra.mxu0 0.0
    %1949 = vmatprep.subr.mxu0 0.0
    %1950 = vmatpush2.xpose.msra.mxu0 0.0
    %1951 = vmatprep.subr.mxu0 0.0
    %1952 = vmatpush2.xpose.msra.mxu0 0.0
    %1953 = vmatprep.subr.mxu0 0.0
    %1954 = vmatpush2.xpose.msra.mxu0 0.0
    %1955 = vmatprep.subr.mxu0 0.0
    %1956 = vmatpush2.xpose.msra.mxu0 0.0
    %1957 = vmatprep.subr.mxu0 0.0
    %1958 = vmatpush2.xpose.msra.mxu0 0.0
    %1959 = vmatprep.subr.mxu0 0.0
    %1960 = vmatpush2.xpose.msra.mxu0 0.0
    %1961 = vmatprep.subr.mxu0 0.0
    %1962 = vmatpush2.xpose.msra.mxu0 0.0
    %1963 = vmatprep.subr.mxu0 0.0
    %1964 = vmatpush2.xpose.msra.mxu0 0.0
    %1965 = vmatprep.subr.mxu0 0.0
    %1966 = vmatpush2.xpose.msra.mxu0 0.0
    %1967 = vmatprep.subr.mxu0 0.0
    %1968 = vmatpush2.xpose.msra.mxu0 0.0
    %1969 = vmatprep.subr.mxu0 0.0
    %1970 = vmatpush2.xpose.msra.mxu0 0.0
    %1971 = vmatprep.subr.mxu0 0.0
    %1972 = vmatpush2.xpose.msra.mxu0 0.0
    %1973 = vmatprep.mubr.f32.mxu0 0.0
    %1974 = vmatmul.mubr.f32.gmra.mxu0 %v1898
    %v1975 = vpop.f32.mrf.mxu0
    %v1976 = vadd.f32 %v194, %v1975
    %v1977 = vpop.f32.mrf.mxu0
    %1978 = vmatprep.mubr.f32.mxu0 0.0
    %1979 = vmatmul.mubr.f32.gmra.mxu0 %v1901
    %v1980 = vpop.f32.mrf.mxu0
    %v1981 = vadd.f32 %v195, %v1980
    %v1982 = vpop.f32.mrf.mxu0
    %1983 = vdwg.mxu0
    %v1984 = vsel %vm574, %v1976, -inf
    %1985 = vmax.xlane.f32.xlu0 %v1984
    %v1986 = vpop.xlane.xlu0 %1985
    %v1987 = vsel %vm574, %v1981, -inf
    %1988 = vmax.xlane.f32.xlu0 %v1987
    %v1989 = vpop.xlane.xlu0 %1988
    %v1990 = vsub.f32 %v1976, %v1986
    %v1991 = vsub.f32 %v1981, %v1989
    %v1992 = vmul.f32 %v1990, 1.442695
    %v1993 = vpow.pop %v1992
    %v1994 = vmul.f32 %v1991, 1.442695
    %v1995 = vpow.pop %v1994
    %v1996 = vsel %vm574, %v1993, 0.0
    %1997 = vadd.xlane.f32.xlu0 %v1996
    %v1998 = vpop.xlane.xlu0 %1997
    %v1999 = vsel %vm574, %v1995, 0.0
    %2000 = vadd.xlane.f32.xlu0 %v1999
    %v2001 = vpop.xlane.xlu0 %2000
    %v2002 = vrcp.pop %v1998
    %v2003 = vrcp.pop %v2001
    %v2004 = vmul.f32 %v1993, %v2002
    %v2005 = vmul.f32 %v1995, %v2003
    %v2006 = vmul.f32 %v1887, %v200
    %v2007 = vmul.f32 %v1892, %v200
    %v2008 = vmul.f32 %v1711, %v217
    %v2009 = vmul.f32 %v1716, %v217
    %v2011 = vsel %vm231, %v2008, 0
    %v2014 = vsel %vm231, %v2009, 0
    %2016 = vmatprep.subr.mxu0 0.0
    %2017 = vmatpush1.xpose.msra.mxu0 0.0
    %2018 = vmatprep.subr.mxu0 0.0
    %2019 = vmatpush1.xpose.msra.mxu0 0.0
    %2020 = vmatprep.subr.mxu0 0.0
    %2021 = vmatpush1.xpose.msra.mxu0 0.0
    %2022 = vmatprep.subr.mxu0 0.0
    %2023 = vmatpush1.xpose.msra.mxu0 0.0
    %2024 = vmatprep.subr.mxu0 0.0
    %2025 = vmatpush1.xpose.msra.mxu0 0.0
    %2026 = vmatprep.subr.mxu0 0.0
    %2027 = vmatpush1.xpose.msra.mxu0 0.0
    %2028 = vmatprep.subr.mxu0 0.0
    %2029 = vmatpush1.xpose.msra.mxu0 0.0
    %2030 = vmatprep.subr.mxu0 0.0
    %2031 = vmatpush1.xpose.msra.mxu0 0.0
    %2032 = vmatprep.subr.mxu0 0.0
    %2033 = vmatpush1.xpose.msra.mxu0 0.0
    %2034 = vmatprep.subr.mxu0 0.0
    %2035 = vmatpush1.xpose.msra.mxu0 0.0
    %2036 = vmatprep.subr.mxu0 0.0
    %2037 = vmatpush1.xpose.msra.mxu0 0.0
    %2038 = vmatprep.subr.mxu0 0.0
    %2039 = vmatpush1.xpose.msra.mxu0 0.0
    %2040 = vmatprep.subr.mxu0 0.0
    %2041 = vmatpush1.xpose.msra.mxu0 0.0
    %2042 = vmatprep.subr.mxu0 0.0
    %2043 = vmatpush1.xpose.msra.mxu0 0.0
    %2044 = vmatprep.subr.mxu0 0.0
    %2045 = vmatpush1.xpose.msra.mxu0 %v1907
    %2046 = vmatprep.subr.mxu0 0.0
    %2047 = vmatpush1.xpose.msra.mxu0 %v1904
    %2048 = vmatprep.subr.mxu0 0.0
    %2049 = vmatpush2.xpose.msra.mxu0 0.0
    %2050 = vmatprep.subr.mxu0 0.0
    %2051 = vmatpush2.xpose.msra.mxu0 0.0
    %2052 = vmatprep.subr.mxu0 0.0
    %2053 = vmatpush2.xpose.msra.mxu0 0.0
    %2054 = vmatprep.subr.mxu0 0.0
    %2055 = vmatpush2.xpose.msra.mxu0 0.0
    %2056 = vmatprep.subr.mxu0 0.0
    %2057 = vmatpush2.xpose.msra.mxu0 0.0
    %2058 = vmatprep.subr.mxu0 0.0
    %2059 = vmatpush2.xpose.msra.mxu0 0.0
    %2060 = vmatprep.subr.mxu0 0.0
    %2061 = vmatpush2.xpose.msra.mxu0 0.0
    %2062 = vmatprep.subr.mxu0 0.0
    %2063 = vmatpush2.xpose.msra.mxu0 0.0
    %2064 = vmatprep.subr.mxu0 0.0
    %2065 = vmatpush2.xpose.msra.mxu0 0.0
    %2066 = vmatprep.subr.mxu0 0.0
    %2067 = vmatpush2.xpose.msra.mxu0 0.0
    %2068 = vmatprep.subr.mxu0 0.0
    %2069 = vmatpush2.xpose.msra.mxu0 0.0
    %2070 = vmatprep.subr.mxu0 0.0
    %2071 = vmatpush2.xpose.msra.mxu0 0.0
    %2072 = vmatprep.subr.mxu0 0.0
    %2073 = vmatpush2.xpose.msra.mxu0 0.0
    %2074 = vmatprep.subr.mxu0 0.0
    %2075 = vmatpush2.xpose.msra.mxu0 0.0
    %2076 = vmatprep.subr.mxu0 0.0
    %2077 = vmatpush2.xpose.msra.mxu0 0.0
    %2078 = vmatprep.subr.mxu0 0.0
    %2079 = vmatpush2.xpose.msra.mxu0 0.0
    %2080 = vmatprep.mubr.f32.mxu0 0.0
    %2081 = vmatmul.mubr.f32.gmra.mxu0 %v2011
    %v2082 = vpop.f32.mrf.mxu0
    %v2083 = vadd.f32 %v194, %v2082
    %v2084 = vpop.f32.mrf.mxu0
    %2085 = vmatprep.mubr.f32.mxu0 0.0
    %2086 = vmatmul.mubr.f32.gmra.mxu0 %v2014
    %v2087 = vpop.f32.mrf.mxu0
    %v2088 = vadd.f32 %v195, %v2087
    %v2089 = vpop.f32.mrf.mxu0
    %2090 = vdwg.mxu0
    %v2091 = vsel %vm574, %v2083, -inf
    %2092 = vmax.xlane.f32.xlu0 %v2091
    %v2093 = vpop.xlane.xlu0 %2092
    %v2094 = vsel %vm574, %v2088, -inf
    %2095 = vmax.xlane.f32.xlu0 %v2094
    %v2096 = vpop.xlane.xlu0 %2095
    %v2097 = vsub.f32 %v2083, %v2093
    %v2098 = vsub.f32 %v2088, %v2096
    %v2099 = vmul.f32 %v2097, 1.442695
    %v2100 = vpow.pop %v2099
    %v2101 = vmul.f32 %v2098, 1.442695
    %v2102 = vpow.pop %v2101
    %v2103 = vsel %vm574, %v2100, 0.0
    %2104 = vadd.xlane.f32.xlu0 %v2103
    %v2105 = vpop.xlane.xlu0 %2104
    %v2106 = vsel %vm574, %v2102, 0.0
    %2107 = vadd.xlane.f32.xlu0 %v2106
    %v2108 = vpop.xlane.xlu0 %2107
    %v2109 = vrcp.pop %v2105
    %v2110 = vrcp.pop %v2108
    %v2111 = vmul.f32 %v2100, %v2109
    %v2112 = vmul.f32 %v2102, %v2110
    %v2113 = vmul.f32 %v1887, %v205
    %v2114 = vmul.f32 %v1892, %v205
    %v2116 = vsel %vm574, %v2111, 0
    %v2119 = vsel %vm574, %v2112, 0
    %2121 = vmatprep.subr.mxu0 0.0
    %2122 = vmatpush1.msra.mxu0 0.0
    %2123 = vmatprep.subr.mxu0 0.0
    %2124 = vmatpush1.msra.mxu0 0.0
    %2125 = vmatprep.subr.mxu0 0.0
    %2126 = vmatpush1.msra.mxu0 0.0
    %2127 = vmatprep.subr.mxu0 0.0
    %2128 = vmatpush1.msra.mxu0 0.0
    %2129 = vmatprep.subr.mxu0 0.0
    %2130 = vmatpush1.msra.mxu0 0.0
    %2131 = vmatprep.subr.mxu0 0.0
    %2132 = vmatpush1.msra.mxu0 0.0
    %2133 = vmatprep.subr.mxu0 0.0
    %2134 = vmatpush1.msra.mxu0 0.0
    %2135 = vmatprep.subr.mxu0 0.0
    %2136 = vmatpush1.msra.mxu0 0.0
    %2137 = vmatprep.subr.mxu0 0.0
    %2138 = vmatpush1.msra.mxu0 0.0
    %2139 = vmatprep.subr.mxu0 0.0
    %2140 = vmatpush1.msra.mxu0 0.0
    %2141 = vmatprep.subr.mxu0 0.0
    %2142 = vmatpush1.msra.mxu0 0.0
    %2143 = vmatprep.subr.mxu0 0.0
    %2144 = vmatpush1.msra.mxu0 0.0
    %2145 = vmatprep.subr.mxu0 0.0
    %2146 = vmatpush1.msra.mxu0 0.0
    %2147 = vmatprep.subr.mxu0 0.0
    %2148 = vmatpush1.msra.mxu0 0.0
    %2149 = vmatprep.subr.mxu0 0.0
    %2150 = vmatpush1.msra.mxu0 %v2114
    %2151 = vmatprep.subr.mxu0 0.0
    %2152 = vmatpush1.msra.mxu0 %v2113
    %2153 = vmatprep.subr.mxu0 0.0
    %2154 = vmatpush2.msra.mxu0 0.0
    %2155 = vmatprep.subr.mxu0 0.0
    %2156 = vmatpush2.msra.mxu0 0.0
    %2157 = vmatprep.subr.mxu0 0.0
    %2158 = vmatpush2.msra.mxu0 0.0
    %2159 = vmatprep.subr.mxu0 0.0
    %2160 = vmatpush2.msra.mxu0 0.0
    %2161 = vmatprep.subr.mxu0 0.0
    %2162 = vmatpush2.msra.mxu0 0.0
    %2163 = vmatprep.subr.mxu0 0.0
    %2164 = vmatpush2.msra.mxu0 0.0
    %2165 = vmatprep.subr.mxu0 0.0
    %2166 = vmatpush2.msra.mxu0 0.0
    %2167 = vmatprep.subr.mxu0 0.0
    %2168 = vmatpush2.msra.mxu0 0.0
    %2169 = vmatprep.subr.mxu0 0.0
    %2170 = vmatpush2.msra.mxu0 0.0
    %2171 = vmatprep.subr.mxu0 0.0
    %2172 = vmatpush2.msra.mxu0 0.0
    %2173 = vmatprep.subr.mxu0 0.0
    %2174 = vmatpush2.msra.mxu0 0.0
    %2175 = vmatprep.subr.mxu0 0.0
    %2176 = vmatpush2.msra.mxu0 0.0
    %2177 = vmatprep.subr.mxu0 0.0
    %2178 = vmatpush2.msra.mxu0 0.0
    %2179 = vmatprep.subr.mxu0 0.0
    %2180 = vmatpush2.msra.mxu0 0.0
    %2181 = vmatprep.subr.mxu0 0.0
    %2182 = vmatpush2.msra.mxu0 0.0
    %2183 = vmatprep.subr.mxu0 0.0
    %2184 = vmatpush2.msra.mxu0 0.0
    %2185 = vmatprep.mubr.f32.mxu0 0.0
    %2186 = vmatmul.mubr.f32.gmra.mxu0 %v2116
    %v2187 = vpop.f32.mrf.mxu0
    %v2188 = vadd.f32 0.0, %v2187
    %v2189 = vpop.f32.mrf.mxu0
    %2190 = vmatprep.mubr.f32.mxu0 0.0
    %2191 = vmatmul.mubr.f32.gmra.mxu0 %v2119
    %v2192 = vpop.f32.mrf.mxu0
    %v2193 = vadd.f32 0.0, %v2192
    %v2194 = vpop.f32.mrf.mxu0
    %2195 = vdwg.mxu0
    %v2197 = vsel %vm574, %v2004, 0
    %v2200 = vsel %vm574, %v2005, 0
    %2202 = vmatprep.subr.mxu0 0.0
    %2203 = vmatpush1.msra.mxu0 0.0
    %2204 = vmatprep.subr.mxu0 0.0
    %2205 = vmatpush1.msra.mxu0 0.0
    %2206 = vmatprep.subr.mxu0 0.0
    %2207 = vmatpush1.msra.mxu0 0.0
    %2208 = vmatprep.subr.mxu0 0.0
    %2209 = vmatpush1.msra.mxu0 0.0
    %2210 = vmatprep.subr.mxu0 0.0
    %2211 = vmatpush1.msra.mxu0 0.0
    %2212 = vmatprep.subr.mxu0 0.0
    %2213 = vmatpush1.msra.mxu0 0.0
    %2214 = vmatprep.subr.mxu0 0.0
    %2215 = vmatpush1.msra.mxu0 0.0
    %2216 = vmatprep.subr.mxu0 0.0
    %2217 = vmatpush1.msra.mxu0 0.0
    %2218 = vmatprep.subr.mxu0 0.0
    %2219 = vmatpush1.msra.mxu0 0.0
    %2220 = vmatprep.subr.mxu0 0.0
    %2221 = vmatpush1.msra.mxu0 0.0
    %2222 = vmatprep.subr.mxu0 0.0
    %2223 = vmatpush1.msra.mxu0 0.0
    %2224 = vmatprep.subr.mxu0 0.0
    %2225 = vmatpush1.msra.mxu0 0.0
    %2226 = vmatprep.subr.mxu0 0.0
    %2227 = vmatpush1.msra.mxu0 0.0
    %2228 = vmatprep.subr.mxu0 0.0
    %2229 = vmatpush1.msra.mxu0 0.0
    %2230 = vmatprep.subr.mxu0 0.0
    %2231 = vmatpush1.msra.mxu0 %v2007
    %2232 = vmatprep.subr.mxu0 0.0
    %2233 = vmatpush1.msra.mxu0 %v2006
    %2234 = vmatprep.subr.mxu0 0.0
    %2235 = vmatpush2.msra.mxu0 0.0
    %2236 = vmatprep.subr.mxu0 0.0
    %2237 = vmatpush2.msra.mxu0 0.0
    %2238 = vmatprep.subr.mxu0 0.0
    %2239 = vmatpush2.msra.mxu0 0.0
    %2240 = vmatprep.subr.mxu0 0.0
    %2241 = vmatpush2.msra.mxu0 0.0
    %2242 = vmatprep.subr.mxu0 0.0
    %2243 = vmatpush2.msra.mxu0 0.0
    %2244 = vmatprep.subr.mxu0 0.0
    %2245 = vmatpush2.msra.mxu0 0.0
    %2246 = vmatprep.subr.mxu0 0.0
    %2247 = vmatpush2.msra.mxu0 0.0
    %2248 = vmatprep.subr.mxu0 0.0
    %2249 = vmatpush2.msra.mxu0 0.0
    %2250 = vmatprep.subr.mxu0 0.0
    %2251 = vmatpush2.msra.mxu0 0.0
    %2252 = vmatprep.subr.mxu0 0.0
    %2253 = vmatpush2.msra.mxu0 0.0
    %2254 = vmatprep.subr.mxu0 0.0
    %2255 = vmatpush2.msra.mxu0 0.0
    %2256 = vmatprep.subr.mxu0 0.0
    %2257 = vmatpush2.msra.mxu0 0.0
    %2258 = vmatprep.subr.mxu0 0.0
    %2259 = vmatpush2.msra.mxu0 0.0
    %2260 = vmatprep.subr.mxu0 0.0
    %2261 = vmatpush2.msra.mxu0 0.0
    %2262 = vmatprep.subr.mxu0 0.0
    %2263 = vmatpush2.msra.mxu0 0.0
    %2264 = vmatprep.subr.mxu0 0.0
    %2265 = vmatpush2.msra.mxu0 0.0
    %2266 = vmatprep.mubr.f32.mxu0 0.0
    %2267 = vmatmul.mubr.f32.gmra.mxu0 %v2197
    %v2268 = vpop.f32.mrf.mxu0
    %v2269 = vadd.f32 %v2188, %v2268
    %v2270 = vpop.f32.mrf.mxu0
    %2271 = vmatprep.mubr.f32.mxu0 0.0
    %2272 = vmatmul.mubr.f32.gmra.mxu0 %v2200
    %v2273 = vpop.f32.mrf.mxu0
    %v2274 = vadd.f32 %v2193, %v2273
    %v2275 = vpop.f32.mrf.mxu0
    %2276 = vdwg.mxu0
    %v2277 = vmul.f32 %v1711, %v218
    %v2278 = vmul.f32 %v1716, %v218
    %v2280 = vsel %vm231, %v2277, 0
    %v2283 = vsel %vm231, %v2278, 0
    %2285 = vmatprep.subr.mxu0 0.0
    %2286 = vmatpush1.xpose.msra.mxu0 0.0
    %2287 = vmatprep.subr.mxu0 0.0
    %2288 = vmatpush1.xpose.msra.mxu0 0.0
    %2289 = vmatprep.subr.mxu0 0.0
    %2290 = vmatpush1.xpose.msra.mxu0 0.0
    %2291 = vmatprep.subr.mxu0 0.0
    %2292 = vmatpush1.xpose.msra.mxu0 0.0
    %2293 = vmatprep.subr.mxu0 0.0
    %2294 = vmatpush1.xpose.msra.mxu0 0.0
    %2295 = vmatprep.subr.mxu0 0.0
    %2296 = vmatpush1.xpose.msra.mxu0 0.0
    %2297 = vmatprep.subr.mxu0 0.0
    %2298 = vmatpush1.xpose.msra.mxu0 0.0
    %2299 = vmatprep.subr.mxu0 0.0
    %2300 = vmatpush1.xpose.msra.mxu0 0.0
    %2301 = vmatprep.subr.mxu0 0.0
    %2302 = vmatpush1.xpose.msra.mxu0 0.0
    %2303 = vmatprep.subr.mxu0 0.0
    %2304 = vmatpush1.xpose.msra.mxu0 0.0
    %2305 = vmatprep.subr.mxu0 0.0
    %2306 = vmatpush1.xpose.msra.mxu0 0.0
    %2307 = vmatprep.subr.mxu0 0.0
    %2308 = vmatpush1.xpose.msra.mxu0 0.0
    %2309 = vmatprep.subr.mxu0 0.0
    %2310 = vmatpush1.xpose.msra.mxu0 0.0
    %2311 = vmatprep.subr.mxu0 0.0
    %2312 = vmatpush1.xpose.msra.mxu0 0.0
    %2313 = vmatprep.subr.mxu0 0.0
    %2314 = vmatpush1.xpose.msra.mxu0 %v1907
    %2315 = vmatprep.subr.mxu0 0.0
    %2316 = vmatpush1.xpose.msra.mxu0 %v1904
    %2317 = vmatprep.subr.mxu0 0.0
    %2318 = vmatpush2.xpose.msra.mxu0 0.0
    %2319 = vmatprep.subr.mxu0 0.0
    %2320 = vmatpush2.xpose.msra.mxu0 0.0
    %2321 = vmatprep.subr.mxu0 0.0
    %2322 = vmatpush2.xpose.msra.mxu0 0.0
    %2323 = vmatprep.subr.mxu0 0.0
    %2324 = vmatpush2.xpose.msra.mxu0 0.0
    %2325 = vmatprep.subr.mxu0 0.0
    %2326 = vmatpush2.xpose.msra.mxu0 0.0
    %2327 = vmatprep.subr.mxu0 0.0
    %2328 = vmatpush2.xpose.msra.mxu0 0.0
    %2329 = vmatprep.subr.mxu0 0.0
    %2330 = vmatpush2.xpose.msra.mxu0 0.0
    %2331 = vmatprep.subr.mxu0 0.0
    %2332 = vmatpush2.xpose.msra.mxu0 0.0
    %2333 = vmatprep.subr.mxu0 0.0
    %2334 = vmatpush2.xpose.msra.mxu0 0.0
    %2335 = vmatprep.subr.mxu0 0.0
    %2336 = vmatpush2.xpose.msra.mxu0 0.0
    %2337 = vmatprep.subr.mxu0 0.0
    %2338 = vmatpush2.xpose.msra.mxu0 0.0
    %2339 = vmatprep.subr.mxu0 0.0
    %2340 = vmatpush2.xpose.msra.mxu0 0.0
    %2341 = vmatprep.subr.mxu0 0.0
    %2342 = vmatpush2.xpose.msra.mxu0 0.0
    %2343 = vmatprep.subr.mxu0 0.0
    %2344 = vmatpush2.xpose.msra.mxu0 0.0
    %2345 = vmatprep.subr.mxu0 0.0
    %2346 = vmatpush2.xpose.msra.mxu0 0.0
    %2347 = vmatprep.subr.mxu0 0.0
    %2348 = vmatpush2.xpose.msra.mxu0 0.0
    %2349 = vmatprep.mubr.f32.mxu0 0.0
    %2350 = vmatmul.mubr.f32.gmra.mxu0 %v2280
    %v2351 = vpop.f32.mrf.mxu0
    %v2352 = vadd.f32 %v194, %v2351
    %v2353 = vpop.f32.mrf.mxu0
    %2354 = vmatprep.mubr.f32.mxu0 0.0
    %2355 = vmatmul.mubr.f32.gmra.mxu0 %v2283
    %v2356 = vpop.f32.mrf.mxu0
    %v2357 = vadd.f32 %v195, %v2356
    %v2358 = vpop.f32.mrf.mxu0
    %2359 = vdwg.mxu0
    %v2360 = vsel %vm574, %v2352, -inf
    %2361 = vmax.xlane.f32.xlu0 %v2360
    %v2362 = vpop.xlane.xlu0 %2361
    %v2363 = vsel %vm574, %v2357, -inf
    %2364 = vmax.xlane.f32.xlu0 %v2363
    %v2365 = vpop.xlane.xlu0 %2364
    %v2366 = vsub.f32 %v2352, %v2362
    %v2367 = vsub.f32 %v2357, %v2365
    %v2368 = vmul.f32 %v2366, 1.442695
    %v2369 = vpow.pop %v2368
    %v2370 = vmul.f32 %v2367, 1.442695
    %v2371 = vpow.pop %v2370
    %v2372 = vsel %vm574, %v2369, 0.0
    %2373 = vadd.xlane.f32.xlu0 %v2372
    %v2374 = vpop.xlane.xlu0 %2373
    %v2375 = vsel %vm574, %v2371, 0.0
    %2376 = vadd.xlane.f32.xlu0 %v2375
    %v2377 = vpop.xlane.xlu0 %2376
    %v2378 = vrcp.pop %v2374
    %v2379 = vrcp.pop %v2377
    %v2380 = vmul.f32 %v2369, %v2378
    %v2381 = vmul.f32 %v2371, %v2379
    %v2382 = vmul.f32 %v1887, %v210
    %v2383 = vmul.f32 %v1892, %v210
    %v2385 = vsel %vm574, %v2380, 0
    %v2388 = vsel %vm574, %v2381, 0
    %2390 = vmatprep.subr.mxu0 0.0
    %2391 = vmatpush1.msra.mxu0 0.0
    %2392 = vmatprep.subr.mxu0 0.0
    %2393 = vmatpush1.msra.mxu0 0.0
    %2394 = vmatprep.subr.mxu0 0.0
    %2395 = vmatpush1.msra.mxu0 0.0
    %2396 = vmatprep.subr.mxu0 0.0
    %2397 = vmatpush1.msra.mxu0 0.0
    %2398 = vmatprep.subr.mxu0 0.0
    %2399 = vmatpush1.msra.mxu0 0.0
    %2400 = vmatprep.subr.mxu0 0.0
    %2401 = vmatpush1.msra.mxu0 0.0
    %2402 = vmatprep.subr.mxu0 0.0
    %2403 = vmatpush1.msra.mxu0 0.0
    %2404 = vmatprep.subr.mxu0 0.0
    %2405 = vmatpush1.msra.mxu0 0.0
    %2406 = vmatprep.subr.mxu0 0.0
    %2407 = vmatpush1.msra.mxu0 0.0
    %2408 = vmatprep.subr.mxu0 0.0
    %2409 = vmatpush1.msra.mxu0 0.0
    %2410 = vmatprep.subr.mxu0 0.0
    %2411 = vmatpush1.msra.mxu0 0.0
    %2412 = vmatprep.subr.mxu0 0.0
    %2413 = vmatpush1.msra.mxu0 0.0
    %2414 = vmatprep.subr.mxu0 0.0
    %2415 = vmatpush1.msra.mxu0 0.0
    %2416 = vmatprep.subr.mxu0 0.0
    %2417 = vmatpush1.msra.mxu0 0.0
    %2418 = vmatprep.subr.mxu0 0.0
    %2419 = vmatpush1.msra.mxu0 %v2383
    %2420 = vmatprep.subr.mxu0 0.0
    %2421 = vmatpush1.msra.mxu0 %v2382
    %2422 = vmatprep.subr.mxu0 0.0
    %2423 = vmatpush2.msra.mxu0 0.0
    %2424 = vmatprep.subr.mxu0 0.0
    %2425 = vmatpush2.msra.mxu0 0.0
    %2426 = vmatprep.subr.mxu0 0.0
    %2427 = vmatpush2.msra.mxu0 0.0
    %2428 = vmatprep.subr.mxu0 0.0
    %2429 = vmatpush2.msra.mxu0 0.0
    %2430 = vmatprep.subr.mxu0 0.0
    %2431 = vmatpush2.msra.mxu0 0.0
    %2432 = vmatprep.subr.mxu0 0.0
    %2433 = vmatpush2.msra.mxu0 0.0
    %2434 = vmatprep.subr.mxu0 0.0
    %2435 = vmatpush2.msra.mxu0 0.0
    %2436 = vmatprep.subr.mxu0 0.0
    %2437 = vmatpush2.msra.mxu0 0.0
    %2438 = vmatprep.subr.mxu0 0.0
    %2439 = vmatpush2.msra.mxu0 0.0
    %2440 = vmatprep.subr.mxu0 0.0
    %2441 = vmatpush2.msra.mxu0 0.0
    %2442 = vmatprep.subr.mxu0 0.0
    %2443 = vmatpush2.msra.mxu0 0.0
    %2444 = vmatprep.subr.mxu0 0.0
    %2445 = vmatpush2.msra.mxu0 0.0
    %2446 = vmatprep.subr.mxu0 0.0
    %2447 = vmatpush2.msra.mxu0 0.0
    %2448 = vmatprep.subr.mxu0 0.0
    %2449 = vmatpush2.msra.mxu0 0.0
    %2450 = vmatprep.subr.mxu0 0.0
    %2451 = vmatpush2.msra.mxu0 0.0
    %2452 = vmatprep.subr.mxu0 0.0
    %2453 = vmatpush2.msra.mxu0 0.0
    %2454 = vmatprep.mubr.f32.mxu0 0.0
    %2455 = vmatmul.mubr.f32.gmra.mxu0 %v2385
    %v2456 = vpop.f32.mrf.mxu0
    %v2457 = vadd.f32 0.0, %v2456
    %v2458 = vpop.f32.mrf.mxu0
    %2459 = vmatprep.mubr.f32.mxu0 0.0
    %2460 = vmatmul.mubr.f32.gmra.mxu0 %v2388
    %v2461 = vpop.f32.mrf.mxu0
    %v2462 = vadd.f32 0.0, %v2461
    %v2463 = vpop.f32.mrf.mxu0
    %2464 = vdwg.mxu0
    %v2465 = vadd.f32 %v2269, %v2457
    %v2466 = vadd.f32 %v2274, %v2462
    %v2467 = vmul.f32 %v1711, %v219
    %v2468 = vmul.f32 %v1716, %v219
    %v2470 = vsel %vm231, %v2467, 0
    %v2473 = vsel %vm231, %v2468, 0
    %2475 = vmatprep.subr.mxu0 0.0
    %2476 = vmatpush1.xpose.msra.mxu0 0.0
    %2477 = vmatprep.subr.mxu0 0.0
    %2478 = vmatpush1.xpose.msra.mxu0 0.0
    %2479 = vmatprep.subr.mxu0 0.0
    %2480 = vmatpush1.xpose.msra.mxu0 0.0
    %2481 = vmatprep.subr.mxu0 0.0
    %2482 = vmatpush1.xpose.msra.mxu0 0.0
    %2483 = vmatprep.subr.mxu0 0.0
    %2484 = vmatpush1.xpose.msra.mxu0 0.0
    %2485 = vmatprep.subr.mxu0 0.0
    %2486 = vmatpush1.xpose.msra.mxu0 0.0
    %2487 = vmatprep.subr.mxu0 0.0
    %2488 = vmatpush1.xpose.msra.mxu0 0.0
    %2489 = vmatprep.subr.mxu0 0.0
    %2490 = vmatpush1.xpose.msra.mxu0 0.0
    %2491 = vmatprep.subr.mxu0 0.0
    %2492 = vmatpush1.xpose.msra.mxu0 0.0
    %2493 = vmatprep.subr.mxu0 0.0
    %2494 = vmatpush1.xpose.msra.mxu0 0.0
    %2495 = vmatprep.subr.mxu0 0.0
    %2496 = vmatpush1.xpose.msra.mxu0 0.0
    %2497 = vmatprep.subr.mxu0 0.0
    %2498 = vmatpush1.xpose.msra.mxu0 0.0
    %2499 = vmatprep.subr.mxu0 0.0
    %2500 = vmatpush1.xpose.msra.mxu0 0.0
    %2501 = vmatprep.subr.mxu0 0.0
    %2502 = vmatpush1.xpose.msra.mxu0 0.0
    %2503 = vmatprep.subr.mxu0 0.0
    %2504 = vmatpush1.xpose.msra.mxu0 %v1907
    %2505 = vmatprep.subr.mxu0 0.0
    %2506 = vmatpush1.xpose.msra.mxu0 %v1904
    %2507 = vmatprep.subr.mxu0 0.0
    %2508 = vmatpush2.xpose.msra.mxu0 0.0
    %2509 = vmatprep.subr.mxu0 0.0
    %2510 = vmatpush2.xpose.msra.mxu0 0.0
    %2511 = vmatprep.subr.mxu0 0.0
    %2512 = vmatpush2.xpose.msra.mxu0 0.0
    %2513 = vmatprep.subr.mxu0 0.0
    %2514 = vmatpush2.xpose.msra.mxu0 0.0
    %2515 = vmatprep.subr.mxu0 0.0
    %2516 = vmatpush2.xpose.msra.mxu0 0.0
    %2517 = vmatprep.subr.mxu0 0.0
    %2518 = vmatpush2.xpose.msra.mxu0 0.0
    %2519 = vmatprep.subr.mxu0 0.0
    %2520 = vmatpush2.xpose.msra.mxu0 0.0
    %2521 = vmatprep.subr.mxu0 0.0
    %2522 = vmatpush2.xpose.msra.mxu0 0.0
    %2523 = vmatprep.subr.mxu0 0.0
    %2524 = vmatpush2.xpose.msra.mxu0 0.0
    %2525 = vmatprep.subr.mxu0 0.0
    %2526 = vmatpush2.xpose.msra.mxu0 0.0
    %2527 = vmatprep.subr.mxu0 0.0
    %2528 = vmatpush2.xpose.msra.mxu0 0.0
    %2529 = vmatprep.subr.mxu0 0.0
    %2530 = vmatpush2.xpose.msra.mxu0 0.0
    %2531 = vmatprep.subr.mxu0 0.0
    %2532 = vmatpush2.xpose.msra.mxu0 0.0
    %2533 = vmatprep.subr.mxu0 0.0
    %2534 = vmatpush2.xpose.msra.mxu0 0.0
    %2535 = vmatprep.subr.mxu0 0.0
    %2536 = vmatpush2.xpose.msra.mxu0 0.0
    %2537 = vmatprep.subr.mxu0 0.0
    %2538 = vmatpush2.xpose.msra.mxu0 0.0
    %2539 = vmatprep.mubr.f32.mxu0 0.0
    %2540 = vmatmul.mubr.f32.gmra.mxu0 %v2470
    %v2541 = vpop.f32.mrf.mxu0
    %v2542 = vadd.f32 %v194, %v2541
    %v2543 = vpop.f32.mrf.mxu0
    %2544 = vmatprep.mubr.f32.mxu0 0.0
    %2545 = vmatmul.mubr.f32.gmra.mxu0 %v2473
    %v2546 = vpop.f32.mrf.mxu0
    %v2547 = vadd.f32 %v195, %v2546
    %v2548 = vpop.f32.mrf.mxu0
    %2549 = vdwg.mxu0
    %v2550 = vsel %vm574, %v2542, -inf
    %2551 = vmax.xlane.f32.xlu0 %v2550
    %v2552 = vpop.xlane.xlu0 %2551
    %v2553 = vsel %vm574, %v2547, -inf
    %2554 = vmax.xlane.f32.xlu0 %v2553
    %v2555 = vpop.xlane.xlu0 %2554
    %v2556 = vsub.f32 %v2542, %v2552
    %v2557 = vsub.f32 %v2547, %v2555
    %v2558 = vmul.f32 %v2556, 1.442695
    %v2559 = vpow.pop %v2558
    %v2560 = vmul.f32 %v2557, 1.442695
    %v2561 = vpow.pop %v2560
    %v2562 = vsel %vm574, %v2559, 0.0
    %2563 = vadd.xlane.f32.xlu0 %v2562
    %v2564 = vpop.xlane.xlu0 %2563
    %v2565 = vsel %vm574, %v2561, 0.0
    %2566 = vadd.xlane.f32.xlu0 %v2565
    %v2567 = vpop.xlane.xlu0 %2566
    %v2568 = vrcp.pop %v2564
    %v2569 = vrcp.pop %v2567
    %v2570 = vmul.f32 %v2559, %v2568
    %v2571 = vmul.f32 %v2561, %v2569
    %v2572 = vmul.f32 %v1887, %v215
    %v2573 = vmul.f32 %v1892, %v215
    %v2575 = vsel %vm574, %v2570, 0
    %v2578 = vsel %vm574, %v2571, 0
    %2580 = vmatprep.subr.mxu0 0.0
    %2581 = vmatpush1.msra.mxu0 0.0
    %2582 = vmatprep.subr.mxu0 0.0
    %2583 = vmatpush1.msra.mxu0 0.0
    %2584 = vmatprep.subr.mxu0 0.0
    %2585 = vmatpush1.msra.mxu0 0.0
    %2586 = vmatprep.subr.mxu0 0.0
    %2587 = vmatpush1.msra.mxu0 0.0
    %2588 = vmatprep.subr.mxu0 0.0
    %2589 = vmatpush1.msra.mxu0 0.0
    %2590 = vmatprep.subr.mxu0 0.0
    %2591 = vmatpush1.msra.mxu0 0.0
    %2592 = vmatprep.subr.mxu0 0.0
    %2593 = vmatpush1.msra.mxu0 0.0
    %2594 = vmatprep.subr.mxu0 0.0
    %2595 = vmatpush1.msra.mxu0 0.0
    %2596 = vmatprep.subr.mxu0 0.0
    %2597 = vmatpush1.msra.mxu0 0.0
    %2598 = vmatprep.subr.mxu0 0.0
    %2599 = vmatpush1.msra.mxu0 0.0
    %2600 = vmatprep.subr.mxu0 0.0
    %2601 = vmatpush1.msra.mxu0 0.0
    %2602 = vmatprep.subr.mxu0 0.0
    %2603 = vmatpush1.msra.mxu0 0.0
    %2604 = vmatprep.subr.mxu0 0.0
    %2605 = vmatpush1.msra.mxu0 0.0
    %2606 = vmatprep.subr.mxu0 0.0
    %2607 = vmatpush1.msra.mxu0 0.0
    %2608 = vmatprep.subr.mxu0 0.0
    %2609 = vmatpush1.msra.mxu0 %v2573
    %2610 = vmatprep.subr.mxu0 0.0
    %2611 = vmatpush1.msra.mxu0 %v2572
    %2612 = vmatprep.subr.mxu0 0.0
    %2613 = vmatpush2.msra.mxu0 0.0
    %2614 = vmatprep.subr.mxu0 0.0
    %2615 = vmatpush2.msra.mxu0 0.0
    %2616 = vmatprep.subr.mxu0 0.0
    %2617 = vmatpush2.msra.mxu0 0.0
    %2618 = vmatprep.subr.mxu0 0.0
    %2619 = vmatpush2.msra.mxu0 0.0
    %2620 = vmatprep.subr.mxu0 0.0
    %2621 = vmatpush2.msra.mxu0 0.0
    %2622 = vmatprep.subr.mxu0 0.0
    %2623 = vmatpush2.msra.mxu0 0.0
    %2624 = vmatprep.subr.mxu0 0.0
    %2625 = vmatpush2.msra.mxu0 0.0
    %2626 = vmatprep.subr.mxu0 0.0
    %2627 = vmatpush2.msra.mxu0 0.0
    %2628 = vmatprep.subr.mxu0 0.0
    %2629 = vmatpush2.msra.mxu0 0.0
    %2630 = vmatprep.subr.mxu0 0.0
    %2631 = vmatpush2.msra.mxu0 0.0
    %2632 = vmatprep.subr.mxu0 0.0
    %2633 = vmatpush2.msra.mxu0 0.0
    %2634 = vmatprep.subr.mxu0 0.0
    %2635 = vmatpush2.msra.mxu0 0.0
    %2636 = vmatprep.subr.mxu0 0.0
    %2637 = vmatpush2.msra.mxu0 0.0
    %2638 = vmatprep.subr.mxu0 0.0
    %2639 = vmatpush2.msra.mxu0 0.0
    %2640 = vmatprep.subr.mxu0 0.0
    %2641 = vmatpush2.msra.mxu0 0.0
    %2642 = vmatprep.subr.mxu0 0.0
    %2643 = vmatpush2.msra.mxu0 0.0
    %2644 = vmatprep.mubr.f32.mxu0 0.0
    %2645 = vmatmul.mubr.f32.gmra.mxu0 %v2575
    %v2646 = vpop.f32.mrf.mxu0
    %v2647 = vadd.f32 0.0, %v2646
    %v2648 = vpop.f32.mrf.mxu0
    %2649 = vmatprep.mubr.f32.mxu0 0.0
    %2650 = vmatmul.mubr.f32.gmra.mxu0 %v2578
    %v2651 = vpop.f32.mrf.mxu0
    %v2652 = vadd.f32 0.0, %v2651
    %v2653 = vpop.f32.mrf.mxu0
    %2654 = vdwg.mxu0
    %v2655 = vadd.f32 %v2465, %v2647
    %v2656 = vadd.f32 %v2466, %v2652
    %s2657 = scalar_lea.vmem %s10, 32
    %v2658 = vld [vmem:[%s2657] sm:$0xff]
    %v2659 = vld [vmem:[%s2657 + $0x8] sm:$0xff]
    %v2660 = vld [vmem:[%s2657 + $0x10] sm:$0xff]
    %v2661 = vld [vmem:[%s2657 + $0x18] sm:$0xff]
    %s2662 = scalar_lea.vmem %s11, 1
    %v2663 = vld [vmem:[%s2662] sm:$0x1]
    %v2665 = vlaneseq
    %v2666 = vshrl.u32 %v2665, 7
    %v2667 = vsub.s32 0, %v2666
    %v2668 = vrot.slane %v2663, %v2667
    %v2671 = vsel %vm231, %v2655, 0
    %v2674 = vsel %vm231, %v2656, 0
    %2676 = vmatprep.subr.mxu0 0.0
    %2677 = vmatpush1.msra.mxu0 0.0
    %2678 = vmatprep.subr.mxu0 0.0
    %2679 = vmatpush1.msra.mxu0 0.0
    %2680 = vmatprep.subr.mxu0 0.0
    %2681 = vmatpush1.msra.mxu0 0.0
    %2682 = vmatprep.subr.mxu0 0.0
    %2683 = vmatpush1.msra.mxu0 0.0
    %2684 = vmatprep.subr.mxu0 0.0
    %2685 = vmatpush1.msra.mxu0 0.0
    %2686 = vmatprep.subr.mxu0 0.0
    %2687 = vmatpush1.msra.mxu0 0.0
    %2688 = vmatprep.subr.mxu0 0.0
    %2689 = vmatpush1.msra.mxu0 0.0
    %2690 = vmatprep.subr.mxu0 0.0
    %2691 = vmatpush1.msra.mxu0 0.0
    %2692 = vmatprep.subr.mxu0 0.0
    %2693 = vmatpush1.msra.mxu0 0.0
    %2694 = vmatprep.subr.mxu0 0.0
    %2695 = vmatpush1.msra.mxu0 0.0
    %2696 = vmatprep.subr.mxu0 0.0
    %2697 = vmatpush1.msra.mxu0 0.0
    %2698 = vmatprep.subr.mxu0 0.0
    %2699 = vmatpush1.msra.mxu0 0.0
    %2700 = vmatprep.subr.mxu0 0.0
    %2701 = vmatpush1.msra.mxu0 %v2661
    %2702 = vmatprep.subr.mxu0 0.0
    %2703 = vmatpush1.msra.mxu0 %v2660
    %2704 = vmatprep.subr.mxu0 0.0
    %2705 = vmatpush1.msra.mxu0 %v2659
    %2706 = vmatprep.subr.mxu0 0.0
    %2707 = vmatpush1.msra.mxu0 %v2658
    %2708 = vmatprep.subr.mxu0 0.0
    %2709 = vmatpush2.msra.mxu0 0.0
    %2710 = vmatprep.subr.mxu0 0.0
    %2711 = vmatpush2.msra.mxu0 0.0
    %2712 = vmatprep.subr.mxu0 0.0
    %2713 = vmatpush2.msra.mxu0 0.0
    %2714 = vmatprep.subr.mxu0 0.0
    %2715 = vmatpush2.msra.mxu0 0.0
    %2716 = vmatprep.subr.mxu0 0.0
    %2717 = vmatpush2.msra.mxu0 0.0
    %2718 = vmatprep.subr.mxu0 0.0
    %2719 = vmatpush2.msra.mxu0 0.0
    %2720 = vmatprep.subr.mxu0 0.0
    %2721 = vmatpush2.msra.mxu0 0.0
    %2722 = vmatprep.subr.mxu0 0.0
    %2723 = vmatpush2.msra.mxu0 0.0
    %2724 = vmatprep.subr.mxu0 0.0
    %2725 = vmatpush2.msra.mxu0 0.0
    %2726 = vmatprep.subr.mxu0 0.0
    %2727 = vmatpush2.msra.mxu0 0.0
    %2728 = vmatprep.subr.mxu0 0.0
    %2729 = vmatpush2.msra.mxu0 0.0
    %2730 = vmatprep.subr.mxu0 0.0
    %2731 = vmatpush2.msra.mxu0 0.0
    %2732 = vmatprep.subr.mxu0 0.0
    %2733 = vmatpush2.msra.mxu0 0.0
    %2734 = vmatprep.subr.mxu0 0.0
    %2735 = vmatpush2.msra.mxu0 0.0
    %2736 = vmatprep.subr.mxu0 0.0
    %2737 = vmatpush2.msra.mxu0 0.0
    %2738 = vmatprep.subr.mxu0 0.0
    %2739 = vmatpush2.msra.mxu0 0.0
    %2740 = vmatprep.mubr.f32.mxu0 0.0
    %2741 = vmatmul.mubr.f32.gmra.mxu0 %v2671
    %v2742 = vpop.f32.mrf.mxu0
    %v2743 = vadd.f32 %v2668, %v2742
    %v2744 = vpop.f32.mrf.mxu0
    %2745 = vmatprep.mubr.f32.mxu0 0.0
    %2746 = vmatmul.mubr.f32.gmra.mxu0 %v2674
    %v2747 = vpop.f32.mrf.mxu0
    %v2748 = vadd.f32 %v2668, %v2747
    %v2749 = vpop.f32.mrf.mxu0
    %2750 = vdwg.mxu0
    %v2751 = vadd.f32 %v2743, %v1623
    %v2752 = vadd.f32 %v2748, %v1624
    %s2753 = scalar_lea.vmem %s12, 1
    %v2754 = vld [vmem:[%s2753] sm:$0x1]
    %s2755 = scalar_lea.vmem %s13, 1
    %v2756 = vld [vmem:[%s2755] sm:$0x1]
    %v2757 = vsel %vm231, %v2751, 0.0
    %2758 = vadd.xlane.f32.xlu0 %v2757
    %v2759 = vpop.xlane.xlu0 %2758
    %v2760 = vsel %vm231, %v2752, 0.0
    %2761 = vadd.xlane.f32.xlu0 %v2760
    %v2762 = vpop.xlane.xlu0 %2761
    %v2763 = vmul.f32 %v2759, %v1350
    %v2764 = vmul.f32 %v2762, %v1350
    %v2765 = vsub.f32 %v2751, %v2763
    %v2766 = vsub.f32 %v2752, %v2764
    %v2767 = vmul.f32 %v2765, %v2765
    %v2768 = vmul.f32 %v2766, %v2766
    %v2769 = vsel %vm231, %v2767, 0.0
    %2770 = vadd.xlane.f32.xlu0 %v2769
    %v2771 = vpop.xlane.xlu0 %2770
    %v2772 = vsel %vm231, %v2768, 0.0
    %2773 = vadd.xlane.f32.xlu0 %v2772
    %v2774 = vpop.xlane.xlu0 %2773
    %v2775 = vmul.f32 %v2771, %v1350
    %v2776 = vmul.f32 %v2774, %v1350
    %v2777 = vadd.f32 %v2775, 1e-05
    %v2778 = vadd.f32 %v2776, 1e-05
    %v2779 = vrsqrt.pop %v2777
    %v2780 = vrsqrt.pop %v2778
    %v2781 = vmul.f32 %v2765, %v2779
    %v2782 = vmul.f32 %v2766, %v2780
    %v2784 = vlaneseq
    %v2785 = vshrl.u32 %v2784, 7
    %v2786 = vsub.s32 0, %v2785
    %v2787 = vrot.slane %v2754, %v2786
    %v2789 = vmul.f32 %v2781, %v2787
    %v2790 = vmul.f32 %v2782, %v2787
    %v2792 = vlaneseq
    %v2793 = vshrl.u32 %v2792, 7
    %v2794 = vsub.s32 0, %v2793
    %v2795 = vrot.slane %v2756, %v2794
    %v2797 = vadd.f32 %v2789, %v2795
    %v2798 = vadd.f32 %v2790, %v2795
    %s2799 = scalar_lea.vmem %s16, 32
    %v2800 = vld [vmem:[%s2799] sm:$0xff]
    %v2801 = vld [vmem:[%s2799 + $0x8] sm:$0xff]
    %v2802 = vld [vmem:[%s2799 + $0x10] sm:$0xff]
    %v2803 = vld [vmem:[%s2799 + $0x18] sm:$0xff]
    %s2804 = scalar_lea.vmem %s17, 1
    %v2805 = vld [vmem:[%s2804] sm:$0x1]
    %v2807 = vlaneseq
    %v2808 = vshrl.u32 %v2807, 7
    %v2809 = vsub.s32 0, %v2808
    %v2810 = vrot.slane %v2805, %v2809
    %v2813 = vsel %vm231, %v2797, 0
    %v2816 = vsel %vm231, %v2798, 0
    %2818 = vmatprep.subr.mxu0 0.0
    %2819 = vmatpush1.msra.mxu0 0.0
    %2820 = vmatprep.subr.mxu0 0.0
    %2821 = vmatpush1.msra.mxu0 0.0
    %2822 = vmatprep.subr.mxu0 0.0
    %2823 = vmatpush1.msra.mxu0 0.0
    %2824 = vmatprep.subr.mxu0 0.0
    %2825 = vmatpush1.msra.mxu0 0.0
    %2826 = vmatprep.subr.mxu0 0.0
    %2827 = vmatpush1.msra.mxu0 0.0
    %2828 = vmatprep.subr.mxu0 0.0
    %2829 = vmatpush1.msra.mxu0 0.0
    %2830 = vmatprep.subr.mxu0 0.0
    %2831 = vmatpush1.msra.mxu0 0.0
    %2832 = vmatprep.subr.mxu0 0.0
    %2833 = vmatpush1.msra.mxu0 0.0
    %2834 = vmatprep.subr.mxu0 0.0
    %2835 = vmatpush1.msra.mxu0 0.0
    %2836 = vmatprep.subr.mxu0 0.0
    %2837 = vmatpush1.msra.mxu0 0.0
    %2838 = vmatprep.subr.mxu0 0.0
    %2839 = vmatpush1.msra.mxu0 0.0
    %2840 = vmatprep.subr.mxu0 0.0
    %2841 = vmatpush1.msra.mxu0 0.0
    %2842 = vmatprep.subr.mxu0 0.0
    %2843 = vmatpush1.msra.mxu0 %v2803
    %2844 = vmatprep.subr.mxu0 0.0
    %2845 = vmatpush1.msra.mxu0 %v2802
    %2846 = vmatprep.subr.mxu0 0.0
    %2847 = vmatpush1.msra.mxu0 %v2801
    %2848 = vmatprep.subr.mxu0 0.0
    %2849 = vmatpush1.msra.mxu0 %v2800
    %2850 = vmatprep.subr.mxu0 0.0
    %2851 = vmatpush2.msra.mxu0 0.0
    %2852 = vmatprep.subr.mxu0 0.0
    %2853 = vmatpush2.msra.mxu0 0.0
    %2854 = vmatprep.subr.mxu0 0.0
    %2855 = vmatpush2.msra.mxu0 0.0
    %2856 = vmatprep.subr.mxu0 0.0
    %2857 = vmatpush2.msra.mxu0 0.0
    %2858 = vmatprep.subr.mxu0 0.0
    %2859 = vmatpush2.msra.mxu0 0.0
    %2860 = vmatprep.subr.mxu0 0.0
    %2861 = vmatpush2.msra.mxu0 0.0
    %2862 = vmatprep.subr.mxu0 0.0
    %2863 = vmatpush2.msra.mxu0 0.0
    %2864 = vmatprep.subr.mxu0 0.0
    %2865 = vmatpush2.msra.mxu0 0.0
    %2866 = vmatprep.subr.mxu0 0.0
    %2867 = vmatpush2.msra.mxu0 0.0
    %2868 = vmatprep.subr.mxu0 0.0
    %2869 = vmatpush2.msra.mxu0 0.0
    %2870 = vmatprep.subr.mxu0 0.0
    %2871 = vmatpush2.msra.mxu0 0.0
    %2872 = vmatprep.subr.mxu0 0.0
    %2873 = vmatpush2.msra.mxu0 0.0
    %2874 = vmatprep.subr.mxu0 0.0
    %2875 = vmatpush2.msra.mxu0 0.0
    %2876 = vmatprep.subr.mxu0 0.0
    %2877 = vmatpush2.msra.mxu0 0.0
    %2878 = vmatprep.subr.mxu0 0.0
    %2879 = vmatpush2.msra.mxu0 0.0
    %2880 = vmatprep.subr.mxu0 0.0
    %2881 = vmatpush2.msra.mxu0 0.0
    %2882 = vmatprep.mubr.f32.mxu0 0.0
    %2883 = vmatmul.mubr.f32.gmra.mxu0 %v2813
    %v2884 = vpop.f32.mrf.mxu0
    %v2885 = vadd.f32 %v2810, %v2884
    %v2886 = vpop.f32.mrf.mxu0
    %2887 = vmatprep.mubr.f32.mxu0 0.0
    %2888 = vmatmul.mubr.f32.gmra.mxu0 %v2816
    %v2889 = vpop.f32.mrf.mxu0
    %v2890 = vadd.f32 %v2810, %v2889
    %v2891 = vpop.f32.mrf.mxu0
    %2892 = vdwg.mxu0
    %v2893 = vmax.f32 %v2885, 0.0
    %v2894 = vmax.f32 %v2890, 0.0
    %s2895 = scalar_lea.vmem %s18, 128
    %v2896 = vld [vmem:[%s2895] sm:$0xff]
    %v2897 = vld [vmem:[%s2895 + $0x8] sm:$0xff]
    %v2898 = vld [vmem:[%s2895 + $0x10] sm:$0xff]
    %v2899 = vld [vmem:[%s2895 + $0x18] sm:$0xff]
    %v2900 = vld [vmem:[%s2895 + $0x20] sm:$0xff]
    %v2901 = vld [vmem:[%s2895 + $0x28] sm:$0xff]
    %v2902 = vld [vmem:[%s2895 + $0x30] sm:$0xff]
    %v2903 = vld [vmem:[%s2895 + $0x38] sm:$0xff]
    %v2904 = vld [vmem:[%s2895 + $0x40] sm:$0xff]
    %v2905 = vld [vmem:[%s2895 + $0x48] sm:$0xff]
    %v2906 = vld [vmem:[%s2895 + $0x50] sm:$0xff]
    %v2907 = vld [vmem:[%s2895 + $0x58] sm:$0xff]
    %v2908 = vld [vmem:[%s2895 + $0x60] sm:$0xff]
    %v2909 = vld [vmem:[%s2895 + $0x68] sm:$0xff]
    %v2910 = vld [vmem:[%s2895 + $0x70] sm:$0xff]
    %v2911 = vld [vmem:[%s2895 + $0x78] sm:$0xff]
    %s2912 = scalar_lea.vmem %s19, 1
    %v2913 = vld [vmem:[%s2912] sm:$0x1]
    %v2915 = vlaneseq
    %v2916 = vshrl.u32 %v2915, 7
    %v2917 = vsub.s32 0, %v2916
    %v2918 = vrot.slane %v2913, %v2917
    %2920 = vmatprep.subr.mxu0 0.0
    %2921 = vmatpush1.msra.mxu0 %v2911
    %2922 = vmatprep.subr.mxu0 0.0
    %2923 = vmatpush1.msra.mxu0 %v2910
    %2924 = vmatprep.subr.mxu0 0.0
    %2925 = vmatpush1.msra.mxu0 %v2909
    %2926 = vmatprep.subr.mxu0 0.0
    %2927 = vmatpush1.msra.mxu0 %v2908
    %2928 = vmatprep.subr.mxu0 0.0
    %2929 = vmatpush1.msra.mxu0 %v2907
    %2930 = vmatprep.subr.mxu0 0.0
    %2931 = vmatpush1.msra.mxu0 %v2906
    %2932 = vmatprep.subr.mxu0 0.0
    %2933 = vmatpush1.msra.mxu0 %v2905
    %2934 = vmatprep.subr.mxu0 0.0
    %2935 = vmatpush1.msra.mxu0 %v2904
    %2936 = vmatprep.subr.mxu0 0.0
    %2937 = vmatpush1.msra.mxu0 %v2903
    %2938 = vmatprep.subr.mxu0 0.0
    %2939 = vmatpush1.msra.mxu0 %v2902
    %2940 = vmatprep.subr.mxu0 0.0
    %2941 = vmatpush1.msra.mxu0 %v2901
    %2942 = vmatprep.subr.mxu0 0.0
    %2943 = vmatpush1.msra.mxu0 %v2900
    %2944 = vmatprep.subr.mxu0 0.0
    %2945 = vmatpush1.msra.mxu0 %v2899
    %2946 = vmatprep.subr.mxu0 0.0
    %2947 = vmatpush1.msra.mxu0 %v2898
    %2948 = vmatprep.subr.mxu0 0.0
    %2949 = vmatpush1.msra.mxu0 %v2897
    %2950 = vmatprep.subr.mxu0 0.0
    %2951 = vmatpush1.msra.mxu0 %v2896
    %2952 = vmatprep.subr.mxu0 0.0
    %2953 = vmatpush2.msra.mxu0 0.0
    %2954 = vmatprep.subr.mxu0 0.0
    %2955 = vmatpush2.msra.mxu0 0.0
    %2956 = vmatprep.subr.mxu0 0.0
    %2957 = vmatpush2.msra.mxu0 0.0
    %2958 = vmatprep.subr.mxu0 0.0
    %2959 = vmatpush2.msra.mxu0 0.0
    %2960 = vmatprep.subr.mxu0 0.0
    %2961 = vmatpush2.msra.mxu0 0.0
    %2962 = vmatprep.subr.mxu0 0.0
    %2963 = vmatpush2.msra.mxu0 0.0
    %2964 = vmatprep.subr.mxu0 0.0
    %2965 = vmatpush2.msra.mxu0 0.0
    %2966 = vmatprep.subr.mxu0 0.0
    %2967 = vmatpush2.msra.mxu0 0.0
    %2968 = vmatprep.subr.mxu0 0.0
    %2969 = vmatpush2.msra.mxu0 0.0
    %2970 = vmatprep.subr.mxu0 0.0
    %2971 = vmatpush2.msra.mxu0 0.0
    %2972 = vmatprep.subr.mxu0 0.0
    %2973 = vmatpush2.msra.mxu0 0.0
    %2974 = vmatprep.subr.mxu0 0.0
    %2975 = vmatpush2.msra.mxu0 0.0
    %2976 = vmatprep.subr.mxu0 0.0
    %2977 = vmatpush2.msra.mxu0 0.0
    %2978 = vmatprep.subr.mxu0 0.0
    %2979 = vmatpush2.msra.mxu0 0.0
    %2980 = vmatprep.subr.mxu0 0.0
    %2981 = vmatpush2.msra.mxu0 0.0
    %2982 = vmatprep.subr.mxu0 0.0
    %2983 = vmatpush2.msra.mxu0 0.0
    %2984 = vmatprep.mubr.f32.mxu0 0.0
    %2985 = vmatmul.mubr.f32.gmra.mxu0 %v2893
    %v2986 = vpop.f32.mrf.mxu0
    %v2987 = vadd.f32 %v2918, %v2986
    %v2988 = vpop.f32.mrf.mxu0
    %2989 = vmatprep.mubr.f32.mxu0 0.0
    %2990 = vmatmul.mubr.f32.gmra.mxu0 %v2894
    %v2991 = vpop.f32.mrf.mxu0
    %v2992 = vadd.f32 %v2918, %v2991
    %v2993 = vpop.f32.mrf.mxu0
    %2994 = vdwg.mxu0
    %v2995 = vadd.f32 %v2987, %v2797
    %v2996 = vadd.f32 %v2992, %v2798
    %s2997 = scalar_lea.vmem %s14, 1
    %v2998 = vld [vmem:[%s2997] sm:$0x1]
    %s2999 = scalar_lea.vmem %s15, 1
    %v3000 = vld [vmem:[%s2999] sm:$0x1]
    %v3001 = vsel %vm231, %v2995, 0.0
    %3002 = vadd.xlane.f32.xlu0 %v3001
    %v3003 = vpop.xlane.xlu0 %3002
    %v3004 = vsel %vm231, %v2996, 0.0
    %3005 = vadd.xlane.f32.xlu0 %v3004
    %v3006 = vpop.xlane.xlu0 %3005
    %v3007 = vmul.f32 %v3003, %v1350
    %v3008 = vmul.f32 %v3006, %v1350
    %v3009 = vsub.f32 %v2995, %v3007
    %v3010 = vsub.f32 %v2996, %v3008
    %v3011 = vmul.f32 %v3009, %v3009
    %v3012 = vmul.f32 %v3010, %v3010
    %v3013 = vsel %vm231, %v3011, 0.0
    %3014 = vadd.xlane.f32.xlu0 %v3013
    %v3015 = vpop.xlane.xlu0 %3014
    %v3016 = vsel %vm231, %v3012, 0.0
    %3017 = vadd.xlane.f32.xlu0 %v3016
    %v3018 = vpop.xlane.xlu0 %3017
    %v3019 = vmul.f32 %v3015, %v1350
    %v3020 = vmul.f32 %v3018, %v1350
    %v3021 = vadd.f32 %v3019, 1e-05
    %v3022 = vadd.f32 %v3020, 1e-05
    %v3023 = vrsqrt.pop %v3021
    %v3024 = vrsqrt.pop %v3022
    %v3025 = vmul.f32 %v3009, %v3023
    %v3026 = vmul.f32 %v3010, %v3024
    %v3028 = vlaneseq
    %v3029 = vshrl.u32 %v3028, 7
    %v3030 = vsub.s32 0, %v3029
    %v3031 = vrot.slane %v2998, %v3030
    %v3033 = vmul.f32 %v3025, %v3031
    %v3034 = vmul.f32 %v3026, %v3031
    %v3036 = vlaneseq
    %v3037 = vshrl.u32 %v3036, 7
    %v3038 = vsub.s32 0, %v3037
    %v3039 = vrot.slane %v3000, %v3038
    %v3041 = vadd.f32 %v3033, %v3039
    %v3042 = vadd.f32 %v3034, %v3039
    %v3043 = vld [vmem:[%s20] sm:$0xff]
    %v3044 = vld [vmem:[%s20 + $0x8] sm:$0xff]
    %v3045 = vld [vmem:[%s20 + $0x10] sm:$0xff]
    %v3046 = vld [vmem:[%s20 + $0x18] sm:$0xff]
    %v3047 = vld [vmem:[%s21] sm:$0x1]
    %v3049 = vlaneseq
    %v3050 = vshrl.u32 %v3049, 7
    %v3051 = vsub.s32 0, %v3050
    %v3052 = vrot.slane %v3047, %v3051
    %v3055 = vsel %vm231, %v3041, 0
    %v3058 = vsel %vm231, %v3042, 0
    %3060 = vmatprep.subr.mxu0 0.0
    %3061 = vmatpush1.msra.mxu0 0.0
    %3062 = vmatprep.subr.mxu0 0.0
    %3063 = vmatpush1.msra.mxu0 0.0
    %3064 = vmatprep.subr.mxu0 0.0
    %3065 = vmatpush1.msra.mxu0 0.0
    %3066 = vmatprep.subr.mxu0 0.0
    %3067 = vmatpush1.msra.mxu0 0.0
    %3068 = vmatprep.subr.mxu0 0.0
    %3069 = vmatpush1.msra.mxu0 0.0
    %3070 = vmatprep.subr.mxu0 0.0
    %3071 = vmatpush1.msra.mxu0 0.0
    %3072 = vmatprep.subr.mxu0 0.0
    %3073 = vmatpush1.msra.mxu0 0.0
    %3074 = vmatprep.subr.mxu0 0.0
    %3075 = vmatpush1.msra.mxu0 0.0
    %3076 = vmatprep.subr.mxu0 0.0
    %3077 = vmatpush1.msra.mxu0 0.0
    %3078 = vmatprep.subr.mxu0 0.0
    %3079 = vmatpush1.msra.mxu0 0.0
    %3080 = vmatprep.subr.mxu0 0.0
    %3081 = vmatpush1.msra.mxu0 0.0
    %3082 = vmatprep.subr.mxu0 0.0
    %3083 = vmatpush1.msra.mxu0 0.0
    %3084 = vmatprep.subr.mxu0 0.0
    %3085 = vmatpush1.msra.mxu0 %v3046
    %3086 = vmatprep.subr.mxu0 0.0
    %3087 = vmatpush1.msra.mxu0 %v3045
    %3088 = vmatprep.subr.mxu0 0.0
    %3089 = vmatpush1.msra.mxu0 %v3044
    %3090 = vmatprep.subr.mxu0 0.0
    %3091 = vmatpush1.msra.mxu0 %v3043
    %3092 = vmatprep.subr.mxu0 0.0
    %3093 = vmatpush2.msra.mxu0 0.0
    %3094 = vmatprep.subr.mxu0 0.0
    %3095 = vmatpush2.msra.mxu0 0.0
    %3096 = vmatprep.subr.mxu0 0.0
    %3097 = vmatpush2.msra.mxu0 0.0
    %3098 = vmatprep.subr.mxu0 0.0
    %3099 = vmatpush2.msra.mxu0 0.0
    %3100 = vmatprep.subr.mxu0 0.0
    %3101 = vmatpush2.msra.mxu0 0.0
    %3102 = vmatprep.subr.mxu0 0.0
    %3103 = vmatpush2.msra.mxu0 0.0
    %3104 = vmatprep.subr.mxu0 0.0
    %3105 = vmatpush2.msra.mxu0 0.0
    %3106 = vmatprep.subr.mxu0 0.0
    %3107 = vmatpush2.msra.mxu0 0.0
    %3108 = vmatprep.subr.mxu0 0.0
    %3109 = vmatpush2.msra.mxu0 0.0
    %3110 = vmatprep.subr.mxu0 0.0
    %3111 = vmatpush2.msra.mxu0 0.0
    %3112 = vmatprep.subr.mxu0 0.0
    %3113 = vmatpush2.msra.mxu0 0.0
    %3114 = vmatprep.subr.mxu0 0.0
    %3115 = vmatpush2.msra.mxu0 0.0
    %3116 = vmatprep.subr.mxu0 0.0
    %3117 = vmatpush2.msra.mxu0 0.0
    %3118 = vmatprep.subr.mxu0 0.0
    %3119 = vmatpush2.msra.mxu0 0.0
    %3120 = vmatprep.subr.mxu0 0.0
    %3121 = vmatpush2.msra.mxu0 0.0
    %3122 = vmatprep.subr.mxu0 0.0
    %3123 = vmatpush2.msra.mxu0 0.0
    %3124 = vmatprep.mubr.f32.mxu0 0.0
    %3125 = vmatmul.mubr.f32.gmra.mxu0 %v3055
    %v3126 = vpop.f32.mrf.mxu0
    %v3127 = vadd.f32 %v3052, %v3126
    %v3128 = vpop.f32.mrf.mxu0
    %3129 = vmatprep.mubr.f32.mxu0 0.0
    %3130 = vmatmul.mubr.f32.gmra.mxu0 %v3058
    %v3131 = vpop.f32.mrf.mxu0
    %v3132 = vadd.f32 %v3052, %v3131
    %v3133 = vpop.f32.mrf.mxu0
    %3134 = vdwg.mxu0
    %3135 = vst [vmem:[#allocation5] sm:$0xff] %v3127
    %3136 = vst [vmem:[#allocation5 + $0x8] sm:$0xff] %v3132
    // Predicated region
    $region94: #{tpu_custom_call.1} parent=1 // pred_check
      _
    $region95: #{tpu_custom_call.1} parent=1 // pred_check_branch
      %3138 = sbr.rel (0) target = $region97
    $region96: #{tpu_custom_call.1} parent=1 // pred_region
      %s3140 = ssub.s32 256, 256
      %3141 = vsyncadd [#allocation4], %s3140
      %s3142 = sshll.u32 [#allocation5], 4
      %s3143 = int_to_ptr.vmem [resolvable:$true] %s3142
      %3148 = dma.vmem_to_hbm [thread:$0]  %s3143, 256, %s22, [#allocation4], 128, 128, 8
    $region97: #{tpu_custom_call.1} parent=1 // pred_fallthru
      _
    // Predicated region
    $region98: #{tpu_custom_call.1} parent=1 // pred_check
      _
    $region99: #{tpu_custom_call.1} parent=1 // pred_check_branch
      %3150 = sbr.rel (0) target = $region101
    $region100: #{tpu_custom_call.1} parent=1 // pred_region
      %3151 = dma.done [#allocation4], 256
    $region101: #{tpu_custom_call.1} parent=1 // pred_fallthru
      _
    %3152 = vsyncpa [#allocation3], 1
    %3153 = vsyncpa [#allocation4], 1

</llo_original>
